<compile_context>
chip_gen: v7x
topology: tpu7x:2x2x1
jax: 0.10.0
libtpu: 0.0.40
codegen_flags: <defaults>
</compile_context>

<pallas_src>
import jax
import jax.numpy as jnp
from jax.experimental import pallas as pl
from jax.experimental.pallas import tpu as pltpu

C_IN = 1792   # fixed by the module definition
C_MID = 192
EPS = 1e-3


# ---------------------------------------------------------------------------
# Kernel 1: fused (matmul with BN-scale-folded weights -> shift add -> ReLU)
# Grid = (M // tm,). Weight / shift blocks have constant index maps so they
# stay VMEM-resident across the whole grid.
# ---------------------------------------------------------------------------
def _matmul_bn_relu_kernel(x_ref, w_ref, b_ref, o_ref):
    y = jnp.dot(x_ref[...], w_ref[...], preferred_element_type=jnp.float32)
    y = y + b_ref[...]
    o_ref[...] = jnp.maximum(y, 0.0).astype(o_ref.dtype)


def _pick_tile(M, tm_max):
    tm = min(tm_max, M)
    tm = max(8, (tm // 8) * 8)            # sublane-aligned
    M_pad = pl.cdiv(M, tm) * tm
    return tm, M_pad


def matmul_bn_relu(x, w, shift, *, tm=512, out_dtype=jnp.bfloat16):
    M, K = x.shape
    Kw, N = w.shape
    assert K == Kw
    tm_eff, M_pad = _pick_tile(M, tm)
    if M_pad != M:
        x = jnp.pad(x, ((0, M_pad - M), (0, 0)))
    out = pl.pallas_call(
        _matmul_bn_relu_kernel,
        out_shape=jax.ShapeDtypeStruct((M_pad, N), out_dtype),
        grid=(M_pad // tm_eff,),
        in_specs=[
            pl.BlockSpec((tm_eff, K), lambda i: (i, 0)),
            pl.BlockSpec((K, N), lambda i: (0, 0)),     # resident weight
            pl.BlockSpec((1, N), lambda i: (0, 0)),     # resident shift
        ],
        out_specs=pl.BlockSpec((tm_eff, N), lambda i: (i, 0)),
        compiler_params=pltpu.CompilerParams(
            dimension_semantics=("parallel",)),
    )(x, w, shift.reshape(1, N).astype(jnp.float32))
    return out[:M] if M_pad != M else out


# ---------------------------------------------------------------------------
# Kernel 2: final 1x1 conv (concat removed: two K=192 dots into one f32 acc)
# out = relu((x0 @ w0 + x1 @ w1 + bias) * scale + residual)
# ---------------------------------------------------------------------------
def _make_final_kernel(scale, apply_relu):
    def kernel(x0_ref, x1_ref, w0_ref, w1_ref, b_ref, r_ref, o_ref):
        acc = jnp.dot(x0_ref[...], w0_ref[...],
                      preferred_element_type=jnp.float32)
        acc = acc + jnp.dot(x1_ref[...], w1_ref[...],
                            preferred_element_type=jnp.float32)
        y = (acc + b_ref[...]) * scale + r_ref[...]
        if apply_relu:
            y = jnp.maximum(y, 0.0)
        o_ref[...] = y.astype(o_ref.dtype)
    return kernel


def final_conv_scale_residual(x0, x1, w0, w1, bias, residual, scale,
                              apply_relu, *, tm=256):
    M, K0 = x0.shape
    _, K1 = x1.shape
    _, N = w0.shape
    tm_eff, M_pad = _pick_tile(M, tm)
    if M_pad != M:
        pad = ((0, M_pad - M), (0, 0))
        x0 = jnp.pad(x0, pad)
        x1 = jnp.pad(x1, pad)
        residual = jnp.pad(residual, pad)
    out = pl.pallas_call(
        _make_final_kernel(scale, apply_relu),
        out_shape=jax.ShapeDtypeStruct((M_pad, N), residual.dtype),
        grid=(M_pad // tm_eff,),
        in_specs=[
            pl.BlockSpec((tm_eff, K0), lambda i: (i, 0)),
            pl.BlockSpec((tm_eff, K1), lambda i: (i, 0)),
            pl.BlockSpec((K0, N), lambda i: (0, 0)),    # resident weight half
            pl.BlockSpec((K1, N), lambda i: (0, 0)),    # resident weight half
            pl.BlockSpec((1, N), lambda i: (0, 0)),     # resident bias
            pl.BlockSpec((tm_eff, N), lambda i: (i, 0)),
        ],
        out_specs=pl.BlockSpec((tm_eff, N), lambda i: (i, 0)),
        compiler_params=pltpu.CompilerParams(
            dimension_semantics=("parallel",)),
    )(x0, x1, w0, w1, bias.reshape(1, N).astype(jnp.float32), residual)
    return out[:M] if M_pad != M else out


# ---------------------------------------------------------------------------
# Pure-JAX glue: im2col for the (1,3) / (3,1) convs (pad=(0,1) / (1,0)).
# Channel ordering is kernel-tap-major, matching the synthetic weight layout.
# TODO(synk): the halo gather could be moved inside the Pallas kernel
#             (3 shifted taps on a row-aligned tile) to remove this bf16
#             (M, 3*192) HBM round trip between kernels.
# ---------------------------------------------------------------------------
def _im2col_w(x_img):   # (N,H,W,C) -> (N,H,W,3C), taps kw = -1, 0, +1
    Nb, H, W, C = x_img.shape
    xp = jnp.pad(x_img, ((0, 0), (0, 0), (1, 1), (0, 0)))
    return jnp.concatenate(
        [xp[:, :, 0:W], xp[:, :, 1:W + 1], xp[:, :, 2:W + 2]], axis=-1)


def _im2col_h(x_img):   # (N,H,W,C) -> (N,H,W,3C), taps kh = -1, 0, +1
    Nb, H, W, C = x_img.shape
    xp = jnp.pad(x_img, ((0, 0), (1, 1), (0, 0), (0, 0)))
    return jnp.concatenate(
        [xp[:, 0:H], xp[:, 1:H + 1], xp[:, 2:H + 2]], axis=-1)


# ---------------------------------------------------------------------------
# Parameters (deterministic synthetic init; shapes from Block8.__init__).
# Conv weights are stored directly in matmul layout (Cin_or_taps*Cin, Cout),
# BN scale folded into the weight columns, weights cast to bf16.
# ---------------------------------------------------------------------------
def init_params(key):
    ks = jax.random.split(key, 6)

    def conv_w(k, cin, cout, std=0.02):
        return std * jax.random.normal(k, (cin, cout), jnp.float32)

    def fold_bn(cout):
        gamma = jnp.ones((cout,), jnp.float32)
        beta = jnp.zeros((cout,), jnp.float32)
        mean = jnp.zeros((cout,), jnp.float32)
        var = jnp.ones((cout,), jnp.float32)
        s = gamma / jnp.sqrt(var + EPS)
        return s, beta - mean * s

    b0_w = conv_w(ks[0], C_IN, C_MID)          # branch0 1x1
    b1_0_w = conv_w(ks[1], C_IN, C_MID)        # branch1[0] 1x1
    b1_1_w = conv_w(ks[2], 3 * C_MID, C_MID)   # branch1[1] (1,3), kw-major
    b1_2_w = conv_w(ks[3], 3 * C_MID, C_MID)   # branch1[2] (3,1), kh-major
    c2_w = conv_w(ks[4], 2 * C_MID, C_IN)      # final 1x1 (with bias)
    c2_b = 0.1 * jax.random.normal(ks[5], (C_IN,), jnp.float32)

    s0, sh0 = fold_bn(C_MID)
    s10, sh10 = fold_bn(C_MID)
    s11, sh11 = fold_bn(C_MID)
    s12, sh12 = fold_bn(C_MID)

    return {
        # branch0 1x1 + branch1[0] 1x1 fused into one (1792, 384) weight
        "br_w": jnp.concatenate(
            [b0_w * s0[None, :], b1_0_w * s10[None, :]],
            axis=1).astype(jnp.bfloat16),
        "br_shift": jnp.concatenate([sh0, sh10]),
        "b1_1_w": (b1_1_w * s11[None, :]).astype(jnp.bfloat16),
        "b1_1_shift": sh11,
        "b1_2_w": (b1_2_w * s12[None, :]).astype(jnp.bfloat16),
        "b1_2_shift": sh12,
        # final 1x1 weight split into the x0-rows and x1-rows halves
        "c2_w0": c2_w[:C_MID].astype(jnp.bfloat16),
        "c2_w1": c2_w[C_MID:].astype(jnp.bfloat16),
        "c2_b": c2_b,
    }


# ---------------------------------------------------------------------------
# Block8 forward (Pallas path) and a pure-JAX reference for validation.
# ---------------------------------------------------------------------------
def block8_forward(x_nhwc, p, scale=1.0, noReLU=False):
    Nb, H, W, C = x_nhwc.shape
    assert C == C_IN
    M = Nb * H * W
    xm = x_nhwc.reshape(M, C)                 # f32 residual path
    xm_bf = xm.astype(jnp.bfloat16)           # bf16 matmul path

    # fused branch0 1x1 + branch1[0] 1x1: one (M,1792)@(1792,384) matmul
    br = matmul_bn_relu(xm_bf, p["br_w"], p["br_shift"])        # (M, 384) bf16
    x0 = br[:, :C_MID]
    y = br[:, C_MID:]

    # branch1[1] (1,3) conv and branch1[2] (3,1) conv via im2col + matmul
    y = _im2col_w(y.reshape(Nb, H, W, C_MID)).reshape(M, 3 * C_MID)
    y = matmul_bn_relu(y, p["b1_1_w"], p["b1_1_shift"])
    y = _im2col_h(y.reshape(Nb, H, W, C_MID)).reshape(M, 3 * C_MID)
    y = matmul_bn_relu(y, p["b1_2_w"], p["b1_2_shift"])

    # conv2d(cat(x0, x1)) ; out*scale + x ; relu    -- fully fused, no concat
    out = final_conv_scale_residual(x0, y, p["c2_w0"], p["c2_w1"], p["c2_b"],
                                    xm, scale, not noReLU)
    return out.reshape(Nb, H, W, C)


def block8_ref(x_nhwc, p, scale=1.0, noReLU=False):
    Nb, H, W, C = x_nhwc.shape
    M = Nb * H * W
    xm = x_nhwc.reshape(M, C)

    def mbr(x, w, sh):
        y = jnp.dot(x, w, preferred_element_type=jnp.float32) + sh[None, :]
        return jnp.maximum(y, 0.0).astype(jnp.bfloat16)

    br = mbr(xm.astype(jnp.bfloat16), p["br_w"], p["br_shift"])
    x0 = br[:, :C_MID]
    y = br[:, C_MID:]
    y = _im2col_w(y.reshape(Nb, H, W, C_MID)).reshape(M, 3 * C_MID)
    y = mbr(y, p["b1_1_w"], p["b1_1_shift"])
    y = _im2col_h(y.reshape(Nb, H, W, C_MID)).reshape(M, 3 * C_MID)
    y = mbr(y, p["b1_2_w"], p["b1_2_shift"])

    acc = jnp.dot(x0, p["c2_w0"], preferred_element_type=jnp.float32)
    acc = acc + jnp.dot(y, p["c2_w1"], preferred_element_type=jnp.float32)
    out = (acc + p["c2_b"][None, :]) * scale + xm
    if not noReLU:
        out = jnp.maximum(out, 0.0)
    return out.reshape(Nb, H, W, C)


if __name__ == "__main__":
    key = jax.random.PRNGKey(0)
    kx, kp = jax.random.split(key)

    # Small spatial / batch; channel count (1792) is fixed by the module.
    Nb, H, W = 2, 8, 8
    x_nchw = jax.random.normal(kx, (Nb, C_IN, H, W), jnp.float32)   # PyTorch layout
    x_nhwc = jnp.transpose(x_nchw, (0, 2, 3, 1))                    # kernel layout

    params = init_params(kp)

    out = block8_forward(x_nhwc, params, scale=1.0, noReLU=False)
    out = jax.block_until_ready(out)

    ref = block8_ref(x_nhwc, params, scale=1.0, noReLU=False)
    assert out.shape == (Nb, H, W, C_IN)
    max_err = float(jnp.max(jnp.abs(out.astype(jnp.float32)
                                    - ref.astype(jnp.float32))))
    assert max_err < 1e-2, f"mismatch vs reference: {max_err}"

    print("KERNEL_OK")
</pallas_src>

<mosaic_0001>
module attributes {stable_mosaic.version = 11 : i64} {
  func.func @_matmul_bn_relu_kernel(%arg0: i32, %arg1: memref<128x1792xbf16, #tpu.memory_space<vmem>>, %arg2: memref<1792x384xbf16, #tpu.memory_space<vmem>>, %arg3: memref<1x384xf32, #tpu.memory_space<vmem>>, %arg4: memref<128x384xbf16, #tpu.memory_space<vmem>>) attributes {dimension_semantics = [#tpu.dimension_semantics<parallel>], iteration_bounds = array<i64: 1>, scalar_prefetch = 0 : i64, scratch_operands = 0 : i64, tpu.core_type = #tpu.core_type<tc>, window_params = [{transform_indices = @transform_0, window_bounds = array<i64: 128, 1792>}, {pipeline_mode = #tpu.pipeline_mode<synchronous>, transform_indices = @transform_1, window_bounds = array<i64: 1792, 384>}, {pipeline_mode = #tpu.pipeline_mode<synchronous>, transform_indices = @transform_2, window_bounds = array<i64: 1, 384>}, {transform_indices = @transform_3, window_bounds = array<i64: 128, 384>}]} {
    %c0 = arith.constant 0 : index
    %c0_0 = arith.constant 0 : index
    %0 = vector.load %arg1[%c0, %c0_0] : memref<128x1792xbf16, #tpu.memory_space<vmem>>, vector<128x1792xbf16>
    %c0_1 = arith.constant 0 : index
    %c0_2 = arith.constant 0 : index
    %1 = vector.load %arg2[%c0_1, %c0_2] : memref<1792x384xbf16, #tpu.memory_space<vmem>>, vector<1792x384xbf16>
    %cst = arith.constant dense<0.000000e+00> : vector<128x384xf32>
    %2 = tpu.matmul %0, %1, %cst {dimension_numbers = #tpu.dot_dimension_numbers<[1], [0], [0], [1], [0, 0, 1, 1], [], []>} : vector<128x1792xbf16>, vector<1792x384xbf16>, vector<128x384xf32> -> vector<128x384xf32>
    %c0_3 = arith.constant 0 : index
    %c0_4 = arith.constant 0 : index
    %3 = vector.load %arg3[%c0_3, %c0_4] : memref<1x384xf32, #tpu.memory_space<vmem>>, vector<1x384xf32>
    %4 = vector.broadcast %3 : vector<1x384xf32> to vector<128x384xf32>
    %5 = arith.addf %2, %4 : vector<128x384xf32>
    %cst_5 = arith.constant 0.000000e+00 : f32
    %6 = vector.broadcast %cst_5 : f32 to vector<128x384xf32>
    %7 = arith.maximumf %5, %6 : vector<128x384xf32>
    %8 = arith.truncf %7 : vector<128x384xf32> to vector<128x384xbf16>
    %c0_6 = arith.constant 0 : index
    %c0_7 = arith.constant 0 : index
    %9 = vector.load %arg4[%c0_6, %c0_7] : memref<128x384xbf16, #tpu.memory_space<vmem>>, vector<128x384xbf16>
    tpu.vector_store %arg4[%c0_6, %c0_7], %8 {strides = array<i32>} : memref<128x384xbf16, #tpu.memory_space<vmem>>, vector<128x384xbf16>,
    return
  }
  func.func @transform_0(%arg0: i32) -> (i32, i32) {
    %c0_i32 = arith.constant 0 : i32
    %c0_i32_0 = arith.constant 0 : i32
    return %arg0, %c0_i32 : i32, i32
  }
  func.func @transform_1(%arg0: i32) -> (i32, i32) {
    %c0_i32 = arith.constant 0 : i32
    %c0_i32_0 = arith.constant 0 : i32
    %c0_i32_1 = arith.constant 0 : i32
    return %c0_i32, %c0_i32_0 : i32, i32
  }
  func.func @transform_2(%arg0: i32) -> (i32, i32) {
    %c0_i32 = arith.constant 0 : i32
    %c0_i32_0 = arith.constant 0 : i32
    %c0_i32_1 = arith.constant 0 : i32
    return %c0_i32, %c0_i32_0 : i32, i32
  }
  func.func @transform_3(%arg0: i32) -> (i32, i32) {
    %c0_i32 = arith.constant 0 : i32
    %c0_i32_0 = arith.constant 0 : i32
    return %arg0, %c0_i32 : i32, i32
  }
}

</mosaic_0001>

<llo_original>
// kernel: tpu_custom_call.1
$region0: #{tpu_custom_call.1}
  #allocation0 [shape = 'u32[]', space=smem, size = 0x4, offset = 0x4, fixed_abs, tag = 'smem constant byte address 0x4 - core index']
  #allocation1 [shape = 'u32[144,128]{1,0:T(1,128)}', space=vmem, size = 0x12000, scoped, tag = 'internal scratch']
  %s0 = inlined_call_operand.hbm [shape: bf16[128,1792], index: 0, kind: input, shape index: {}]
  %s1 = inlined_call_operand.hbm [shape: bf16[1792,384], index: 1, kind: input, shape index: {}]
  %s2 = inlined_call_operand.hbm [shape: f32[1,384], index: 2, kind: input, shape index: {}]
  %s3 = inlined_call_operand.hbm [shape: bf16[128,384], index: 3, kind: output, shape index: {}]
  %s4 = sld [smem:[#allocation0]]
  $region34: #{tpu_custom_call.1} parent=0
    _
  %s6 = ssub.s32 1, %s4
  %s7 = scalar_select 0, %s6, %s4
  $region1: #{tpu_custom_call.1} parent=0
    #allocation2 [shape = 'u8[458752]{0}', space=vmem, size = 0x70000, scoped, tag = 'input window, operand 0, single buffered']
    #allocation3 [shape = 's32[1]{0}', space=sflag, size = 0x4, scoped, tag = 'scoped memory for tpu_custom_call.1']
    #allocation4 [shape = 's32[1]{0}', space=sflag, size = 0x4, scoped, tag = 'scoped memory for tpu_custom_call.1']
    #allocation5 [shape = 'u8[1376256]{0}', space=vmem, size = 0x150000, scoped, tag = 'input window, operand 1, single buffered']
    #allocation6 [shape = 's32[1]{0}', space=sflag, size = 0x4, scoped, tag = 'scoped memory for tpu_custom_call.1']
    #allocation7 [shape = 'u8[1536]{0}', space=vmem, size = 0x800, scoped, tag = 'input window, operand 2, single buffered']
    #allocation8 [shape = 'u8[98304]{0}', space=vmem, size = 0x18000, scoped, tag = 'output window, operand 0, single buffered']
    %8 = vsyncpa [#allocation3], 0
    %9 = vsyncpa [#allocation6], 0
    %10 = vsyncpa [#allocation4], 0
    // Predicated region
    $region2: #{tpu_custom_call.1} parent=1 // pred_check
      _
    $region3: #{tpu_custom_call.1} parent=1 // pred_check_branch
      %12 = sbr.rel (0) target = $region5
    $region4: #{tpu_custom_call.1} parent=1 // pred_region
      %s14 = ssub.s32 14336, 14336
      %15 = vsyncadd [#allocation3], %s14
      %s16 = sshll.u32 [#allocation2], 4
      %s17 = int_to_ptr.vmem [resolvable:$true] %s16
      %22 = dma.hbm_to_vmem [thread:$0]  %s0, 14336, %s17, [#allocation3], 896, 896, 56
    $region5: #{tpu_custom_call.1} parent=1 // pred_fallthru
      _
    // Predicated region
    $region6: #{tpu_custom_call.1} parent=1 // pred_check
      _
    $region7: #{tpu_custom_call.1} parent=1 // pred_check_branch
      %24 = sbr.rel (0) target = $region9
    $region8: #{tpu_custom_call.1} parent=1 // pred_region
      %s26 = ssub.s32 43008, 43008
      %27 = vsyncadd [#allocation6], %s26
      %s28 = sshll.u32 [#allocation5], 4
      %s29 = int_to_ptr.vmem [resolvable:$true] %s28
      %34 = dma.hbm_to_vmem [thread:$0]  %s1, 43008, %s29, [#allocation6], 192, 192, 12
    $region9: #{tpu_custom_call.1} parent=1 // pred_fallthru
      _
    // Predicated region
    $region10: #{tpu_custom_call.1} parent=1 // pred_check
      _
    $region11: #{tpu_custom_call.1} parent=1 // pred_check_branch
      %36 = sbr.rel (0) target = $region13
    $region12: #{tpu_custom_call.1} parent=1 // pred_region
      %s38 = ssub.s32 48, 48
      %39 = vsyncadd [#allocation6], %s38
      %s41 = sshll.u32 [#allocation7], 4
      %s42 = int_to_ptr.vmem [resolvable:$true] %s41
      %44 = dma.hbm_to_vmem [thread:$0]  %s2, 48, %s42, [#allocation6]
    $region13: #{tpu_custom_call.1} parent=1 // pred_fallthru
      _
    // Predicated region
    $region14: #{tpu_custom_call.1} parent=1 // pred_check
      _
    $region15: #{tpu_custom_call.1} parent=1 // pred_check_branch
      %46 = sbr.rel (0) target = $region17
    $region16: #{tpu_custom_call.1} parent=1 // pred_region
      %47 = dma.done [#allocation3], 14336
    $region17: #{tpu_custom_call.1} parent=1 // pred_fallthru
      _
    // Predicated region
    $region18: #{tpu_custom_call.1} parent=1 // pred_check
      _
    $region19: #{tpu_custom_call.1} parent=1 // pred_check_branch
      %49 = sbr.rel (0) target = $region21
    $region20: #{tpu_custom_call.1} parent=1 // pred_region
      %50 = dma.done [#allocation6], 43008
    $region21: #{tpu_custom_call.1} parent=1 // pred_fallthru
      _
    // Predicated region
    $region22: #{tpu_custom_call.1} parent=1 // pred_check
      _
    $region23: #{tpu_custom_call.1} parent=1 // pred_check_branch
      %52 = sbr.rel (0) target = $region25
    $region24: #{tpu_custom_call.1} parent=1 // pred_region
      %53 = dma.done [#allocation6], 48
    $region25: #{tpu_custom_call.1} parent=1 // pred_fallthru
      _
    %v55 = vld [vmem:[#allocation2] sm:$0xff]
    %v56 = vld [vmem:[#allocation2 + $0x8] sm:$0xff]
    %v57 = vld [vmem:[#allocation2 + $0x10] sm:$0xff]
    %v58 = vld [vmem:[#allocation2 + $0x18] sm:$0xff]
    %v59 = vld [vmem:[#allocation2 + $0x20] sm:$0xff]
    %v60 = vld [vmem:[#allocation2 + $0x28] sm:$0xff]
    %v61 = vld [vmem:[#allocation2 + $0x30] sm:$0xff]
    %v62 = vld [vmem:[#allocation2 + $0x38] sm:$0xff]
    %v63 = vld [vmem:[#allocation2 + $0x40] sm:$0xff]
    %v64 = vld [vmem:[#allocation2 + $0x48] sm:$0xff]
    %v65 = vld [vmem:[#allocation2 + $0x50] sm:$0xff]
    %v66 = vld [vmem:[#allocation2 + $0x58] sm:$0xff]
    %v67 = vld [vmem:[#allocation2 + $0x60] sm:$0xff]
    %v68 = vld [vmem:[#allocation2 + $0x68] sm:$0xff]
    %v69 = vld [vmem:[#allocation2 + $0x70] sm:$0xff]
    %v70 = vld [vmem:[#allocation2 + $0x78] sm:$0xff]
    %v71 = vld [vmem:[#allocation2 + $0x80] sm:$0xff]
    %v72 = vld [vmem:[#allocation2 + $0x88] sm:$0xff]
    %v73 = vld [vmem:[#allocation2 + $0x90] sm:$0xff]
    %v74 = vld [vmem:[#allocation2 + $0x98] sm:$0xff]
    %v75 = vld [vmem:[#allocation2 + $0xa0] sm:$0xff]
    %v76 = vld [vmem:[#allocation2 + $0xa8] sm:$0xff]
    %v77 = vld [vmem:[#allocation2 + $0xb0] sm:$0xff]
    %v78 = vld [vmem:[#allocation2 + $0xb8] sm:$0xff]
    %v79 = vld [vmem:[#allocation2 + $0xc0] sm:$0xff]
    %v80 = vld [vmem:[#allocation2 + $0xc8] sm:$0xff]
    %v81 = vld [vmem:[#allocation2 + $0xd0] sm:$0xff]
    %v82 = vld [vmem:[#allocation2 + $0xd8] sm:$0xff]
    %v83 = vld [vmem:[#allocation2 + $0xe0] sm:$0xff]
    %v84 = vld [vmem:[#allocation2 + $0xe8] sm:$0xff]
    %v85 = vld [vmem:[#allocation2 + $0xf0] sm:$0xff]
    %v86 = vld [vmem:[#allocation2 + $0xf8] sm:$0xff]
    %v87 = vld [vmem:[#allocation2 + $0x100] sm:$0xff]
    %v88 = vld [vmem:[#allocation2 + $0x108] sm:$0xff]
    %v89 = vld [vmem:[#allocation2 + $0x110] sm:$0xff]
    %v90 = vld [vmem:[#allocation2 + $0x118] sm:$0xff]
    %v91 = vld [vmem:[#allocation2 + $0x120] sm:$0xff]
    %v92 = vld [vmem:[#allocation2 + $0x128] sm:$0xff]
    %v93 = vld [vmem:[#allocation2 + $0x130] sm:$0xff]
    %v94 = vld [vmem:[#allocation2 + $0x138] sm:$0xff]
    %v95 = vld [vmem:[#allocation2 + $0x140] sm:$0xff]
    %v96 = vld [vmem:[#allocation2 + $0x148] sm:$0xff]
    %v97 = vld [vmem:[#allocation2 + $0x150] sm:$0xff]
    %v98 = vld [vmem:[#allocation2 + $0x158] sm:$0xff]
    %v99 = vld [vmem:[#allocation2 + $0x160] sm:$0xff]
    %v100 = vld [vmem:[#allocation2 + $0x168] sm:$0xff]
    %v101 = vld [vmem:[#allocation2 + $0x170] sm:$0xff]
    %v102 = vld [vmem:[#allocation2 + $0x178] sm:$0xff]
    %v103 = vld [vmem:[#allocation2 + $0x180] sm:$0xff]
    %v104 = vld [vmem:[#allocation2 + $0x188] sm:$0xff]
    %v105 = vld [vmem:[#allocation2 + $0x190] sm:$0xff]
    %v106 = vld [vmem:[#allocation2 + $0x198] sm:$0xff]
    %v107 = vld [vmem:[#allocation2 + $0x1a0] sm:$0xff]
    %v108 = vld [vmem:[#allocation2 + $0x1a8] sm:$0xff]
    %v109 = vld [vmem:[#allocation2 + $0x1b0] sm:$0xff]
    %v110 = vld [vmem:[#allocation2 + $0x1b8] sm:$0xff]
    %v111 = vld [vmem:[#allocation2 + $0x1c0] sm:$0xff]
    %v112 = vld [vmem:[#allocation2 + $0x1c8] sm:$0xff]
    %v113 = vld [vmem:[#allocation2 + $0x1d0] sm:$0xff]
    %v114 = vld [vmem:[#allocation2 + $0x1d8] sm:$0xff]
    %v115 = vld [vmem:[#allocation2 + $0x1e0] sm:$0xff]
    %v116 = vld [vmem:[#allocation2 + $0x1e8] sm:$0xff]
    %v117 = vld [vmem:[#allocation2 + $0x1f0] sm:$0xff]
    %v118 = vld [vmem:[#allocation2 + $0x1f8] sm:$0xff]
    %v119 = vld [vmem:[#allocation2 + $0x200] sm:$0xff]
    %v120 = vld [vmem:[#allocation2 + $0x208] sm:$0xff]
    %v121 = vld [vmem:[#allocation2 + $0x210] sm:$0xff]
    %v122 = vld [vmem:[#allocation2 + $0x218] sm:$0xff]
    %v123 = vld [vmem:[#allocation2 + $0x220] sm:$0xff]
    %v124 = vld [vmem:[#allocation2 + $0x228] sm:$0xff]
    %v125 = vld [vmem:[#allocation2 + $0x230] sm:$0xff]
    %v126 = vld [vmem:[#allocation2 + $0x238] sm:$0xff]
    %v127 = vld [vmem:[#allocation2 + $0x240] sm:$0xff]
    %v128 = vld [vmem:[#allocation2 + $0x248] sm:$0xff]
    %v129 = vld [vmem:[#allocation2 + $0x250] sm:$0xff]
    %v130 = vld [vmem:[#allocation2 + $0x258] sm:$0xff]
    %v131 = vld [vmem:[#allocation2 + $0x260] sm:$0xff]
    %v132 = vld [vmem:[#allocation2 + $0x268] sm:$0xff]
    %v133 = vld [vmem:[#allocation2 + $0x270] sm:$0xff]
    %v134 = vld [vmem:[#allocation2 + $0x278] sm:$0xff]
    %v135 = vld [vmem:[#allocation2 + $0x280] sm:$0xff]
    %v136 = vld [vmem:[#allocation2 + $0x288] sm:$0xff]
    %v137 = vld [vmem:[#allocation2 + $0x290] sm:$0xff]
    %v138 = vld [vmem:[#allocation2 + $0x298] sm:$0xff]
    %v139 = vld [vmem:[#allocation2 + $0x2a0] sm:$0xff]
    %v140 = vld [vmem:[#allocation2 + $0x2a8] sm:$0xff]
    %v141 = vld [vmem:[#allocation2 + $0x2b0] sm:$0xff]
    %v142 = vld [vmem:[#allocation2 + $0x2b8] sm:$0xff]
    %v143 = vld [vmem:[#allocation2 + $0x2c0] sm:$0xff]
    %v144 = vld [vmem:[#allocation2 + $0x2c8] sm:$0xff]
    %v145 = vld [vmem:[#allocation2 + $0x2d0] sm:$0xff]
    %v146 = vld [vmem:[#allocation2 + $0x2d8] sm:$0xff]
    %v147 = vld [vmem:[#allocation2 + $0x2e0] sm:$0xff]
    %v148 = vld [vmem:[#allocation2 + $0x2e8] sm:$0xff]
    %v149 = vld [vmem:[#allocation2 + $0x2f0] sm:$0xff]
    %v150 = vld [vmem:[#allocation2 + $0x2f8] sm:$0xff]
    %v151 = vld [vmem:[#allocation2 + $0x300] sm:$0xff]
    %v152 = vld [vmem:[#allocation2 + $0x308] sm:$0xff]
    %v153 = vld [vmem:[#allocation2 + $0x310] sm:$0xff]
    %v154 = vld [vmem:[#allocation2 + $0x318] sm:$0xff]
    %v155 = vld [vmem:[#allocation2 + $0x320] sm:$0xff]
    %v156 = vld [vmem:[#allocation2 + $0x328] sm:$0xff]
    %v157 = vld [vmem:[#allocation2 + $0x330] sm:$0xff]
    %v158 = vld [vmem:[#allocation2 + $0x338] sm:$0xff]
    %v159 = vld [vmem:[#allocation2 + $0x340] sm:$0xff]
    %v160 = vld [vmem:[#allocation2 + $0x348] sm:$0xff]
    %v161 = vld [vmem:[#allocation2 + $0x350] sm:$0xff]
    %v162 = vld [vmem:[#allocation2 + $0x358] sm:$0xff]
    %v163 = vld [vmem:[#allocation2 + $0x360] sm:$0xff]
    %v164 = vld [vmem:[#allocation2 + $0x368] sm:$0xff]
    %v165 = vld [vmem:[#allocation2 + $0x370] sm:$0xff]
    %v166 = vld [vmem:[#allocation2 + $0x378] sm:$0xff]
    %v167 = vld [vmem:[#allocation5] sm:$0xff]
    %v168 = vld [vmem:[#allocation5 + $0x8] sm:$0xf]
    %v169 = vld [vmem:[#allocation5 + $0xc] sm:$0xff]
    %v170 = vld [vmem:[#allocation5 + $0x14] sm:$0xf]
    %v171 = vld [vmem:[#allocation5 + $0x18] sm:$0xff]
    %v172 = vld [vmem:[#allocation5 + $0x20] sm:$0xf]
    %v173 = vld [vmem:[#allocation5 + $0x24] sm:$0xff]
    %v174 = vld [vmem:[#allocation5 + $0x2c] sm:$0xf]
    %v175 = vld [vmem:[#allocation5 + $0x30] sm:$0xff]
    %v176 = vld [vmem:[#allocation5 + $0x38] sm:$0xf]
    %v177 = vld [vmem:[#allocation5 + $0x3c] sm:$0xff]
    %v178 = vld [vmem:[#allocation5 + $0x44] sm:$0xf]
    %v179 = vld [vmem:[#allocation5 + $0x48] sm:$0xff]
    %v180 = vld [vmem:[#allocation5 + $0x50] sm:$0xf]
    %v181 = vld [vmem:[#allocation5 + $0x54] sm:$0xff]
    %v182 = vld [vmem:[#allocation5 + $0x5c] sm:$0xf]
    %v183 = vld [vmem:[#allocation5 + $0x60] sm:$0xff]
    %v184 = vld [vmem:[#allocation5 + $0x68] sm:$0xf]
    %v185 = vld [vmem:[#allocation5 + $0x6c] sm:$0xff]
    %v186 = vld [vmem:[#allocation5 + $0x74] sm:$0xf]
    %v187 = vld [vmem:[#allocation5 + $0x78] sm:$0xff]
    %v188 = vld [vmem:[#allocation5 + $0x80] sm:$0xf]
    %v189 = vld [vmem:[#allocation5 + $0x84] sm:$0xff]
    %v190 = vld [vmem:[#allocation5 + $0x8c] sm:$0xf]
    %v191 = vld [vmem:[#allocation5 + $0x90] sm:$0xff]
    %v192 = vld [vmem:[#allocation5 + $0x98] sm:$0xf]
    %v193 = vld [vmem:[#allocation5 + $0x9c] sm:$0xff]
    %v194 = vld [vmem:[#allocation5 + $0xa4] sm:$0xf]
    %v195 = vld [vmem:[#allocation5 + $0xa8] sm:$0xff]
    %v196 = vld [vmem:[#allocation5 + $0xb0] sm:$0xf]
    %v197 = vld [vmem:[#allocation5 + $0xb4] sm:$0xff]
    %v198 = vld [vmem:[#allocation5 + $0xbc] sm:$0xf]
    %v199 = vld [vmem:[#allocation5 + $0xc0] sm:$0xff]
    %v200 = vld [vmem:[#allocation5 + $0xc8] sm:$0xf]
    %v201 = vld [vmem:[#allocation5 + $0xcc] sm:$0xff]
    %v202 = vld [vmem:[#allocation5 + $0xd4] sm:$0xf]
    %v203 = vld [vmem:[#allocation5 + $0xd8] sm:$0xff]
    %v204 = vld [vmem:[#allocation5 + $0xe0] sm:$0xf]
    %v205 = vld [vmem:[#allocation5 + $0xe4] sm:$0xff]
    %v206 = vld [vmem:[#allocation5 + $0xec] sm:$0xf]
    %v207 = vld [vmem:[#allocation5 + $0xf0] sm:$0xff]
    %v208 = vld [vmem:[#allocation5 + $0xf8] sm:$0xf]
    %v209 = vld [vmem:[#allocation5 + $0xfc] sm:$0xff]
    %v210 = vld [vmem:[#allocation5 + $0x104] sm:$0xf]
    %v211 = vld [vmem:[#allocation5 + $0x108] sm:$0xff]
    %v212 = vld [vmem:[#allocation5 + $0x110] sm:$0xf]
    %v213 = vld [vmem:[#allocation5 + $0x114] sm:$0xff]
    %v214 = vld [vmem:[#allocation5 + $0x11c] sm:$0xf]
    %v215 = vld [vmem:[#allocation5 + $0x120] sm:$0xff]
    %v216 = vld [vmem:[#allocation5 + $0x128] sm:$0xf]
    %v217 = vld [vmem:[#allocation5 + $0x12c] sm:$0xff]
    %v218 = vld [vmem:[#allocation5 + $0x134] sm:$0xf]
    %v219 = vld [vmem:[#allocation5 + $0x138] sm:$0xff]
    %v220 = vld [vmem:[#allocation5 + $0x140] sm:$0xf]
    %v221 = vld [vmem:[#allocation5 + $0x144] sm:$0xff]
    %v222 = vld [vmem:[#allocation5 + $0x14c] sm:$0xf]
    %v223 = vld [vmem:[#allocation5 + $0x150] sm:$0xff]
    %v224 = vld [vmem:[#allocation5 + $0x158] sm:$0xf]
    %v225 = vld [vmem:[#allocation5 + $0x15c] sm:$0xff]
    %v226 = vld [vmem:[#allocation5 + $0x164] sm:$0xf]
    %v227 = vld [vmem:[#allocation5 + $0x168] sm:$0xff]
    %v228 = vld [vmem:[#allocation5 + $0x170] sm:$0xf]
    %v229 = vld [vmem:[#allocation5 + $0x174] sm:$0xff]
    %v230 = vld [vmem:[#allocation5 + $0x17c] sm:$0xf]
    %v231 = vld [vmem:[#allocation5 + $0x180] sm:$0xff]
    %v232 = vld [vmem:[#allocation5 + $0x188] sm:$0xf]
    %v233 = vld [vmem:[#allocation5 + $0x18c] sm:$0xff]
    %v234 = vld [vmem:[#allocation5 + $0x194] sm:$0xf]
    %v235 = vld [vmem:[#allocation5 + $0x198] sm:$0xff]
    %v236 = vld [vmem:[#allocation5 + $0x1a0] sm:$0xf]
    %v237 = vld [vmem:[#allocation5 + $0x1a4] sm:$0xff]
    %v238 = vld [vmem:[#allocation5 + $0x1ac] sm:$0xf]
    %v239 = vld [vmem:[#allocation5 + $0x1b0] sm:$0xff]
    %v240 = vld [vmem:[#allocation5 + $0x1b8] sm:$0xf]
    %v241 = vld [vmem:[#allocation5 + $0x1bc] sm:$0xff]
    %v242 = vld [vmem:[#allocation5 + $0x1c4] sm:$0xf]
    %v243 = vld [vmem:[#allocation5 + $0x1c8] sm:$0xff]
    %v244 = vld [vmem:[#allocation5 + $0x1d0] sm:$0xf]
    %v245 = vld [vmem:[#allocation5 + $0x1d4] sm:$0xff]
    %v246 = vld [vmem:[#allocation5 + $0x1dc] sm:$0xf]
    %v247 = vld [vmem:[#allocation5 + $0x1e0] sm:$0xff]
    %v248 = vld [vmem:[#allocation5 + $0x1e8] sm:$0xf]
    %v249 = vld [vmem:[#allocation5 + $0x1ec] sm:$0xff]
    %v250 = vld [vmem:[#allocation5 + $0x1f4] sm:$0xf]
    %v251 = vld [vmem:[#allocation5 + $0x1f8] sm:$0xff]
    %v252 = vld [vmem:[#allocation5 + $0x200] sm:$0xf]
    %v253 = vld [vmem:[#allocation5 + $0x204] sm:$0xff]
    %v254 = vld [vmem:[#allocation5 + $0x20c] sm:$0xf]
    %v255 = vld [vmem:[#allocation5 + $0x210] sm:$0xff]
    %v256 = vld [vmem:[#allocation5 + $0x218] sm:$0xf]
    %v257 = vld [vmem:[#allocation5 + $0x21c] sm:$0xff]
    %v258 = vld [vmem:[#allocation5 + $0x224] sm:$0xf]
    %v259 = vld [vmem:[#allocation5 + $0x228] sm:$0xff]
    %v260 = vld [vmem:[#allocation5 + $0x230] sm:$0xf]
    %v261 = vld [vmem:[#allocation5 + $0x234] sm:$0xff]
    %v262 = vld [vmem:[#allocation5 + $0x23c] sm:$0xf]
    %v263 = vld [vmem:[#allocation5 + $0x240] sm:$0xff]
    %v264 = vld [vmem:[#allocation5 + $0x248] sm:$0xf]
    %v265 = vld [vmem:[#allocation5 + $0x24c] sm:$0xff]
    %v266 = vld [vmem:[#allocation5 + $0x254] sm:$0xf]
    %v267 = vld [vmem:[#allocation5 + $0x258] sm:$0xff]
    %v268 = vld [vmem:[#allocation5 + $0x260] sm:$0xf]
    %v269 = vld [vmem:[#allocation5 + $0x264] sm:$0xff]
    %v270 = vld [vmem:[#allocation5 + $0x26c] sm:$0xf]
    %v271 = vld [vmem:[#allocation5 + $0x270] sm:$0xff]
    %v272 = vld [vmem:[#allocation5 + $0x278] sm:$0xf]
    %v273 = vld [vmem:[#allocation5 + $0x27c] sm:$0xff]
    %v274 = vld [vmem:[#allocation5 + $0x284] sm:$0xf]
    %v275 = vld [vmem:[#allocation5 + $0x288] sm:$0xff]
    %v276 = vld [vmem:[#allocation5 + $0x290] sm:$0xf]
    %v277 = vld [vmem:[#allocation5 + $0x294] sm:$0xff]
    %v278 = vld [vmem:[#allocation5 + $0x29c] sm:$0xf]
    %v279 = vld [vmem:[#allocation5 + $0x2a0] sm:$0xff]
    %v280 = vld [vmem:[#allocation5 + $0x2a8] sm:$0xf]
    %v281 = vld [vmem:[#allocation5 + $0x2ac] sm:$0xff]
    %v282 = vld [vmem:[#allocation5 + $0x2b4] sm:$0xf]
    %v283 = vld [vmem:[#allocation5 + $0x2b8] sm:$0xff]
    %v284 = vld [vmem:[#allocation5 + $0x2c0] sm:$0xf]
    %v285 = vld [vmem:[#allocation5 + $0x2c4] sm:$0xff]
    %v286 = vld [vmem:[#allocation5 + $0x2cc] sm:$0xf]
    %v287 = vld [vmem:[#allocation5 + $0x2d0] sm:$0xff]
    %v288 = vld [vmem:[#allocation5 + $0x2d8] sm:$0xf]
    %v289 = vld [vmem:[#allocation5 + $0x2dc] sm:$0xff]
    %v290 = vld [vmem:[#allocation5 + $0x2e4] sm:$0xf]
    %v291 = vld [vmem:[#allocation5 + $0x2e8] sm:$0xff]
    %v292 = vld [vmem:[#allocation5 + $0x2f0] sm:$0xf]
    %v293 = vld [vmem:[#allocation5 + $0x2f4] sm:$0xff]
    %v294 = vld [vmem:[#allocation5 + $0x2fc] sm:$0xf]
    %v295 = vld [vmem:[#allocation5 + $0x300] sm:$0xff]
    %v296 = vld [vmem:[#allocation5 + $0x308] sm:$0xf]
    %v297 = vld [vmem:[#allocation5 + $0x30c] sm:$0xff]
    %v298 = vld [vmem:[#allocation5 + $0x314] sm:$0xf]
    %v299 = vld [vmem:[#allocation5 + $0x318] sm:$0xff]
    %v300 = vld [vmem:[#allocation5 + $0x320] sm:$0xf]
    %v301 = vld [vmem:[#allocation5 + $0x324] sm:$0xff]
    %v302 = vld [vmem:[#allocation5 + $0x32c] sm:$0xf]
    %v303 = vld [vmem:[#allocation5 + $0x330] sm:$0xff]
    %v304 = vld [vmem:[#allocation5 + $0x338] sm:$0xf]
    %v305 = vld [vmem:[#allocation5 + $0x33c] sm:$0xff]
    %v306 = vld [vmem:[#allocation5 + $0x344] sm:$0xf]
    %v307 = vld [vmem:[#allocation5 + $0x348] sm:$0xff]
    %v308 = vld [vmem:[#allocation5 + $0x350] sm:$0xf]
    %v309 = vld [vmem:[#allocation5 + $0x354] sm:$0xff]
    %v310 = vld [vmem:[#allocation5 + $0x35c] sm:$0xf]
    %v311 = vld [vmem:[#allocation5 + $0x360] sm:$0xff]
    %v312 = vld [vmem:[#allocation5 + $0x368] sm:$0xf]
    %v313 = vld [vmem:[#allocation5 + $0x36c] sm:$0xff]
    %v314 = vld [vmem:[#allocation5 + $0x374] sm:$0xf]
    %v315 = vld [vmem:[#allocation5 + $0x378] sm:$0xff]
    %v316 = vld [vmem:[#allocation5 + $0x380] sm:$0xf]
    %v317 = vld [vmem:[#allocation5 + $0x384] sm:$0xff]
    %v318 = vld [vmem:[#allocation5 + $0x38c] sm:$0xf]
    %v319 = vld [vmem:[#allocation5 + $0x390] sm:$0xff]
    %v320 = vld [vmem:[#allocation5 + $0x398] sm:$0xf]
    %v321 = vld [vmem:[#allocation5 + $0x39c] sm:$0xff]
    %v322 = vld [vmem:[#allocation5 + $0x3a4] sm:$0xf]
    %v323 = vld [vmem:[#allocation5 + $0x3a8] sm:$0xff]
    %v324 = vld [vmem:[#allocation5 + $0x3b0] sm:$0xf]
    %v325 = vld [vmem:[#allocation5 + $0x3b4] sm:$0xff]
    %v326 = vld [vmem:[#allocation5 + $0x3bc] sm:$0xf]
    %v327 = vld [vmem:[#allocation5 + $0x3c0] sm:$0xff]
    %v328 = vld [vmem:[#allocation5 + $0x3c8] sm:$0xf]
    %v329 = vld [vmem:[#allocation5 + $0x3cc] sm:$0xff]
    %v330 = vld [vmem:[#allocation5 + $0x3d4] sm:$0xf]
    %v331 = vld [vmem:[#allocation5 + $0x3d8] sm:$0xff]
    %v332 = vld [vmem:[#allocation5 + $0x3e0] sm:$0xf]
    %v333 = vld [vmem:[#allocation5 + $0x3e4] sm:$0xff]
    %v334 = vld [vmem:[#allocation5 + $0x3ec] sm:$0xf]
    %v335 = vld [vmem:[#allocation5 + $0x3f0] sm:$0xff]
    %v336 = vld [vmem:[#allocation5 + $0x3f8] sm:$0xf]
    %v337 = vld [vmem:[#allocation5 + $0x3fc] sm:$0xff]
    %v338 = vld [vmem:[#allocation5 + $0x404] sm:$0xf]
    %v339 = vld [vmem:[#allocation5 + $0x408] sm:$0xff]
    %v340 = vld [vmem:[#allocation5 + $0x410] sm:$0xf]
    %v341 = vld [vmem:[#allocation5 + $0x414] sm:$0xff]
    %v342 = vld [vmem:[#allocation5 + $0x41c] sm:$0xf]
    %v343 = vld [vmem:[#allocation5 + $0x420] sm:$0xff]
    %v344 = vld [vmem:[#allocation5 + $0x428] sm:$0xf]
    %v345 = vld [vmem:[#allocation5 + $0x42c] sm:$0xff]
    %v346 = vld [vmem:[#allocation5 + $0x434] sm:$0xf]
    %v347 = vld [vmem:[#allocation5 + $0x438] sm:$0xff]
    %v348 = vld [vmem:[#allocation5 + $0x440] sm:$0xf]
    %v349 = vld [vmem:[#allocation5 + $0x444] sm:$0xff]
    %v350 = vld [vmem:[#allocation5 + $0x44c] sm:$0xf]
    %v351 = vld [vmem:[#allocation5 + $0x450] sm:$0xff]
    %v352 = vld [vmem:[#allocation5 + $0x458] sm:$0xf]
    %v353 = vld [vmem:[#allocation5 + $0x45c] sm:$0xff]
    %v354 = vld [vmem:[#allocation5 + $0x464] sm:$0xf]
    %v355 = vld [vmem:[#allocation5 + $0x468] sm:$0xff]
    %v356 = vld [vmem:[#allocation5 + $0x470] sm:$0xf]
    %v357 = vld [vmem:[#allocation5 + $0x474] sm:$0xff]
    %v358 = vld [vmem:[#allocation5 + $0x47c] sm:$0xf]
    %v359 = vld [vmem:[#allocation5 + $0x480] sm:$0xff]
    %v360 = vld [vmem:[#allocation5 + $0x488] sm:$0xf]
    %v361 = vld [vmem:[#allocation5 + $0x48c] sm:$0xff]
    %v362 = vld [vmem:[#allocation5 + $0x494] sm:$0xf]
    %v363 = vld [vmem:[#allocation5 + $0x498] sm:$0xff]
    %v364 = vld [vmem:[#allocation5 + $0x4a0] sm:$0xf]
    %v365 = vld [vmem:[#allocation5 + $0x4a4] sm:$0xff]
    %v366 = vld [vmem:[#allocation5 + $0x4ac] sm:$0xf]
    %v367 = vld [vmem:[#allocation5 + $0x4b0] sm:$0xff]
    %v368 = vld [vmem:[#allocation5 + $0x4b8] sm:$0xf]
    %v369 = vld [vmem:[#allocation5 + $0x4bc] sm:$0xff]
    %v370 = vld [vmem:[#allocation5 + $0x4c4] sm:$0xf]
    %v371 = vld [vmem:[#allocation5 + $0x4c8] sm:$0xff]
    %v372 = vld [vmem:[#allocation5 + $0x4d0] sm:$0xf]
    %v373 = vld [vmem:[#allocation5 + $0x4d4] sm:$0xff]
    %v374 = vld [vmem:[#allocation5 + $0x4dc] sm:$0xf]
    %v375 = vld [vmem:[#allocation5 + $0x4e0] sm:$0xff]
    %v376 = vld [vmem:[#allocation5 + $0x4e8] sm:$0xf]
    %v377 = vld [vmem:[#allocation5 + $0x4ec] sm:$0xff]
    %v378 = vld [vmem:[#allocation5 + $0x4f4] sm:$0xf]
    %v379 = vld [vmem:[#allocation5 + $0x4f8] sm:$0xff]
    %v380 = vld [vmem:[#allocation5 + $0x500] sm:$0xf]
    %v381 = vld [vmem:[#allocation5 + $0x504] sm:$0xff]
    %v382 = vld [vmem:[#allocation5 + $0x50c] sm:$0xf]
    %v383 = vld [vmem:[#allocation5 + $0x510] sm:$0xff]
    %v384 = vld [vmem:[#allocation5 + $0x518] sm:$0xf]
    %v385 = vld [vmem:[#allocation5 + $0x51c] sm:$0xff]
    %v386 = vld [vmem:[#allocation5 + $0x524] sm:$0xf]
    %v387 = vld [vmem:[#allocation5 + $0x528] sm:$0xff]
    %v388 = vld [vmem:[#allocation5 + $0x530] sm:$0xf]
    %v389 = vld [vmem:[#allocation5 + $0x534] sm:$0xff]
    %v390 = vld [vmem:[#allocation5 + $0x53c] sm:$0xf]
    %v391 = vld [vmem:[#allocation5 + $0x540] sm:$0xff]
    %v392 = vld [vmem:[#allocation5 + $0x548] sm:$0xf]
    %v393 = vld [vmem:[#allocation5 + $0x54c] sm:$0xff]
    %v394 = vld [vmem:[#allocation5 + $0x554] sm:$0xf]
    %v395 = vld [vmem:[#allocation5 + $0x558] sm:$0xff]
    %v396 = vld [vmem:[#allocation5 + $0x560] sm:$0xf]
    %v397 = vld [vmem:[#allocation5 + $0x564] sm:$0xff]
    %v398 = vld [vmem:[#allocation5 + $0x56c] sm:$0xf]
    %v399 = vld [vmem:[#allocation5 + $0x570] sm:$0xff]
    %v400 = vld [vmem:[#allocation5 + $0x578] sm:$0xf]
    %v401 = vld [vmem:[#allocation5 + $0x57c] sm:$0xff]
    %v402 = vld [vmem:[#allocation5 + $0x584] sm:$0xf]
    %v403 = vld [vmem:[#allocation5 + $0x588] sm:$0xff]
    %v404 = vld [vmem:[#allocation5 + $0x590] sm:$0xf]
    %v405 = vld [vmem:[#allocation5 + $0x594] sm:$0xff]
    %v406 = vld [vmem:[#allocation5 + $0x59c] sm:$0xf]
    %v407 = vld [vmem:[#allocation5 + $0x5a0] sm:$0xff]
    %v408 = vld [vmem:[#allocation5 + $0x5a8] sm:$0xf]
    %v409 = vld [vmem:[#allocation5 + $0x5ac] sm:$0xff]
    %v410 = vld [vmem:[#allocation5 + $0x5b4] sm:$0xf]
    %v411 = vld [vmem:[#allocation5 + $0x5b8] sm:$0xff]
    %v412 = vld [vmem:[#allocation5 + $0x5c0] sm:$0xf]
    %v413 = vld [vmem:[#allocation5 + $0x5c4] sm:$0xff]
    %v414 = vld [vmem:[#allocation5 + $0x5cc] sm:$0xf]
    %v415 = vld [vmem:[#allocation5 + $0x5d0] sm:$0xff]
    %v416 = vld [vmem:[#allocation5 + $0x5d8] sm:$0xf]
    %v417 = vld [vmem:[#allocation5 + $0x5dc] sm:$0xff]
    %v418 = vld [vmem:[#allocation5 + $0x5e4] sm:$0xf]
    %v419 = vld [vmem:[#allocation5 + $0x5e8] sm:$0xff]
    %v420 = vld [vmem:[#allocation5 + $0x5f0] sm:$0xf]
    %v421 = vld [vmem:[#allocation5 + $0x5f4] sm:$0xff]
    %v422 = vld [vmem:[#allocation5 + $0x5fc] sm:$0xf]
    %v423 = vld [vmem:[#allocation5 + $0x600] sm:$0xff]
    %v424 = vld [vmem:[#allocation5 + $0x608] sm:$0xf]
    %v425 = vld [vmem:[#allocation5 + $0x60c] sm:$0xff]
    %v426 = vld [vmem:[#allocation5 + $0x614] sm:$0xf]
    %v427 = vld [vmem:[#allocation5 + $0x618] sm:$0xff]
    %v428 = vld [vmem:[#allocation5 + $0x620] sm:$0xf]
    %v429 = vld [vmem:[#allocation5 + $0x624] sm:$0xff]
    %v430 = vld [vmem:[#allocation5 + $0x62c] sm:$0xf]
    %v431 = vld [vmem:[#allocation5 + $0x630] sm:$0xff]
    %v432 = vld [vmem:[#allocation5 + $0x638] sm:$0xf]
    %v433 = vld [vmem:[#allocation5 + $0x63c] sm:$0xff]
    %v434 = vld [vmem:[#allocation5 + $0x644] sm:$0xf]
    %v435 = vld [vmem:[#allocation5 + $0x648] sm:$0xff]
    %v436 = vld [vmem:[#allocation5 + $0x650] sm:$0xf]
    %v437 = vld [vmem:[#allocation5 + $0x654] sm:$0xff]
    %v438 = vld [vmem:[#allocation5 + $0x65c] sm:$0xf]
    %v439 = vld [vmem:[#allocation5 + $0x660] sm:$0xff]
    %v440 = vld [vmem:[#allocation5 + $0x668] sm:$0xf]
    %v441 = vld [vmem:[#allocation5 + $0x66c] sm:$0xff]
    %v442 = vld [vmem:[#allocation5 + $0x674] sm:$0xf]
    %v443 = vld [vmem:[#allocation5 + $0x678] sm:$0xff]
    %v444 = vld [vmem:[#allocation5 + $0x680] sm:$0xf]
    %v445 = vld [vmem:[#allocation5 + $0x684] sm:$0xff]
    %v446 = vld [vmem:[#allocation5 + $0x68c] sm:$0xf]
    %v447 = vld [vmem:[#allocation5 + $0x690] sm:$0xff]
    %v448 = vld [vmem:[#allocation5 + $0x698] sm:$0xf]
    %v449 = vld [vmem:[#allocation5 + $0x69c] sm:$0xff]
    %v450 = vld [vmem:[#allocation5 + $0x6a4] sm:$0xf]
    %v451 = vld [vmem:[#allocation5 + $0x6a8] sm:$0xff]
    %v452 = vld [vmem:[#allocation5 + $0x6b0] sm:$0xf]
    %v453 = vld [vmem:[#allocation5 + $0x6b4] sm:$0xff]
    %v454 = vld [vmem:[#allocation5 + $0x6bc] sm:$0xf]
    %v455 = vld [vmem:[#allocation5 + $0x6c0] sm:$0xff]
    %v456 = vld [vmem:[#allocation5 + $0x6c8] sm:$0xf]
    %v457 = vld [vmem:[#allocation5 + $0x6cc] sm:$0xff]
    %v458 = vld [vmem:[#allocation5 + $0x6d4] sm:$0xf]
    %v459 = vld [vmem:[#allocation5 + $0x6d8] sm:$0xff]
    %v460 = vld [vmem:[#allocation5 + $0x6e0] sm:$0xf]
    %v461 = vld [vmem:[#allocation5 + $0x6e4] sm:$0xff]
    %v462 = vld [vmem:[#allocation5 + $0x6ec] sm:$0xf]
    %v463 = vld [vmem:[#allocation5 + $0x6f0] sm:$0xff]
    %v464 = vld [vmem:[#allocation5 + $0x6f8] sm:$0xf]
    %v465 = vld [vmem:[#allocation5 + $0x6fc] sm:$0xff]
    %v466 = vld [vmem:[#allocation5 + $0x704] sm:$0xf]
    %v467 = vld [vmem:[#allocation5 + $0x708] sm:$0xff]
    %v468 = vld [vmem:[#allocation5 + $0x710] sm:$0xf]
    %v469 = vld [vmem:[#allocation5 + $0x714] sm:$0xff]
    %v470 = vld [vmem:[#allocation5 + $0x71c] sm:$0xf]
    %v471 = vld [vmem:[#allocation5 + $0x720] sm:$0xff]
    %v472 = vld [vmem:[#allocation5 + $0x728] sm:$0xf]
    %v473 = vld [vmem:[#allocation5 + $0x72c] sm:$0xff]
    %v474 = vld [vmem:[#allocation5 + $0x734] sm:$0xf]
    %v475 = vld [vmem:[#allocation5 + $0x738] sm:$0xff]
    %v476 = vld [vmem:[#allocation5 + $0x740] sm:$0xf]
    %v477 = vld [vmem:[#allocation5 + $0x744] sm:$0xff]
    %v478 = vld [vmem:[#allocation5 + $0x74c] sm:$0xf]
    %v479 = vld [vmem:[#allocation5 + $0x750] sm:$0xff]
    %v480 = vld [vmem:[#allocation5 + $0x758] sm:$0xf]
    %v481 = vld [vmem:[#allocation5 + $0x75c] sm:$0xff]
    %v482 = vld [vmem:[#allocation5 + $0x764] sm:$0xf]
    %v483 = vld [vmem:[#allocation5 + $0x768] sm:$0xff]
    %v484 = vld [vmem:[#allocation5 + $0x770] sm:$0xf]
    %v485 = vld [vmem:[#allocation5 + $0x774] sm:$0xff]
    %v486 = vld [vmem:[#allocation5 + $0x77c] sm:$0xf]
    %v487 = vld [vmem:[#allocation5 + $0x780] sm:$0xff]
    %v488 = vld [vmem:[#allocation5 + $0x788] sm:$0xf]
    %v489 = vld [vmem:[#allocation5 + $0x78c] sm:$0xff]
    %v490 = vld [vmem:[#allocation5 + $0x794] sm:$0xf]
    %v491 = vld [vmem:[#allocation5 + $0x798] sm:$0xff]
    %v492 = vld [vmem:[#allocation5 + $0x7a0] sm:$0xf]
    %v493 = vld [vmem:[#allocation5 + $0x7a4] sm:$0xff]
    %v494 = vld [vmem:[#allocation5 + $0x7ac] sm:$0xf]
    %v495 = vld [vmem:[#allocation5 + $0x7b0] sm:$0xff]
    %v496 = vld [vmem:[#allocation5 + $0x7b8] sm:$0xf]
    %v497 = vld [vmem:[#allocation5 + $0x7bc] sm:$0xff]
    %v498 = vld [vmem:[#allocation5 + $0x7c4] sm:$0xf]
    %v499 = vld [vmem:[#allocation5 + $0x7c8] sm:$0xff]
    %v500 = vld [vmem:[#allocation5 + $0x7d0] sm:$0xf]
    %v501 = vld [vmem:[#allocation5 + $0x7d4] sm:$0xff]
    %v502 = vld [vmem:[#allocation5 + $0x7dc] sm:$0xf]
    %v503 = vld [vmem:[#allocation5 + $0x7e0] sm:$0xff]
    %v504 = vld [vmem:[#allocation5 + $0x7e8] sm:$0xf]
    %v505 = vld [vmem:[#allocation5 + $0x7ec] sm:$0xff]
    %v506 = vld [vmem:[#allocation5 + $0x7f4] sm:$0xf]
    %v507 = vld [vmem:[#allocation5 + $0x7f8] sm:$0xff]
    %v508 = vld [vmem:[#allocation5 + $0x800] sm:$0xf]
    %v509 = vld [vmem:[#allocation5 + $0x804] sm:$0xff]
    %v510 = vld [vmem:[#allocation5 + $0x80c] sm:$0xf]
    %v511 = vld [vmem:[#allocation5 + $0x810] sm:$0xff]
    %v512 = vld [vmem:[#allocation5 + $0x818] sm:$0xf]
    %v513 = vld [vmem:[#allocation5 + $0x81c] sm:$0xff]
    %v514 = vld [vmem:[#allocation5 + $0x824] sm:$0xf]
    %v515 = vld [vmem:[#allocation5 + $0x828] sm:$0xff]
    %v516 = vld [vmem:[#allocation5 + $0x830] sm:$0xf]
    %v517 = vld [vmem:[#allocation5 + $0x834] sm:$0xff]
    %v518 = vld [vmem:[#allocation5 + $0x83c] sm:$0xf]
    %v519 = vld [vmem:[#allocation5 + $0x840] sm:$0xff]
    %v520 = vld [vmem:[#allocation5 + $0x848] sm:$0xf]
    %v521 = vld [vmem:[#allocation5 + $0x84c] sm:$0xff]
    %v522 = vld [vmem:[#allocation5 + $0x854] sm:$0xf]
    %v523 = vld [vmem:[#allocation5 + $0x858] sm:$0xff]
    %v524 = vld [vmem:[#allocation5 + $0x860] sm:$0xf]
    %v525 = vld [vmem:[#allocation5 + $0x864] sm:$0xff]
    %v526 = vld [vmem:[#allocation5 + $0x86c] sm:$0xf]
    %v527 = vld [vmem:[#allocation5 + $0x870] sm:$0xff]
    %v528 = vld [vmem:[#allocation5 + $0x878] sm:$0xf]
    %v529 = vld [vmem:[#allocation5 + $0x87c] sm:$0xff]
    %v530 = vld [vmem:[#allocation5 + $0x884] sm:$0xf]
    %v531 = vld [vmem:[#allocation5 + $0x888] sm:$0xff]
    %v532 = vld [vmem:[#allocation5 + $0x890] sm:$0xf]
    %v533 = vld [vmem:[#allocation5 + $0x894] sm:$0xff]
    %v534 = vld [vmem:[#allocation5 + $0x89c] sm:$0xf]
    %v535 = vld [vmem:[#allocation5 + $0x8a0] sm:$0xff]
    %v536 = vld [vmem:[#allocation5 + $0x8a8] sm:$0xf]
    %v537 = vld [vmem:[#allocation5 + $0x8ac] sm:$0xff]
    %v538 = vld [vmem:[#allocation5 + $0x8b4] sm:$0xf]
    %v539 = vld [vmem:[#allocation5 + $0x8b8] sm:$0xff]
    %v540 = vld [vmem:[#allocation5 + $0x8c0] sm:$0xf]
    %v541 = vld [vmem:[#allocation5 + $0x8c4] sm:$0xff]
    %v542 = vld [vmem:[#allocation5 + $0x8cc] sm:$0xf]
    %v543 = vld [vmem:[#allocation5 + $0x8d0] sm:$0xff]
    %v544 = vld [vmem:[#allocation5 + $0x8d8] sm:$0xf]
    %v545 = vld [vmem:[#allocation5 + $0x8dc] sm:$0xff]
    %v546 = vld [vmem:[#allocation5 + $0x8e4] sm:$0xf]
    %v547 = vld [vmem:[#allocation5 + $0x8e8] sm:$0xff]
    %v548 = vld [vmem:[#allocation5 + $0x8f0] sm:$0xf]
    %v549 = vld [vmem:[#allocation5 + $0x8f4] sm:$0xff]
    %v550 = vld [vmem:[#allocation5 + $0x8fc] sm:$0xf]
    %v551 = vld [vmem:[#allocation5 + $0x900] sm:$0xff]
    %v552 = vld [vmem:[#allocation5 + $0x908] sm:$0xf]
    %v553 = vld [vmem:[#allocation5 + $0x90c] sm:$0xff]
    %v554 = vld [vmem:[#allocation5 + $0x914] sm:$0xf]
    %v555 = vld [vmem:[#allocation5 + $0x918] sm:$0xff]
    %v556 = vld [vmem:[#allocation5 + $0x920] sm:$0xf]
    %v557 = vld [vmem:[#allocation5 + $0x924] sm:$0xff]
    %v558 = vld [vmem:[#allocation5 + $0x92c] sm:$0xf]
    %v559 = vld [vmem:[#allocation5 + $0x930] sm:$0xff]
    %v560 = vld [vmem:[#allocation5 + $0x938] sm:$0xf]
    %v561 = vld [vmem:[#allocation5 + $0x93c] sm:$0xff]
    %v562 = vld [vmem:[#allocation5 + $0x944] sm:$0xf]
    %v563 = vld [vmem:[#allocation5 + $0x948] sm:$0xff]
    %v564 = vld [vmem:[#allocation5 + $0x950] sm:$0xf]
    %v565 = vld [vmem:[#allocation5 + $0x954] sm:$0xff]
    %v566 = vld [vmem:[#allocation5 + $0x95c] sm:$0xf]
    %v567 = vld [vmem:[#allocation5 + $0x960] sm:$0xff]
    %v568 = vld [vmem:[#allocation5 + $0x968] sm:$0xf]
    %v569 = vld [vmem:[#allocation5 + $0x96c] sm:$0xff]
    %v570 = vld [vmem:[#allocation5 + $0x974] sm:$0xf]
    %v571 = vld [vmem:[#allocation5 + $0x978] sm:$0xff]
    %v572 = vld [vmem:[#allocation5 + $0x980] sm:$0xf]
    %v573 = vld [vmem:[#allocation5 + $0x984] sm:$0xff]
    %v574 = vld [vmem:[#allocation5 + $0x98c] sm:$0xf]
    %v575 = vld [vmem:[#allocation5 + $0x990] sm:$0xff]
    %v576 = vld [vmem:[#allocation5 + $0x998] sm:$0xf]
    %v577 = vld [vmem:[#allocation5 + $0x99c] sm:$0xff]
    %v578 = vld [vmem:[#allocation5 + $0x9a4] sm:$0xf]
    %v579 = vld [vmem:[#allocation5 + $0x9a8] sm:$0xff]
    %v580 = vld [vmem:[#allocation5 + $0x9b0] sm:$0xf]
    %v581 = vld [vmem:[#allocation5 + $0x9b4] sm:$0xff]
    %v582 = vld [vmem:[#allocation5 + $0x9bc] sm:$0xf]
    %v583 = vld [vmem:[#allocation5 + $0x9c0] sm:$0xff]
    %v584 = vld [vmem:[#allocation5 + $0x9c8] sm:$0xf]
    %v585 = vld [vmem:[#allocation5 + $0x9cc] sm:$0xff]
    %v586 = vld [vmem:[#allocation5 + $0x9d4] sm:$0xf]
    %v587 = vld [vmem:[#allocation5 + $0x9d8] sm:$0xff]
    %v588 = vld [vmem:[#allocation5 + $0x9e0] sm:$0xf]
    %v589 = vld [vmem:[#allocation5 + $0x9e4] sm:$0xff]
    %v590 = vld [vmem:[#allocation5 + $0x9ec] sm:$0xf]
    %v591 = vld [vmem:[#allocation5 + $0x9f0] sm:$0xff]
    %v592 = vld [vmem:[#allocation5 + $0x9f8] sm:$0xf]
    %v593 = vld [vmem:[#allocation5 + $0x9fc] sm:$0xff]
    %v594 = vld [vmem:[#allocation5 + $0xa04] sm:$0xf]
    %v595 = vld [vmem:[#allocation5 + $0xa08] sm:$0xff]
    %v596 = vld [vmem:[#allocation5 + $0xa10] sm:$0xf]
    %v597 = vld [vmem:[#allocation5 + $0xa14] sm:$0xff]
    %v598 = vld [vmem:[#allocation5 + $0xa1c] sm:$0xf]
    %v599 = vld [vmem:[#allocation5 + $0xa20] sm:$0xff]
    %v600 = vld [vmem:[#allocation5 + $0xa28] sm:$0xf]
    %v601 = vld [vmem:[#allocation5 + $0xa2c] sm:$0xff]
    %v602 = vld [vmem:[#allocation5 + $0xa34] sm:$0xf]
    %v603 = vld [vmem:[#allocation5 + $0xa38] sm:$0xff]
    %v604 = vld [vmem:[#allocation5 + $0xa40] sm:$0xf]
    %v605 = vld [vmem:[#allocation5 + $0xa44] sm:$0xff]
    %v606 = vld [vmem:[#allocation5 + $0xa4c] sm:$0xf]
    %v607 = vld [vmem:[#allocation5 + $0xa50] sm:$0xff]
    %v608 = vld [vmem:[#allocation5 + $0xa58] sm:$0xf]
    %v609 = vld [vmem:[#allocation5 + $0xa5c] sm:$0xff]
    %v610 = vld [vmem:[#allocation5 + $0xa64] sm:$0xf]
    %v611 = vld [vmem:[#allocation5 + $0xa68] sm:$0xff]
    %v612 = vld [vmem:[#allocation5 + $0xa70] sm:$0xf]
    %v613 = vld [vmem:[#allocation5 + $0xa74] sm:$0xff]
    %v614 = vld [vmem:[#allocation5 + $0xa7c] sm:$0xf]
    %v615 = vld [vmem:[#allocation7] sm:$0x7]
    %v617 = vlaneseq
    %v618 = vshrl.u32 %v617, 7
    %v619 = vsub.s32 0, %v618
    %v620 = vrot.slane %v615, %v619
    %v621 = vlaneseq
    %v622 = vshrl.u32 %v621, 7
    %v623 = vsub.s32 1, %v622
    %v624 = vrot.slane %v615, %v623
    %v625 = vlaneseq
    %v626 = vshrl.u32 %v625, 7
    %v627 = vsub.s32 2, %v626
    %v628 = vrot.slane %v615, %v627
    %v744 = vunpack.c.l.b16 %v55
    %v745 = vunpack.c.h.b16 %v55
    %v746 = vunpack.c.l.b16 %v56
    %v747 = vunpack.c.h.b16 %v56
    %v748 = vunpack.c.l.b16 %v57
    %v749 = vunpack.c.h.b16 %v57
    %v750 = vunpack.c.l.b16 %v58
    %v751 = vunpack.c.h.b16 %v58
    %v752 = vunpack.c.l.b16 %v59
    %v753 = vunpack.c.h.b16 %v59
    %v754 = vunpack.c.l.b16 %v60
    %v755 = vunpack.c.h.b16 %v60
    %v756 = vunpack.c.l.b16 %v61
    %v757 = vunpack.c.h.b16 %v61
    %v758 = vunpack.c.l.b16 %v62
    %v759 = vunpack.c.h.b16 %v62
    %v760 = vunpack.c.l.b16 %v63
    %v761 = vunpack.c.h.b16 %v63
    %v762 = vunpack.c.l.b16 %v64
    %v763 = vunpack.c.h.b16 %v64
    %v764 = vunpack.c.l.b16 %v65
    %v765 = vunpack.c.h.b16 %v65
    %v766 = vunpack.c.l.b16 %v66
    %v767 = vunpack.c.h.b16 %v66
    %v768 = vunpack.c.l.b16 %v67
    %v769 = vunpack.c.h.b16 %v67
    %v770 = vunpack.c.l.b16 %v68
    %v771 = vunpack.c.h.b16 %v68
    %v772 = vunpack.c.l.b16 %v69
    %v773 = vunpack.c.h.b16 %v69
    %v774 = vunpack.c.l.b16 %v70
    %v775 = vunpack.c.h.b16 %v70
    %v776 = vunpack.c.l.b16 %v71
    %v777 = vunpack.c.h.b16 %v71
    %v778 = vunpack.c.l.b16 %v72
    %v779 = vunpack.c.h.b16 %v72
    %v780 = vunpack.c.l.b16 %v73
    %v781 = vunpack.c.h.b16 %v73
    %v782 = vunpack.c.l.b16 %v74
    %v783 = vunpack.c.h.b16 %v74
    %v784 = vunpack.c.l.b16 %v75
    %v785 = vunpack.c.h.b16 %v75
    %v786 = vunpack.c.l.b16 %v76
    %v787 = vunpack.c.h.b16 %v76
    %v788 = vunpack.c.l.b16 %v77
    %v789 = vunpack.c.h.b16 %v77
    %v790 = vunpack.c.l.b16 %v78
    %v791 = vunpack.c.h.b16 %v78
    %v792 = vunpack.c.l.b16 %v79
    %v793 = vunpack.c.h.b16 %v79
    %v794 = vunpack.c.l.b16 %v80
    %v795 = vunpack.c.h.b16 %v80
    %v796 = vunpack.c.l.b16 %v81
    %v797 = vunpack.c.h.b16 %v81
    %v798 = vunpack.c.l.b16 %v82
    %v799 = vunpack.c.h.b16 %v82
    %v800 = vunpack.c.l.b16 %v83
    %v801 = vunpack.c.h.b16 %v83
    %v802 = vunpack.c.l.b16 %v84
    %v803 = vunpack.c.h.b16 %v84
    %v804 = vunpack.c.l.b16 %v85
    %v805 = vunpack.c.h.b16 %v85
    %v806 = vunpack.c.l.b16 %v86
    %v807 = vunpack.c.h.b16 %v86
    %v808 = vunpack.c.l.b16 %v87
    %v809 = vunpack.c.h.b16 %v87
    %v810 = vunpack.c.l.b16 %v88
    %v811 = vunpack.c.h.b16 %v88
    %v812 = vunpack.c.l.b16 %v89
    %v813 = vunpack.c.h.b16 %v89
    %v814 = vunpack.c.l.b16 %v90
    %v815 = vunpack.c.h.b16 %v90
    %v816 = vunpack.c.l.b16 %v91
    %v817 = vunpack.c.h.b16 %v91
    %v818 = vunpack.c.l.b16 %v92
    %v819 = vunpack.c.h.b16 %v92
    %v820 = vunpack.c.l.b16 %v93
    %v821 = vunpack.c.h.b16 %v93
    %v822 = vunpack.c.l.b16 %v94
    %v823 = vunpack.c.h.b16 %v94
    %v824 = vunpack.c.l.b16 %v95
    %v825 = vunpack.c.h.b16 %v95
    %v826 = vunpack.c.l.b16 %v96
    %v827 = vunpack.c.h.b16 %v96
    %v828 = vunpack.c.l.b16 %v97
    %v829 = vunpack.c.h.b16 %v97
    %v830 = vunpack.c.l.b16 %v98
    %v831 = vunpack.c.h.b16 %v98
    %v832 = vunpack.c.l.b16 %v99
    %v833 = vunpack.c.h.b16 %v99
    %v834 = vunpack.c.l.b16 %v100
    %v835 = vunpack.c.h.b16 %v100
    %v836 = vunpack.c.l.b16 %v101
    %v837 = vunpack.c.h.b16 %v101
    %v838 = vunpack.c.l.b16 %v102
    %v839 = vunpack.c.h.b16 %v102
    %v840 = vunpack.c.l.b16 %v103
    %v841 = vunpack.c.h.b16 %v103
    %v842 = vunpack.c.l.b16 %v104
    %v843 = vunpack.c.h.b16 %v104
    %v844 = vunpack.c.l.b16 %v105
    %v845 = vunpack.c.h.b16 %v105
    %v846 = vunpack.c.l.b16 %v106
    %v847 = vunpack.c.h.b16 %v106
    %v848 = vunpack.c.l.b16 %v107
    %v849 = vunpack.c.h.b16 %v107
    %v850 = vunpack.c.l.b16 %v108
    %v851 = vunpack.c.h.b16 %v108
    %v852 = vunpack.c.l.b16 %v109
    %v853 = vunpack.c.h.b16 %v109
    %v854 = vunpack.c.l.b16 %v110
    %v855 = vunpack.c.h.b16 %v110
    %v856 = vunpack.c.l.b16 %v111
    %v857 = vunpack.c.h.b16 %v111
    %v858 = vunpack.c.l.b16 %v112
    %v859 = vunpack.c.h.b16 %v112
    %v860 = vunpack.c.l.b16 %v113
    %v861 = vunpack.c.h.b16 %v113
    %v862 = vunpack.c.l.b16 %v114
    %v863 = vunpack.c.h.b16 %v114
    %v864 = vunpack.c.l.b16 %v115
    %v865 = vunpack.c.h.b16 %v115
    %v866 = vunpack.c.l.b16 %v116
    %v867 = vunpack.c.h.b16 %v116
    %v868 = vunpack.c.l.b16 %v117
    %v869 = vunpack.c.h.b16 %v117
    %v870 = vunpack.c.l.b16 %v118
    %v871 = vunpack.c.h.b16 %v118
    %v872 = vunpack.c.l.b16 %v119
    %v873 = vunpack.c.h.b16 %v119
    %v874 = vunpack.c.l.b16 %v120
    %v875 = vunpack.c.h.b16 %v120
    %v876 = vunpack.c.l.b16 %v121
    %v877 = vunpack.c.h.b16 %v121
    %v878 = vunpack.c.l.b16 %v122
    %v879 = vunpack.c.h.b16 %v122
    %v880 = vunpack.c.l.b16 %v123
    %v881 = vunpack.c.h.b16 %v123
    %v882 = vunpack.c.l.b16 %v124
    %v883 = vunpack.c.h.b16 %v124
    %v884 = vunpack.c.l.b16 %v125
    %v885 = vunpack.c.h.b16 %v125
    %v886 = vunpack.c.l.b16 %v126
    %v887 = vunpack.c.h.b16 %v126
    %v888 = vunpack.c.l.b16 %v127
    %v889 = vunpack.c.h.b16 %v127
    %v890 = vunpack.c.l.b16 %v128
    %v891 = vunpack.c.h.b16 %v128
    %v892 = vunpack.c.l.b16 %v129
    %v893 = vunpack.c.h.b16 %v129
    %v894 = vunpack.c.l.b16 %v130
    %v895 = vunpack.c.h.b16 %v130
    %v896 = vunpack.c.l.b16 %v131
    %v897 = vunpack.c.h.b16 %v131
    %v898 = vunpack.c.l.b16 %v132
    %v899 = vunpack.c.h.b16 %v132
    %v900 = vunpack.c.l.b16 %v133
    %v901 = vunpack.c.h.b16 %v133
    %v902 = vunpack.c.l.b16 %v134
    %v903 = vunpack.c.h.b16 %v134
    %v904 = vunpack.c.l.b16 %v135
    %v905 = vunpack.c.h.b16 %v135
    %v906 = vunpack.c.l.b16 %v136
    %v907 = vunpack.c.h.b16 %v136
    %v908 = vunpack.c.l.b16 %v137
    %v909 = vunpack.c.h.b16 %v137
    %v910 = vunpack.c.l.b16 %v138
    %v911 = vunpack.c.h.b16 %v138
    %v912 = vunpack.c.l.b16 %v139
    %v913 = vunpack.c.h.b16 %v139
    %v914 = vunpack.c.l.b16 %v140
    %v915 = vunpack.c.h.b16 %v140
    %v916 = vunpack.c.l.b16 %v141
    %v917 = vunpack.c.h.b16 %v141
    %v918 = vunpack.c.l.b16 %v142
    %v919 = vunpack.c.h.b16 %v142
    %v920 = vunpack.c.l.b16 %v143
    %v921 = vunpack.c.h.b16 %v143
    %v922 = vunpack.c.l.b16 %v144
    %v923 = vunpack.c.h.b16 %v144
    %v924 = vunpack.c.l.b16 %v145
    %v925 = vunpack.c.h.b16 %v145
    %v926 = vunpack.c.l.b16 %v146
    %v927 = vunpack.c.h.b16 %v146
    %v928 = vunpack.c.l.b16 %v147
    %v929 = vunpack.c.h.b16 %v147
    %v930 = vunpack.c.l.b16 %v148
    %v931 = vunpack.c.h.b16 %v148
    %v932 = vunpack.c.l.b16 %v149
    %v933 = vunpack.c.h.b16 %v149
    %v934 = vunpack.c.l.b16 %v150
    %v935 = vunpack.c.h.b16 %v150
    %v936 = vunpack.c.l.b16 %v151
    %v937 = vunpack.c.h.b16 %v151
    %v938 = vunpack.c.l.b16 %v152
    %v939 = vunpack.c.h.b16 %v152
    %v940 = vunpack.c.l.b16 %v153
    %v941 = vunpack.c.h.b16 %v153
    %v942 = vunpack.c.l.b16 %v154
    %v943 = vunpack.c.h.b16 %v154
    %v944 = vunpack.c.l.b16 %v155
    %v945 = vunpack.c.h.b16 %v155
    %v946 = vunpack.c.l.b16 %v156
    %v947 = vunpack.c.h.b16 %v156
    %v948 = vunpack.c.l.b16 %v157
    %v949 = vunpack.c.h.b16 %v157
    %v950 = vunpack.c.l.b16 %v158
    %v951 = vunpack.c.h.b16 %v158
    %v952 = vunpack.c.l.b16 %v159
    %v953 = vunpack.c.h.b16 %v159
    %v954 = vunpack.c.l.b16 %v160
    %v955 = vunpack.c.h.b16 %v160
    %v956 = vunpack.c.l.b16 %v161
    %v957 = vunpack.c.h.b16 %v161
    %v958 = vunpack.c.l.b16 %v162
    %v959 = vunpack.c.h.b16 %v162
    %v960 = vunpack.c.l.b16 %v163
    %v961 = vunpack.c.h.b16 %v163
    %v962 = vunpack.c.l.b16 %v164
    %v963 = vunpack.c.h.b16 %v164
    %v964 = vunpack.c.l.b16 %v165
    %v965 = vunpack.c.h.b16 %v165
    %v966 = vunpack.c.l.b16 %v166
    %v967 = vunpack.c.h.b16 %v166
    %v968 = vpack.c.b16 %v758, %v744
    %v969 = vpack.c.b16 %v759, %v745
    %v970 = vpack.c.b16 %v760, %v746
    %v971 = vpack.c.b16 %v761, %v747
    %v972 = vpack.c.b16 %v762, %v748
    %v973 = vpack.c.b16 %v763, %v749
    %v974 = vpack.c.b16 %v764, %v750
    %v975 = vpack.c.b16 %v765, %v751
    %v976 = vpack.c.b16 %v766, %v752
    %v977 = vpack.c.b16 %v767, %v753
    %v978 = vpack.c.b16 %v768, %v754
    %v979 = vpack.c.b16 %v769, %v755
    %v980 = vpack.c.b16 %v770, %v756
    %v981 = vpack.c.b16 %v771, %v757
    %v982 = vpack.c.b16 %v786, %v772
    %v983 = vpack.c.b16 %v787, %v773
    %v984 = vpack.c.b16 %v788, %v774
    %v985 = vpack.c.b16 %v789, %v775
    %v986 = vpack.c.b16 %v790, %v776
    %v987 = vpack.c.b16 %v791, %v777
    %v988 = vpack.c.b16 %v792, %v778
    %v989 = vpack.c.b16 %v793, %v779
    %v990 = vpack.c.b16 %v794, %v780
    %v991 = vpack.c.b16 %v795, %v781
    %v992 = vpack.c.b16 %v796, %v782
    %v993 = vpack.c.b16 %v797, %v783
    %v994 = vpack.c.b16 %v798, %v784
    %v995 = vpack.c.b16 %v799, %v785
    %v996 = vpack.c.b16 %v814, %v800
    %v997 = vpack.c.b16 %v815, %v801
    %v998 = vpack.c.b16 %v816, %v802
    %v999 = vpack.c.b16 %v817, %v803
    %v1000 = vpack.c.b16 %v818, %v804
    %v1001 = vpack.c.b16 %v819, %v805
    %v1002 = vpack.c.b16 %v820, %v806
    %v1003 = vpack.c.b16 %v821, %v807
    %v1004 = vpack.c.b16 %v822, %v808
    %v1005 = vpack.c.b16 %v823, %v809
    %v1006 = vpack.c.b16 %v824, %v810
    %v1007 = vpack.c.b16 %v825, %v811
    %v1008 = vpack.c.b16 %v826, %v812
    %v1009 = vpack.c.b16 %v827, %v813
    %v1010 = vpack.c.b16 %v842, %v828
    %v1011 = vpack.c.b16 %v843, %v829
    %v1012 = vpack.c.b16 %v844, %v830
    %v1013 = vpack.c.b16 %v845, %v831
    %v1014 = vpack.c.b16 %v846, %v832
    %v1015 = vpack.c.b16 %v847, %v833
    %v1016 = vpack.c.b16 %v848, %v834
    %v1017 = vpack.c.b16 %v849, %v835
    %v1018 = vpack.c.b16 %v850, %v836
    %v1019 = vpack.c.b16 %v851, %v837
    %v1020 = vpack.c.b16 %v852, %v838
    %v1021 = vpack.c.b16 %v853, %v839
    %v1022 = vpack.c.b16 %v854, %v840
    %v1023 = vpack.c.b16 %v855, %v841
    %v1024 = vpack.c.b16 %v870, %v856
    %v1025 = vpack.c.b16 %v871, %v857
    %v1026 = vpack.c.b16 %v872, %v858
    %v1027 = vpack.c.b16 %v873, %v859
    %v1028 = vpack.c.b16 %v874, %v860
    %v1029 = vpack.c.b16 %v875, %v861
    %v1030 = vpack.c.b16 %v876, %v862
    %v1031 = vpack.c.b16 %v877, %v863
    %v1032 = vpack.c.b16 %v878, %v864
    %v1033 = vpack.c.b16 %v879, %v865
    %v1034 = vpack.c.b16 %v880, %v866
    %v1035 = vpack.c.b16 %v881, %v867
    %v1036 = vpack.c.b16 %v882, %v868
    %v1037 = vpack.c.b16 %v883, %v869
    %v1038 = vpack.c.b16 %v898, %v884
    %v1039 = vpack.c.b16 %v899, %v885
    %v1040 = vpack.c.b16 %v900, %v886
    %v1041 = vpack.c.b16 %v901, %v887
    %v1042 = vpack.c.b16 %v902, %v888
    %v1043 = vpack.c.b16 %v903, %v889
    %v1044 = vpack.c.b16 %v904, %v890
    %v1045 = vpack.c.b16 %v905, %v891
    %v1046 = vpack.c.b16 %v906, %v892
    %v1047 = vpack.c.b16 %v907, %v893
    %v1048 = vpack.c.b16 %v908, %v894
    %v1049 = vpack.c.b16 %v909, %v895
    %v1050 = vpack.c.b16 %v910, %v896
    %v1051 = vpack.c.b16 %v911, %v897
    %v1052 = vpack.c.b16 %v926, %v912
    %v1053 = vpack.c.b16 %v927, %v913
    %v1054 = vpack.c.b16 %v928, %v914
    %v1055 = vpack.c.b16 %v929, %v915
    %v1056 = vpack.c.b16 %v930, %v916
    %v1057 = vpack.c.b16 %v931, %v917
    %v1058 = vpack.c.b16 %v932, %v918
    %v1059 = vpack.c.b16 %v933, %v919
    %v1060 = vpack.c.b16 %v934, %v920
    %v1061 = vpack.c.b16 %v935, %v921
    %v1062 = vpack.c.b16 %v936, %v922
    %v1063 = vpack.c.b16 %v937, %v923
    %v1064 = vpack.c.b16 %v938, %v924
    %v1065 = vpack.c.b16 %v939, %v925
    %v1066 = vpack.c.b16 %v954, %v940
    %v1067 = vpack.c.b16 %v955, %v941
    %v1068 = vpack.c.b16 %v956, %v942
    %v1069 = vpack.c.b16 %v957, %v943
    %v1070 = vpack.c.b16 %v958, %v944
    %v1071 = vpack.c.b16 %v959, %v945
    %v1072 = vpack.c.b16 %v960, %v946
    %v1073 = vpack.c.b16 %v961, %v947
    %v1074 = vpack.c.b16 %v962, %v948
    %v1075 = vpack.c.b16 %v963, %v949
    %v1076 = vpack.c.b16 %v964, %v950
    %v1077 = vpack.c.b16 %v965, %v951
    %v1078 = vpack.c.b16 %v966, %v952
    %v1079 = vpack.c.b16 %v967, %v953
    %v1640 = vunpack.c.l.b16 %v167
    %v1641 = vunpack.c.h.b16 %v167
    %v1642 = vunpack.c.l.b16 %v168
    %v1643 = vunpack.c.l.b16 %v169
    %v1644 = vunpack.c.h.b16 %v169
    %v1645 = vunpack.c.l.b16 %v170
    %v1646 = vunpack.c.l.b16 %v171
    %v1647 = vunpack.c.h.b16 %v171
    %v1648 = vunpack.c.l.b16 %v172
    %v1649 = vunpack.c.l.b16 %v173
    %v1650 = vunpack.c.h.b16 %v173
    %v1651 = vunpack.c.l.b16 %v174
    %v1652 = vunpack.c.l.b16 %v175
    %v1653 = vunpack.c.h.b16 %v175
    %v1654 = vunpack.c.l.b16 %v176
    %v1655 = vunpack.c.l.b16 %v177
    %v1656 = vunpack.c.h.b16 %v177
    %v1657 = vunpack.c.l.b16 %v178
    %v1658 = vunpack.c.l.b16 %v179
    %v1659 = vunpack.c.h.b16 %v179
    %v1660 = vunpack.c.l.b16 %v180
    %v1661 = vunpack.c.l.b16 %v181
    %v1662 = vunpack.c.h.b16 %v181
    %v1663 = vunpack.c.l.b16 %v182
    %v1664 = vunpack.c.l.b16 %v183
    %v1665 = vunpack.c.h.b16 %v183
    %v1666 = vunpack.c.l.b16 %v184
    %v1667 = vunpack.c.l.b16 %v185
    %v1668 = vunpack.c.h.b16 %v185
    %v1669 = vunpack.c.l.b16 %v186
    %v1670 = vunpack.c.l.b16 %v187
    %v1671 = vunpack.c.h.b16 %v187
    %v1672 = vunpack.c.l.b16 %v188
    %v1673 = vunpack.c.l.b16 %v189
    %v1674 = vunpack.c.h.b16 %v189
    %v1675 = vunpack.c.l.b16 %v190
    %v1676 = vunpack.c.l.b16 %v191
    %v1677 = vunpack.c.h.b16 %v191
    %v1678 = vunpack.c.l.b16 %v192
    %v1679 = vunpack.c.l.b16 %v193
    %v1680 = vunpack.c.h.b16 %v193
    %v1681 = vunpack.c.l.b16 %v194
    %v1682 = vunpack.c.l.b16 %v195
    %v1683 = vunpack.c.h.b16 %v195
    %v1684 = vunpack.c.l.b16 %v196
    %v1685 = vunpack.c.l.b16 %v197
    %v1686 = vunpack.c.h.b16 %v197
    %v1687 = vunpack.c.l.b16 %v198
    %v1688 = vunpack.c.l.b16 %v199
    %v1689 = vunpack.c.h.b16 %v199
    %v1690 = vunpack.c.l.b16 %v200
    %v1691 = vunpack.c.l.b16 %v201
    %v1692 = vunpack.c.h.b16 %v201
    %v1693 = vunpack.c.l.b16 %v202
    %v1694 = vunpack.c.l.b16 %v203
    %v1695 = vunpack.c.h.b16 %v203
    %v1696 = vunpack.c.l.b16 %v204
    %v1697 = vunpack.c.l.b16 %v205
    %v1698 = vunpack.c.h.b16 %v205
    %v1699 = vunpack.c.l.b16 %v206
    %v1700 = vunpack.c.l.b16 %v207
    %v1701 = vunpack.c.h.b16 %v207
    %v1702 = vunpack.c.l.b16 %v208
    %v1703 = vunpack.c.l.b16 %v209
    %v1704 = vunpack.c.h.b16 %v209
    %v1705 = vunpack.c.l.b16 %v210
    %v1706 = vunpack.c.l.b16 %v211
    %v1707 = vunpack.c.h.b16 %v211
    %v1708 = vunpack.c.l.b16 %v212
    %v1709 = vunpack.c.l.b16 %v213
    %v1710 = vunpack.c.h.b16 %v213
    %v1711 = vunpack.c.l.b16 %v214
    %v1712 = vunpack.c.l.b16 %v215
    %v1713 = vunpack.c.h.b16 %v215
    %v1714 = vunpack.c.l.b16 %v216
    %v1715 = vunpack.c.l.b16 %v217
    %v1716 = vunpack.c.h.b16 %v217
    %v1717 = vunpack.c.l.b16 %v218
    %v1718 = vunpack.c.l.b16 %v219
    %v1719 = vunpack.c.h.b16 %v219
    %v1720 = vunpack.c.l.b16 %v220
    %v1721 = vunpack.c.l.b16 %v221
    %v1722 = vunpack.c.h.b16 %v221
    %v1723 = vunpack.c.l.b16 %v222
    %v1724 = vunpack.c.l.b16 %v223
    %v1725 = vunpack.c.h.b16 %v223
    %v1726 = vunpack.c.l.b16 %v224
    %v1727 = vunpack.c.l.b16 %v225
    %v1728 = vunpack.c.h.b16 %v225
    %v1729 = vunpack.c.l.b16 %v226
    %v1730 = vunpack.c.l.b16 %v227
    %v1731 = vunpack.c.h.b16 %v227
    %v1732 = vunpack.c.l.b16 %v228
    %v1733 = vunpack.c.l.b16 %v229
    %v1734 = vunpack.c.h.b16 %v229
    %v1735 = vunpack.c.l.b16 %v230
    %v1736 = vunpack.c.l.b16 %v231
    %v1737 = vunpack.c.h.b16 %v231
    %v1738 = vunpack.c.l.b16 %v232
    %v1739 = vunpack.c.l.b16 %v233
    %v1740 = vunpack.c.h.b16 %v233
    %v1741 = vunpack.c.l.b16 %v234
    %v1742 = vunpack.c.l.b16 %v235
    %v1743 = vunpack.c.h.b16 %v235
    %v1744 = vunpack.c.l.b16 %v236
    %v1745 = vunpack.c.l.b16 %v237
    %v1746 = vunpack.c.h.b16 %v237
    %v1747 = vunpack.c.l.b16 %v238
    %v1748 = vunpack.c.l.b16 %v239
    %v1749 = vunpack.c.h.b16 %v239
    %v1750 = vunpack.c.l.b16 %v240
    %v1751 = vunpack.c.l.b16 %v241
    %v1752 = vunpack.c.h.b16 %v241
    %v1753 = vunpack.c.l.b16 %v242
    %v1754 = vunpack.c.l.b16 %v243
    %v1755 = vunpack.c.h.b16 %v243
    %v1756 = vunpack.c.l.b16 %v244
    %v1757 = vunpack.c.l.b16 %v245
    %v1758 = vunpack.c.h.b16 %v245
    %v1759 = vunpack.c.l.b16 %v246
    %v1760 = vunpack.c.l.b16 %v247
    %v1761 = vunpack.c.h.b16 %v247
    %v1762 = vunpack.c.l.b16 %v248
    %v1763 = vunpack.c.l.b16 %v249
    %v1764 = vunpack.c.h.b16 %v249
    %v1765 = vunpack.c.l.b16 %v250
    %v1766 = vunpack.c.l.b16 %v251
    %v1767 = vunpack.c.h.b16 %v251
    %v1768 = vunpack.c.l.b16 %v252
    %v1769 = vunpack.c.l.b16 %v253
    %v1770 = vunpack.c.h.b16 %v253
    %v1771 = vunpack.c.l.b16 %v254
    %v1772 = vunpack.c.l.b16 %v255
    %v1773 = vunpack.c.h.b16 %v255
    %v1774 = vunpack.c.l.b16 %v256
    %v1775 = vunpack.c.l.b16 %v257
    %v1776 = vunpack.c.h.b16 %v257
    %v1777 = vunpack.c.l.b16 %v258
    %v1778 = vunpack.c.l.b16 %v259
    %v1779 = vunpack.c.h.b16 %v259
    %v1780 = vunpack.c.l.b16 %v260
    %v1781 = vunpack.c.l.b16 %v261
    %v1782 = vunpack.c.h.b16 %v261
    %v1783 = vunpack.c.l.b16 %v262
    %v1784 = vunpack.c.l.b16 %v263
    %v1785 = vunpack.c.h.b16 %v263
    %v1786 = vunpack.c.l.b16 %v264
    %v1787 = vunpack.c.l.b16 %v265
    %v1788 = vunpack.c.h.b16 %v265
    %v1789 = vunpack.c.l.b16 %v266
    %v1790 = vunpack.c.l.b16 %v267
    %v1791 = vunpack.c.h.b16 %v267
    %v1792 = vunpack.c.l.b16 %v268
    %v1793 = vunpack.c.l.b16 %v269
    %v1794 = vunpack.c.h.b16 %v269
    %v1795 = vunpack.c.l.b16 %v270
    %v1796 = vunpack.c.l.b16 %v271
    %v1797 = vunpack.c.h.b16 %v271
    %v1798 = vunpack.c.l.b16 %v272
    %v1799 = vunpack.c.l.b16 %v273
    %v1800 = vunpack.c.h.b16 %v273
    %v1801 = vunpack.c.l.b16 %v274
    %v1802 = vunpack.c.l.b16 %v275
    %v1803 = vunpack.c.h.b16 %v275
    %v1804 = vunpack.c.l.b16 %v276
    %v1805 = vunpack.c.l.b16 %v277
    %v1806 = vunpack.c.h.b16 %v277
    %v1807 = vunpack.c.l.b16 %v278
    %v1808 = vunpack.c.l.b16 %v279
    %v1809 = vunpack.c.h.b16 %v279
    %v1810 = vunpack.c.l.b16 %v280
    %v1811 = vunpack.c.l.b16 %v281
    %v1812 = vunpack.c.h.b16 %v281
    %v1813 = vunpack.c.l.b16 %v282
    %v1814 = vunpack.c.l.b16 %v283
    %v1815 = vunpack.c.h.b16 %v283
    %v1816 = vunpack.c.l.b16 %v284
    %v1817 = vunpack.c.l.b16 %v285
    %v1818 = vunpack.c.h.b16 %v285
    %v1819 = vunpack.c.l.b16 %v286
    %v1820 = vunpack.c.l.b16 %v287
    %v1821 = vunpack.c.h.b16 %v287
    %v1822 = vunpack.c.l.b16 %v288
    %v1823 = vunpack.c.l.b16 %v289
    %v1824 = vunpack.c.h.b16 %v289
    %v1825 = vunpack.c.l.b16 %v290
    %v1826 = vunpack.c.l.b16 %v291
    %v1827 = vunpack.c.h.b16 %v291
    %v1828 = vunpack.c.l.b16 %v292
    %v1829 = vunpack.c.l.b16 %v293
    %v1830 = vunpack.c.h.b16 %v293
    %v1831 = vunpack.c.l.b16 %v294
    %v1832 = vunpack.c.l.b16 %v295
    %v1833 = vunpack.c.h.b16 %v295
    %v1834 = vunpack.c.l.b16 %v296
    %v1835 = vunpack.c.l.b16 %v297
    %v1836 = vunpack.c.h.b16 %v297
    %v1837 = vunpack.c.l.b16 %v298
    %v1838 = vunpack.c.l.b16 %v299
    %v1839 = vunpack.c.h.b16 %v299
    %v1840 = vunpack.c.l.b16 %v300
    %v1841 = vunpack.c.l.b16 %v301
    %v1842 = vunpack.c.h.b16 %v301
    %v1843 = vunpack.c.l.b16 %v302
    %v1844 = vunpack.c.l.b16 %v303
    %v1845 = vunpack.c.h.b16 %v303
    %v1846 = vunpack.c.l.b16 %v304
    %v1847 = vunpack.c.l.b16 %v305
    %v1848 = vunpack.c.h.b16 %v305
    %v1849 = vunpack.c.l.b16 %v306
    %v1850 = vunpack.c.l.b16 %v307
    %v1851 = vunpack.c.h.b16 %v307
    %v1852 = vunpack.c.l.b16 %v308
    %v1853 = vunpack.c.l.b16 %v309
    %v1854 = vunpack.c.h.b16 %v309
    %v1855 = vunpack.c.l.b16 %v310
    %v1856 = vunpack.c.l.b16 %v311
    %v1857 = vunpack.c.h.b16 %v311
    %v1858 = vunpack.c.l.b16 %v312
    %v1859 = vunpack.c.l.b16 %v313
    %v1860 = vunpack.c.h.b16 %v313
    %v1861 = vunpack.c.l.b16 %v314
    %v1862 = vunpack.c.l.b16 %v315
    %v1863 = vunpack.c.h.b16 %v315
    %v1864 = vunpack.c.l.b16 %v316
    %v1865 = vunpack.c.l.b16 %v317
    %v1866 = vunpack.c.h.b16 %v317
    %v1867 = vunpack.c.l.b16 %v318
    %v1868 = vunpack.c.l.b16 %v319
    %v1869 = vunpack.c.h.b16 %v319
    %v1870 = vunpack.c.l.b16 %v320
    %v1871 = vunpack.c.l.b16 %v321
    %v1872 = vunpack.c.h.b16 %v321
    %v1873 = vunpack.c.l.b16 %v322
    %v1874 = vunpack.c.l.b16 %v323
    %v1875 = vunpack.c.h.b16 %v323
    %v1876 = vunpack.c.l.b16 %v324
    %v1877 = vunpack.c.l.b16 %v325
    %v1878 = vunpack.c.h.b16 %v325
    %v1879 = vunpack.c.l.b16 %v326
    %v1880 = vunpack.c.l.b16 %v327
    %v1881 = vunpack.c.h.b16 %v327
    %v1882 = vunpack.c.l.b16 %v328
    %v1883 = vunpack.c.l.b16 %v329
    %v1884 = vunpack.c.h.b16 %v329
    %v1885 = vunpack.c.l.b16 %v330
    %v1886 = vunpack.c.l.b16 %v331
    %v1887 = vunpack.c.h.b16 %v331
    %v1888 = vunpack.c.l.b16 %v332
    %v1889 = vunpack.c.l.b16 %v333
    %v1890 = vunpack.c.h.b16 %v333
    %v1891 = vunpack.c.l.b16 %v334
    %v1892 = vunpack.c.l.b16 %v335
    %v1893 = vunpack.c.h.b16 %v335
    %v1894 = vunpack.c.l.b16 %v336
    %v1895 = vunpack.c.l.b16 %v337
    %v1896 = vunpack.c.h.b16 %v337
    %v1897 = vunpack.c.l.b16 %v338
    %v1898 = vunpack.c.l.b16 %v339
    %v1899 = vunpack.c.h.b16 %v339
    %v1900 = vunpack.c.l.b16 %v340
    %v1901 = vunpack.c.l.b16 %v341
    %v1902 = vunpack.c.h.b16 %v341
    %v1903 = vunpack.c.l.b16 %v342
    %v1904 = vunpack.c.l.b16 %v343
    %v1905 = vunpack.c.h.b16 %v343
    %v1906 = vunpack.c.l.b16 %v344
    %v1907 = vunpack.c.l.b16 %v345
    %v1908 = vunpack.c.h.b16 %v345
    %v1909 = vunpack.c.l.b16 %v346
    %v1910 = vunpack.c.l.b16 %v347
    %v1911 = vunpack.c.h.b16 %v347
    %v1912 = vunpack.c.l.b16 %v348
    %v1913 = vunpack.c.l.b16 %v349
    %v1914 = vunpack.c.h.b16 %v349
    %v1915 = vunpack.c.l.b16 %v350
    %v1916 = vunpack.c.l.b16 %v351
    %v1917 = vunpack.c.h.b16 %v351
    %v1918 = vunpack.c.l.b16 %v352
    %v1919 = vunpack.c.l.b16 %v353
    %v1920 = vunpack.c.h.b16 %v353
    %v1921 = vunpack.c.l.b16 %v354
    %v1922 = vunpack.c.l.b16 %v355
    %v1923 = vunpack.c.h.b16 %v355
    %v1924 = vunpack.c.l.b16 %v356
    %v1925 = vunpack.c.l.b16 %v357
    %v1926 = vunpack.c.h.b16 %v357
    %v1927 = vunpack.c.l.b16 %v358
    %v1928 = vunpack.c.l.b16 %v359
    %v1929 = vunpack.c.h.b16 %v359
    %v1930 = vunpack.c.l.b16 %v360
    %v1931 = vunpack.c.l.b16 %v361
    %v1932 = vunpack.c.h.b16 %v361
    %v1933 = vunpack.c.l.b16 %v362
    %v1934 = vunpack.c.l.b16 %v363
    %v1935 = vunpack.c.h.b16 %v363
    %v1936 = vunpack.c.l.b16 %v364
    %v1937 = vunpack.c.l.b16 %v365
    %v1938 = vunpack.c.h.b16 %v365
    %v1939 = vunpack.c.l.b16 %v366
    %v1940 = vunpack.c.l.b16 %v367
    %v1941 = vunpack.c.h.b16 %v367
    %v1942 = vunpack.c.l.b16 %v368
    %v1943 = vunpack.c.l.b16 %v369
    %v1944 = vunpack.c.h.b16 %v369
    %v1945 = vunpack.c.l.b16 %v370
    %v1946 = vunpack.c.l.b16 %v371
    %v1947 = vunpack.c.h.b16 %v371
    %v1948 = vunpack.c.l.b16 %v372
    %v1949 = vunpack.c.l.b16 %v373
    %v1950 = vunpack.c.h.b16 %v373
    %v1951 = vunpack.c.l.b16 %v374
    %v1952 = vunpack.c.l.b16 %v375
    %v1953 = vunpack.c.h.b16 %v375
    %v1954 = vunpack.c.l.b16 %v376
    %v1955 = vunpack.c.l.b16 %v377
    %v1956 = vunpack.c.h.b16 %v377
    %v1957 = vunpack.c.l.b16 %v378
    %v1958 = vunpack.c.l.b16 %v379
    %v1959 = vunpack.c.h.b16 %v379
    %v1960 = vunpack.c.l.b16 %v380
    %v1961 = vunpack.c.l.b16 %v381
    %v1962 = vunpack.c.h.b16 %v381
    %v1963 = vunpack.c.l.b16 %v382
    %v1964 = vunpack.c.l.b16 %v383
    %v1965 = vunpack.c.h.b16 %v383
    %v1966 = vunpack.c.l.b16 %v384
    %v1967 = vunpack.c.l.b16 %v385
    %v1968 = vunpack.c.h.b16 %v385
    %v1969 = vunpack.c.l.b16 %v386
    %v1970 = vunpack.c.l.b16 %v387
    %v1971 = vunpack.c.h.b16 %v387
    %v1972 = vunpack.c.l.b16 %v388
    %v1973 = vunpack.c.l.b16 %v389
    %v1974 = vunpack.c.h.b16 %v389
    %v1975 = vunpack.c.l.b16 %v390
    %v1976 = vunpack.c.l.b16 %v391
    %v1977 = vunpack.c.h.b16 %v391
    %v1978 = vunpack.c.l.b16 %v392
    %v1979 = vunpack.c.l.b16 %v393
    %v1980 = vunpack.c.h.b16 %v393
    %v1981 = vunpack.c.l.b16 %v394
    %v1982 = vunpack.c.l.b16 %v395
    %v1983 = vunpack.c.h.b16 %v395
    %v1984 = vunpack.c.l.b16 %v396
    %v1985 = vunpack.c.l.b16 %v397
    %v1986 = vunpack.c.h.b16 %v397
    %v1987 = vunpack.c.l.b16 %v398
    %v1988 = vunpack.c.l.b16 %v399
    %v1989 = vunpack.c.h.b16 %v399
    %v1990 = vunpack.c.l.b16 %v400
    %v1991 = vunpack.c.l.b16 %v401
    %v1992 = vunpack.c.h.b16 %v401
    %v1993 = vunpack.c.l.b16 %v402
    %v1994 = vunpack.c.l.b16 %v403
    %v1995 = vunpack.c.h.b16 %v403
    %v1996 = vunpack.c.l.b16 %v404
    %v1997 = vunpack.c.l.b16 %v405
    %v1998 = vunpack.c.h.b16 %v405
    %v1999 = vunpack.c.l.b16 %v406
    %v2000 = vunpack.c.l.b16 %v407
    %v2001 = vunpack.c.h.b16 %v407
    %v2002 = vunpack.c.l.b16 %v408
    %v2003 = vunpack.c.l.b16 %v409
    %v2004 = vunpack.c.h.b16 %v409
    %v2005 = vunpack.c.l.b16 %v410
    %v2006 = vunpack.c.l.b16 %v411
    %v2007 = vunpack.c.h.b16 %v411
    %v2008 = vunpack.c.l.b16 %v412
    %v2009 = vunpack.c.l.b16 %v413
    %v2010 = vunpack.c.h.b16 %v413
    %v2011 = vunpack.c.l.b16 %v414
    %v2012 = vunpack.c.l.b16 %v415
    %v2013 = vunpack.c.h.b16 %v415
    %v2014 = vunpack.c.l.b16 %v416
    %v2015 = vunpack.c.l.b16 %v417
    %v2016 = vunpack.c.h.b16 %v417
    %v2017 = vunpack.c.l.b16 %v418
    %v2018 = vunpack.c.l.b16 %v419
    %v2019 = vunpack.c.h.b16 %v419
    %v2020 = vunpack.c.l.b16 %v420
    %v2021 = vunpack.c.l.b16 %v421
    %v2022 = vunpack.c.h.b16 %v421
    %v2023 = vunpack.c.l.b16 %v422
    %v2024 = vunpack.c.l.b16 %v423
    %v2025 = vunpack.c.h.b16 %v423
    %v2026 = vunpack.c.l.b16 %v424
    %v2027 = vunpack.c.l.b16 %v425
    %v2028 = vunpack.c.h.b16 %v425
    %v2029 = vunpack.c.l.b16 %v426
    %v2030 = vunpack.c.l.b16 %v427
    %v2031 = vunpack.c.h.b16 %v427
    %v2032 = vunpack.c.l.b16 %v428
    %v2033 = vunpack.c.l.b16 %v429
    %v2034 = vunpack.c.h.b16 %v429
    %v2035 = vunpack.c.l.b16 %v430
    %v2036 = vunpack.c.l.b16 %v431
    %v2037 = vunpack.c.h.b16 %v431
    %v2038 = vunpack.c.l.b16 %v432
    %v2039 = vunpack.c.l.b16 %v433
    %v2040 = vunpack.c.h.b16 %v433
    %v2041 = vunpack.c.l.b16 %v434
    %v2042 = vunpack.c.l.b16 %v435
    %v2043 = vunpack.c.h.b16 %v435
    %v2044 = vunpack.c.l.b16 %v436
    %v2045 = vunpack.c.l.b16 %v437
    %v2046 = vunpack.c.h.b16 %v437
    %v2047 = vunpack.c.l.b16 %v438
    %v2048 = vunpack.c.l.b16 %v439
    %v2049 = vunpack.c.h.b16 %v439
    %v2050 = vunpack.c.l.b16 %v440
    %v2051 = vunpack.c.l.b16 %v441
    %v2052 = vunpack.c.h.b16 %v441
    %v2053 = vunpack.c.l.b16 %v442
    %v2054 = vunpack.c.l.b16 %v443
    %v2055 = vunpack.c.h.b16 %v443
    %v2056 = vunpack.c.l.b16 %v444
    %v2057 = vunpack.c.l.b16 %v445
    %v2058 = vunpack.c.h.b16 %v445
    %v2059 = vunpack.c.l.b16 %v446
    %v2060 = vunpack.c.l.b16 %v447
    %v2061 = vunpack.c.h.b16 %v447
    %v2062 = vunpack.c.l.b16 %v448
    %v2063 = vunpack.c.l.b16 %v449
    %v2064 = vunpack.c.h.b16 %v449
    %v2065 = vunpack.c.l.b16 %v450
    %v2066 = vunpack.c.l.b16 %v451
    %v2067 = vunpack.c.h.b16 %v451
    %v2068 = vunpack.c.l.b16 %v452
    %v2069 = vunpack.c.l.b16 %v453
    %v2070 = vunpack.c.h.b16 %v453
    %v2071 = vunpack.c.l.b16 %v454
    %v2072 = vunpack.c.l.b16 %v455
    %v2073 = vunpack.c.h.b16 %v455
    %v2074 = vunpack.c.l.b16 %v456
    %v2075 = vunpack.c.l.b16 %v457
    %v2076 = vunpack.c.h.b16 %v457
    %v2077 = vunpack.c.l.b16 %v458
    %v2078 = vunpack.c.l.b16 %v459
    %v2079 = vunpack.c.h.b16 %v459
    %v2080 = vunpack.c.l.b16 %v460
    %v2081 = vunpack.c.l.b16 %v461
    %v2082 = vunpack.c.h.b16 %v461
    %v2083 = vunpack.c.l.b16 %v462
    %v2084 = vunpack.c.l.b16 %v463
    %v2085 = vunpack.c.h.b16 %v463
    %v2086 = vunpack.c.l.b16 %v464
    %v2087 = vunpack.c.l.b16 %v465
    %v2088 = vunpack.c.h.b16 %v465
    %v2089 = vunpack.c.l.b16 %v466
    %v2090 = vunpack.c.l.b16 %v467
    %v2091 = vunpack.c.h.b16 %v467
    %v2092 = vunpack.c.l.b16 %v468
    %v2093 = vunpack.c.l.b16 %v469
    %v2094 = vunpack.c.h.b16 %v469
    %v2095 = vunpack.c.l.b16 %v470
    %v2096 = vunpack.c.l.b16 %v471
    %v2097 = vunpack.c.h.b16 %v471
    %v2098 = vunpack.c.l.b16 %v472
    %v2099 = vunpack.c.l.b16 %v473
    %v2100 = vunpack.c.h.b16 %v473
    %v2101 = vunpack.c.l.b16 %v474
    %v2102 = vunpack.c.l.b16 %v475
    %v2103 = vunpack.c.h.b16 %v475
    %v2104 = vunpack.c.l.b16 %v476
    %v2105 = vunpack.c.l.b16 %v477
    %v2106 = vunpack.c.h.b16 %v477
    %v2107 = vunpack.c.l.b16 %v478
    %v2108 = vunpack.c.l.b16 %v479
    %v2109 = vunpack.c.h.b16 %v479
    %v2110 = vunpack.c.l.b16 %v480
    %v2111 = vunpack.c.l.b16 %v481
    %v2112 = vunpack.c.h.b16 %v481
    %v2113 = vunpack.c.l.b16 %v482
    %v2114 = vunpack.c.l.b16 %v483
    %v2115 = vunpack.c.h.b16 %v483
    %v2116 = vunpack.c.l.b16 %v484
    %v2117 = vunpack.c.l.b16 %v485
    %v2118 = vunpack.c.h.b16 %v485
    %v2119 = vunpack.c.l.b16 %v486
    %v2120 = vunpack.c.l.b16 %v487
    %v2121 = vunpack.c.h.b16 %v487
    %v2122 = vunpack.c.l.b16 %v488
    %v2123 = vunpack.c.l.b16 %v489
    %v2124 = vunpack.c.h.b16 %v489
    %v2125 = vunpack.c.l.b16 %v490
    %v2126 = vunpack.c.l.b16 %v491
    %v2127 = vunpack.c.h.b16 %v491
    %v2128 = vunpack.c.l.b16 %v492
    %v2129 = vunpack.c.l.b16 %v493
    %v2130 = vunpack.c.h.b16 %v493
    %v2131 = vunpack.c.l.b16 %v494
    %v2132 = vunpack.c.l.b16 %v495
    %v2133 = vunpack.c.h.b16 %v495
    %v2134 = vunpack.c.l.b16 %v496
    %v2135 = vunpack.c.l.b16 %v497
    %v2136 = vunpack.c.h.b16 %v497
    %v2137 = vunpack.c.l.b16 %v498
    %v2138 = vunpack.c.l.b16 %v499
    %v2139 = vunpack.c.h.b16 %v499
    %v2140 = vunpack.c.l.b16 %v500
    %v2141 = vunpack.c.l.b16 %v501
    %v2142 = vunpack.c.h.b16 %v501
    %v2143 = vunpack.c.l.b16 %v502
    %v2144 = vunpack.c.l.b16 %v503
    %v2145 = vunpack.c.h.b16 %v503
    %v2146 = vunpack.c.l.b16 %v504
    %v2147 = vunpack.c.l.b16 %v505
    %v2148 = vunpack.c.h.b16 %v505
    %v2149 = vunpack.c.l.b16 %v506
    %v2150 = vunpack.c.l.b16 %v507
    %v2151 = vunpack.c.h.b16 %v507
    %v2152 = vunpack.c.l.b16 %v508
    %v2153 = vunpack.c.l.b16 %v509
    %v2154 = vunpack.c.h.b16 %v509
    %v2155 = vunpack.c.l.b16 %v510
    %v2156 = vunpack.c.l.b16 %v511
    %v2157 = vunpack.c.h.b16 %v511
    %v2158 = vunpack.c.l.b16 %v512
    %v2159 = vunpack.c.l.b16 %v513
    %v2160 = vunpack.c.h.b16 %v513
    %v2161 = vunpack.c.l.b16 %v514
    %v2162 = vunpack.c.l.b16 %v515
    %v2163 = vunpack.c.h.b16 %v515
    %v2164 = vunpack.c.l.b16 %v516
    %v2165 = vunpack.c.l.b16 %v517
    %v2166 = vunpack.c.h.b16 %v517
    %v2167 = vunpack.c.l.b16 %v518
    %v2168 = vunpack.c.l.b16 %v519
    %v2169 = vunpack.c.h.b16 %v519
    %v2170 = vunpack.c.l.b16 %v520
    %v2171 = vunpack.c.l.b16 %v521
    %v2172 = vunpack.c.h.b16 %v521
    %v2173 = vunpack.c.l.b16 %v522
    %v2174 = vunpack.c.l.b16 %v523
    %v2175 = vunpack.c.h.b16 %v523
    %v2176 = vunpack.c.l.b16 %v524
    %v2177 = vunpack.c.l.b16 %v525
    %v2178 = vunpack.c.h.b16 %v525
    %v2179 = vunpack.c.l.b16 %v526
    %v2180 = vunpack.c.l.b16 %v527
    %v2181 = vunpack.c.h.b16 %v527
    %v2182 = vunpack.c.l.b16 %v528
    %v2183 = vunpack.c.l.b16 %v529
    %v2184 = vunpack.c.h.b16 %v529
    %v2185 = vunpack.c.l.b16 %v530
    %v2186 = vunpack.c.l.b16 %v531
    %v2187 = vunpack.c.h.b16 %v531
    %v2188 = vunpack.c.l.b16 %v532
    %v2189 = vunpack.c.l.b16 %v533
    %v2190 = vunpack.c.h.b16 %v533
    %v2191 = vunpack.c.l.b16 %v534
    %v2192 = vunpack.c.l.b16 %v535
    %v2193 = vunpack.c.h.b16 %v535
    %v2194 = vunpack.c.l.b16 %v536
    %v2195 = vunpack.c.l.b16 %v537
    %v2196 = vunpack.c.h.b16 %v537
    %v2197 = vunpack.c.l.b16 %v538
    %v2198 = vunpack.c.l.b16 %v539
    %v2199 = vunpack.c.h.b16 %v539
    %v2200 = vunpack.c.l.b16 %v540
    %v2201 = vunpack.c.l.b16 %v541
    %v2202 = vunpack.c.h.b16 %v541
    %v2203 = vunpack.c.l.b16 %v542
    %v2204 = vunpack.c.l.b16 %v543
    %v2205 = vunpack.c.h.b16 %v543
    %v2206 = vunpack.c.l.b16 %v544
    %v2207 = vunpack.c.l.b16 %v545
    %v2208 = vunpack.c.h.b16 %v545
    %v2209 = vunpack.c.l.b16 %v546
    %v2210 = vunpack.c.l.b16 %v547
    %v2211 = vunpack.c.h.b16 %v547
    %v2212 = vunpack.c.l.b16 %v548
    %v2213 = vunpack.c.l.b16 %v549
    %v2214 = vunpack.c.h.b16 %v549
    %v2215 = vunpack.c.l.b16 %v550
    %v2216 = vunpack.c.l.b16 %v551
    %v2217 = vunpack.c.h.b16 %v551
    %v2218 = vunpack.c.l.b16 %v552
    %v2219 = vunpack.c.l.b16 %v553
    %v2220 = vunpack.c.h.b16 %v553
    %v2221 = vunpack.c.l.b16 %v554
    %v2222 = vunpack.c.l.b16 %v555
    %v2223 = vunpack.c.h.b16 %v555
    %v2224 = vunpack.c.l.b16 %v556
    %v2225 = vunpack.c.l.b16 %v557
    %v2226 = vunpack.c.h.b16 %v557
    %v2227 = vunpack.c.l.b16 %v558
    %v2228 = vunpack.c.l.b16 %v559
    %v2229 = vunpack.c.h.b16 %v559
    %v2230 = vunpack.c.l.b16 %v560
    %v2231 = vunpack.c.l.b16 %v561
    %v2232 = vunpack.c.h.b16 %v561
    %v2233 = vunpack.c.l.b16 %v562
    %v2234 = vunpack.c.l.b16 %v563
    %v2235 = vunpack.c.h.b16 %v563
    %v2236 = vunpack.c.l.b16 %v564
    %v2237 = vunpack.c.l.b16 %v565
    %v2238 = vunpack.c.h.b16 %v565
    %v2239 = vunpack.c.l.b16 %v566
    %v2240 = vunpack.c.l.b16 %v567
    %v2241 = vunpack.c.h.b16 %v567
    %v2242 = vunpack.c.l.b16 %v568
    %v2243 = vunpack.c.l.b16 %v569
    %v2244 = vunpack.c.h.b16 %v569
    %v2245 = vunpack.c.l.b16 %v570
    %v2246 = vunpack.c.l.b16 %v571
    %v2247 = vunpack.c.h.b16 %v571
    %v2248 = vunpack.c.l.b16 %v572
    %v2249 = vunpack.c.l.b16 %v573
    %v2250 = vunpack.c.h.b16 %v573
    %v2251 = vunpack.c.l.b16 %v574
    %v2252 = vunpack.c.l.b16 %v575
    %v2253 = vunpack.c.h.b16 %v575
    %v2254 = vunpack.c.l.b16 %v576
    %v2255 = vunpack.c.l.b16 %v577
    %v2256 = vunpack.c.h.b16 %v577
    %v2257 = vunpack.c.l.b16 %v578
    %v2258 = vunpack.c.l.b16 %v579
    %v2259 = vunpack.c.h.b16 %v579
    %v2260 = vunpack.c.l.b16 %v580
    %v2261 = vunpack.c.l.b16 %v581
    %v2262 = vunpack.c.h.b16 %v581
    %v2263 = vunpack.c.l.b16 %v582
    %v2264 = vunpack.c.l.b16 %v583
    %v2265 = vunpack.c.h.b16 %v583
    %v2266 = vunpack.c.l.b16 %v584
    %v2267 = vunpack.c.l.b16 %v585
    %v2268 = vunpack.c.h.b16 %v585
    %v2269 = vunpack.c.l.b16 %v586
    %v2270 = vunpack.c.l.b16 %v587
    %v2271 = vunpack.c.h.b16 %v587
    %v2272 = vunpack.c.l.b16 %v588
    %v2273 = vunpack.c.l.b16 %v589
    %v2274 = vunpack.c.h.b16 %v589
    %v2275 = vunpack.c.l.b16 %v590
    %v2276 = vunpack.c.l.b16 %v591
    %v2277 = vunpack.c.h.b16 %v591
    %v2278 = vunpack.c.l.b16 %v592
    %v2279 = vunpack.c.l.b16 %v593
    %v2280 = vunpack.c.h.b16 %v593
    %v2281 = vunpack.c.l.b16 %v594
    %v2282 = vunpack.c.l.b16 %v595
    %v2283 = vunpack.c.h.b16 %v595
    %v2284 = vunpack.c.l.b16 %v596
    %v2285 = vunpack.c.l.b16 %v597
    %v2286 = vunpack.c.h.b16 %v597
    %v2287 = vunpack.c.l.b16 %v598
    %v2288 = vunpack.c.l.b16 %v599
    %v2289 = vunpack.c.h.b16 %v599
    %v2290 = vunpack.c.l.b16 %v600
    %v2291 = vunpack.c.l.b16 %v601
    %v2292 = vunpack.c.h.b16 %v601
    %v2293 = vunpack.c.l.b16 %v602
    %v2294 = vunpack.c.l.b16 %v603
    %v2295 = vunpack.c.h.b16 %v603
    %v2296 = vunpack.c.l.b16 %v604
    %v2297 = vunpack.c.l.b16 %v605
    %v2298 = vunpack.c.h.b16 %v605
    %v2299 = vunpack.c.l.b16 %v606
    %v2300 = vunpack.c.l.b16 %v607
    %v2301 = vunpack.c.h.b16 %v607
    %v2302 = vunpack.c.l.b16 %v608
    %v2303 = vunpack.c.l.b16 %v609
    %v2304 = vunpack.c.h.b16 %v609
    %v2305 = vunpack.c.l.b16 %v610
    %v2306 = vunpack.c.l.b16 %v611
    %v2307 = vunpack.c.h.b16 %v611
    %v2308 = vunpack.c.l.b16 %v612
    %v2309 = vunpack.c.l.b16 %v613
    %v2310 = vunpack.c.h.b16 %v613
    %v2311 = vunpack.c.l.b16 %v614
    %v2312 = vpack.c.b16 %v1643, %v1640
    %v2313 = vpack.c.b16 %v1644, %v1641
    %v2314 = vpack.c.b16 %v1645, %v1642
    %v2315 = vpack.c.b16 %v1649, %v1646
    %v2316 = vpack.c.b16 %v1650, %v1647
    %v2317 = vpack.c.b16 %v1651, %v1648
    %v2318 = vpack.c.b16 %v1655, %v1652
    %v2319 = vpack.c.b16 %v1656, %v1653
    %v2320 = vpack.c.b16 %v1657, %v1654
    %v2321 = vpack.c.b16 %v1661, %v1658
    %v2322 = vpack.c.b16 %v1662, %v1659
    %v2323 = vpack.c.b16 %v1663, %v1660
    %v2324 = vpack.c.b16 %v1667, %v1664
    %v2325 = vpack.c.b16 %v1668, %v1665
    %v2326 = vpack.c.b16 %v1669, %v1666
    %v2327 = vpack.c.b16 %v1673, %v1670
    %v2328 = vpack.c.b16 %v1674, %v1671
    %v2329 = vpack.c.b16 %v1675, %v1672
    %v2330 = vpack.c.b16 %v1679, %v1676
    %v2331 = vpack.c.b16 %v1680, %v1677
    %v2332 = vpack.c.b16 %v1681, %v1678
    %v2333 = vpack.c.b16 %v1685, %v1682
    %v2334 = vpack.c.b16 %v1686, %v1683
    %v2335 = vpack.c.b16 %v1687, %v1684
    %v2336 = vpack.c.b16 %v1691, %v1688
    %v2337 = vpack.c.b16 %v1692, %v1689
    %v2338 = vpack.c.b16 %v1693, %v1690
    %v2339 = vpack.c.b16 %v1697, %v1694
    %v2340 = vpack.c.b16 %v1698, %v1695
    %v2341 = vpack.c.b16 %v1699, %v1696
    %v2342 = vpack.c.b16 %v1703, %v1700
    %v2343 = vpack.c.b16 %v1704, %v1701
    %v2344 = vpack.c.b16 %v1705, %v1702
    %v2345 = vpack.c.b16 %v1709, %v1706
    %v2346 = vpack.c.b16 %v1710, %v1707
    %v2347 = vpack.c.b16 %v1711, %v1708
    %v2348 = vpack.c.b16 %v1715, %v1712
    %v2349 = vpack.c.b16 %v1716, %v1713
    %v2350 = vpack.c.b16 %v1717, %v1714
    %v2351 = vpack.c.b16 %v1721, %v1718
    %v2352 = vpack.c.b16 %v1722, %v1719
    %v2353 = vpack.c.b16 %v1723, %v1720
    %v2354 = vpack.c.b16 %v1727, %v1724
    %v2355 = vpack.c.b16 %v1728, %v1725
    %v2356 = vpack.c.b16 %v1729, %v1726
    %v2357 = vpack.c.b16 %v1733, %v1730
    %v2358 = vpack.c.b16 %v1734, %v1731
    %v2359 = vpack.c.b16 %v1735, %v1732
    %v2360 = vpack.c.b16 %v1739, %v1736
    %v2361 = vpack.c.b16 %v1740, %v1737
    %v2362 = vpack.c.b16 %v1741, %v1738
    %v2363 = vpack.c.b16 %v1745, %v1742
    %v2364 = vpack.c.b16 %v1746, %v1743
    %v2365 = vpack.c.b16 %v1747, %v1744
    %v2366 = vpack.c.b16 %v1751, %v1748
    %v2367 = vpack.c.b16 %v1752, %v1749
    %v2368 = vpack.c.b16 %v1753, %v1750
    %v2369 = vpack.c.b16 %v1757, %v1754
    %v2370 = vpack.c.b16 %v1758, %v1755
    %v2371 = vpack.c.b16 %v1759, %v1756
    %v2372 = vpack.c.b16 %v1763, %v1760
    %v2373 = vpack.c.b16 %v1764, %v1761
    %v2374 = vpack.c.b16 %v1765, %v1762
    %v2375 = vpack.c.b16 %v1769, %v1766
    %v2376 = vpack.c.b16 %v1770, %v1767
    %v2377 = vpack.c.b16 %v1771, %v1768
    %v2378 = vpack.c.b16 %v1775, %v1772
    %v2379 = vpack.c.b16 %v1776, %v1773
    %v2380 = vpack.c.b16 %v1777, %v1774
    %v2381 = vpack.c.b16 %v1781, %v1778
    %v2382 = vpack.c.b16 %v1782, %v1779
    %v2383 = vpack.c.b16 %v1783, %v1780
    %v2384 = vpack.c.b16 %v1787, %v1784
    %v2385 = vpack.c.b16 %v1788, %v1785
    %v2386 = vpack.c.b16 %v1789, %v1786
    %v2387 = vpack.c.b16 %v1793, %v1790
    %v2388 = vpack.c.b16 %v1794, %v1791
    %v2389 = vpack.c.b16 %v1795, %v1792
    %v2390 = vpack.c.b16 %v1799, %v1796
    %v2391 = vpack.c.b16 %v1800, %v1797
    %v2392 = vpack.c.b16 %v1801, %v1798
    %v2393 = vpack.c.b16 %v1805, %v1802
    %v2394 = vpack.c.b16 %v1806, %v1803
    %v2395 = vpack.c.b16 %v1807, %v1804
    %v2396 = vpack.c.b16 %v1811, %v1808
    %v2397 = vpack.c.b16 %v1812, %v1809
    %v2398 = vpack.c.b16 %v1813, %v1810
    %v2399 = vpack.c.b16 %v1817, %v1814
    %v2400 = vpack.c.b16 %v1818, %v1815
    %v2401 = vpack.c.b16 %v1819, %v1816
    %v2402 = vpack.c.b16 %v1823, %v1820
    %v2403 = vpack.c.b16 %v1824, %v1821
    %v2404 = vpack.c.b16 %v1825, %v1822
    %v2405 = vpack.c.b16 %v1829, %v1826
    %v2406 = vpack.c.b16 %v1830, %v1827
    %v2407 = vpack.c.b16 %v1831, %v1828
    %v2408 = vpack.c.b16 %v1835, %v1832
    %v2409 = vpack.c.b16 %v1836, %v1833
    %v2410 = vpack.c.b16 %v1837, %v1834
    %v2411 = vpack.c.b16 %v1841, %v1838
    %v2412 = vpack.c.b16 %v1842, %v1839
    %v2413 = vpack.c.b16 %v1843, %v1840
    %v2414 = vpack.c.b16 %v1847, %v1844
    %v2415 = vpack.c.b16 %v1848, %v1845
    %v2416 = vpack.c.b16 %v1849, %v1846
    %v2417 = vpack.c.b16 %v1853, %v1850
    %v2418 = vpack.c.b16 %v1854, %v1851
    %v2419 = vpack.c.b16 %v1855, %v1852
    %v2420 = vpack.c.b16 %v1859, %v1856
    %v2421 = vpack.c.b16 %v1860, %v1857
    %v2422 = vpack.c.b16 %v1861, %v1858
    %v2423 = vpack.c.b16 %v1865, %v1862
    %v2424 = vpack.c.b16 %v1866, %v1863
    %v2425 = vpack.c.b16 %v1867, %v1864
    %v2426 = vpack.c.b16 %v1871, %v1868
    %v2427 = vpack.c.b16 %v1872, %v1869
    %v2428 = vpack.c.b16 %v1873, %v1870
    %v2429 = vpack.c.b16 %v1877, %v1874
    %v2430 = vpack.c.b16 %v1878, %v1875
    %v2431 = vpack.c.b16 %v1879, %v1876
    %v2432 = vpack.c.b16 %v1883, %v1880
    %v2433 = vpack.c.b16 %v1884, %v1881
    %v2434 = vpack.c.b16 %v1885, %v1882
    %v2435 = vpack.c.b16 %v1889, %v1886
    %v2436 = vpack.c.b16 %v1890, %v1887
    %v2437 = vpack.c.b16 %v1891, %v1888
    %v2438 = vpack.c.b16 %v1895, %v1892
    %v2439 = vpack.c.b16 %v1896, %v1893
    %v2440 = vpack.c.b16 %v1897, %v1894
    %v2441 = vpack.c.b16 %v1901, %v1898
    %v2442 = vpack.c.b16 %v1902, %v1899
    %v2443 = vpack.c.b16 %v1903, %v1900
    %v2444 = vpack.c.b16 %v1907, %v1904
    %v2445 = vpack.c.b16 %v1908, %v1905
    %v2446 = vpack.c.b16 %v1909, %v1906
    %v2447 = vpack.c.b16 %v1913, %v1910
    %v2448 = vpack.c.b16 %v1914, %v1911
    %v2449 = vpack.c.b16 %v1915, %v1912
    %v2450 = vpack.c.b16 %v1919, %v1916
    %v2451 = vpack.c.b16 %v1920, %v1917
    %v2452 = vpack.c.b16 %v1921, %v1918
    %v2453 = vpack.c.b16 %v1925, %v1922
    %v2454 = vpack.c.b16 %v1926, %v1923
    %v2455 = vpack.c.b16 %v1927, %v1924
    %v2456 = vpack.c.b16 %v1931, %v1928
    %v2457 = vpack.c.b16 %v1932, %v1929
    %v2458 = vpack.c.b16 %v1933, %v1930
    %v2459 = vpack.c.b16 %v1937, %v1934
    %v2460 = vpack.c.b16 %v1938, %v1935
    %v2461 = vpack.c.b16 %v1939, %v1936
    %v2462 = vpack.c.b16 %v1943, %v1940
    %v2463 = vpack.c.b16 %v1944, %v1941
    %v2464 = vpack.c.b16 %v1945, %v1942
    %v2465 = vpack.c.b16 %v1949, %v1946
    %v2466 = vpack.c.b16 %v1950, %v1947
    %v2467 = vpack.c.b16 %v1951, %v1948
    %v2468 = vpack.c.b16 %v1955, %v1952
    %v2469 = vpack.c.b16 %v1956, %v1953
    %v2470 = vpack.c.b16 %v1957, %v1954
    %v2471 = vpack.c.b16 %v1961, %v1958
    %v2472 = vpack.c.b16 %v1962, %v1959
    %v2473 = vpack.c.b16 %v1963, %v1960
    %v2474 = vpack.c.b16 %v1967, %v1964
    %v2475 = vpack.c.b16 %v1968, %v1965
    %v2476 = vpack.c.b16 %v1969, %v1966
    %v2477 = vpack.c.b16 %v1973, %v1970
    %v2478 = vpack.c.b16 %v1974, %v1971
    %v2479 = vpack.c.b16 %v1975, %v1972
    %v2480 = vpack.c.b16 %v1979, %v1976
    %v2481 = vpack.c.b16 %v1980, %v1977
    %v2482 = vpack.c.b16 %v1981, %v1978
    %v2483 = vpack.c.b16 %v1985, %v1982
    %v2484 = vpack.c.b16 %v1986, %v1983
    %v2485 = vpack.c.b16 %v1987, %v1984
    %v2486 = vpack.c.b16 %v1991, %v1988
    %v2487 = vpack.c.b16 %v1992, %v1989
    %v2488 = vpack.c.b16 %v1993, %v1990
    %v2489 = vpack.c.b16 %v1997, %v1994
    %v2490 = vpack.c.b16 %v1998, %v1995
    %v2491 = vpack.c.b16 %v1999, %v1996
    %v2492 = vpack.c.b16 %v2003, %v2000
    %v2493 = vpack.c.b16 %v2004, %v2001
    %v2494 = vpack.c.b16 %v2005, %v2002
    %v2495 = vpack.c.b16 %v2009, %v2006
    %v2496 = vpack.c.b16 %v2010, %v2007
    %v2497 = vpack.c.b16 %v2011, %v2008
    %v2498 = vpack.c.b16 %v2015, %v2012
    %v2499 = vpack.c.b16 %v2016, %v2013
    %v2500 = vpack.c.b16 %v2017, %v2014
    %v2501 = vpack.c.b16 %v2021, %v2018
    %v2502 = vpack.c.b16 %v2022, %v2019
    %v2503 = vpack.c.b16 %v2023, %v2020
    %v2504 = vpack.c.b16 %v2027, %v2024
    %v2505 = vpack.c.b16 %v2028, %v2025
    %v2506 = vpack.c.b16 %v2029, %v2026
    %v2507 = vpack.c.b16 %v2033, %v2030
    %v2508 = vpack.c.b16 %v2034, %v2031
    %v2509 = vpack.c.b16 %v2035, %v2032
    %v2510 = vpack.c.b16 %v2039, %v2036
    %v2511 = vpack.c.b16 %v2040, %v2037
    %v2512 = vpack.c.b16 %v2041, %v2038
    %v2513 = vpack.c.b16 %v2045, %v2042
    %v2514 = vpack.c.b16 %v2046, %v2043
    %v2515 = vpack.c.b16 %v2047, %v2044
    %v2516 = vpack.c.b16 %v2051, %v2048
    %v2517 = vpack.c.b16 %v2052, %v2049
    %v2518 = vpack.c.b16 %v2053, %v2050
    %v2519 = vpack.c.b16 %v2057, %v2054
    %v2520 = vpack.c.b16 %v2058, %v2055
    %v2521 = vpack.c.b16 %v2059, %v2056
    %v2522 = vpack.c.b16 %v2063, %v2060
    %v2523 = vpack.c.b16 %v2064, %v2061
    %v2524 = vpack.c.b16 %v2065, %v2062
    %v2525 = vpack.c.b16 %v2069, %v2066
    %v2526 = vpack.c.b16 %v2070, %v2067
    %v2527 = vpack.c.b16 %v2071, %v2068
    %v2528 = vpack.c.b16 %v2075, %v2072
    %v2529 = vpack.c.b16 %v2076, %v2073
    %v2530 = vpack.c.b16 %v2077, %v2074
    %v2531 = vpack.c.b16 %v2081, %v2078
    %v2532 = vpack.c.b16 %v2082, %v2079
    %v2533 = vpack.c.b16 %v2083, %v2080
    %v2534 = vpack.c.b16 %v2087, %v2084
    %v2535 = vpack.c.b16 %v2088, %v2085
    %v2536 = vpack.c.b16 %v2089, %v2086
    %v2537 = vpack.c.b16 %v2093, %v2090
    %v2538 = vpack.c.b16 %v2094, %v2091
    %v2539 = vpack.c.b16 %v2095, %v2092
    %v2540 = vpack.c.b16 %v2099, %v2096
    %v2541 = vpack.c.b16 %v2100, %v2097
    %v2542 = vpack.c.b16 %v2101, %v2098
    %v2543 = vpack.c.b16 %v2105, %v2102
    %v2544 = vpack.c.b16 %v2106, %v2103
    %v2545 = vpack.c.b16 %v2107, %v2104
    %v2546 = vpack.c.b16 %v2111, %v2108
    %v2547 = vpack.c.b16 %v2112, %v2109
    %v2548 = vpack.c.b16 %v2113, %v2110
    %v2549 = vpack.c.b16 %v2117, %v2114
    %v2550 = vpack.c.b16 %v2118, %v2115
    %v2551 = vpack.c.b16 %v2119, %v2116
    %v2552 = vpack.c.b16 %v2123, %v2120
    %v2553 = vpack.c.b16 %v2124, %v2121
    %v2554 = vpack.c.b16 %v2125, %v2122
    %v2555 = vpack.c.b16 %v2129, %v2126
    %v2556 = vpack.c.b16 %v2130, %v2127
    %v2557 = vpack.c.b16 %v2131, %v2128
    %v2558 = vpack.c.b16 %v2135, %v2132
    %v2559 = vpack.c.b16 %v2136, %v2133
    %v2560 = vpack.c.b16 %v2137, %v2134
    %v2561 = vpack.c.b16 %v2141, %v2138
    %v2562 = vpack.c.b16 %v2142, %v2139
    %v2563 = vpack.c.b16 %v2143, %v2140
    %v2564 = vpack.c.b16 %v2147, %v2144
    %v2565 = vpack.c.b16 %v2148, %v2145
    %v2566 = vpack.c.b16 %v2149, %v2146
    %v2567 = vpack.c.b16 %v2153, %v2150
    %v2568 = vpack.c.b16 %v2154, %v2151
    %v2569 = vpack.c.b16 %v2155, %v2152
    %v2570 = vpack.c.b16 %v2159, %v2156
    %v2571 = vpack.c.b16 %v2160, %v2157
    %v2572 = vpack.c.b16 %v2161, %v2158
    %v2573 = vpack.c.b16 %v2165, %v2162
    %v2574 = vpack.c.b16 %v2166, %v2163
    %v2575 = vpack.c.b16 %v2167, %v2164
    %v2576 = vpack.c.b16 %v2171, %v2168
    %v2577 = vpack.c.b16 %v2172, %v2169
    %v2578 = vpack.c.b16 %v2173, %v2170
    %v2579 = vpack.c.b16 %v2177, %v2174
    %v2580 = vpack.c.b16 %v2178, %v2175
    %v2581 = vpack.c.b16 %v2179, %v2176
    %v2582 = vpack.c.b16 %v2183, %v2180
    %v2583 = vpack.c.b16 %v2184, %v2181
    %v2584 = vpack.c.b16 %v2185, %v2182
    %v2585 = vpack.c.b16 %v2189, %v2186
    %v2586 = vpack.c.b16 %v2190, %v2187
    %v2587 = vpack.c.b16 %v2191, %v2188
    %v2588 = vpack.c.b16 %v2195, %v2192
    %v2589 = vpack.c.b16 %v2196, %v2193
    %v2590 = vpack.c.b16 %v2197, %v2194
    %v2591 = vpack.c.b16 %v2201, %v2198
    %v2592 = vpack.c.b16 %v2202, %v2199
    %v2593 = vpack.c.b16 %v2203, %v2200
    %v2594 = vpack.c.b16 %v2207, %v2204
    %v2595 = vpack.c.b16 %v2208, %v2205
    %v2596 = vpack.c.b16 %v2209, %v2206
    %v2597 = vpack.c.b16 %v2213, %v2210
    %v2598 = vpack.c.b16 %v2214, %v2211
    %v2599 = vpack.c.b16 %v2215, %v2212
    %v2600 = vpack.c.b16 %v2219, %v2216
    %v2601 = vpack.c.b16 %v2220, %v2217
    %v2602 = vpack.c.b16 %v2221, %v2218
    %v2603 = vpack.c.b16 %v2225, %v2222
    %v2604 = vpack.c.b16 %v2226, %v2223
    %v2605 = vpack.c.b16 %v2227, %v2224
    %v2606 = vpack.c.b16 %v2231, %v2228
    %v2607 = vpack.c.b16 %v2232, %v2229
    %v2608 = vpack.c.b16 %v2233, %v2230
    %v2609 = vpack.c.b16 %v2237, %v2234
    %v2610 = vpack.c.b16 %v2238, %v2235
    %v2611 = vpack.c.b16 %v2239, %v2236
    %v2612 = vpack.c.b16 %v2243, %v2240
    %v2613 = vpack.c.b16 %v2244, %v2241
    %v2614 = vpack.c.b16 %v2245, %v2242
    %v2615 = vpack.c.b16 %v2249, %v2246
    %v2616 = vpack.c.b16 %v2250, %v2247
    %v2617 = vpack.c.b16 %v2251, %v2248
    %v2618 = vpack.c.b16 %v2255, %v2252
    %v2619 = vpack.c.b16 %v2256, %v2253
    %v2620 = vpack.c.b16 %v2257, %v2254
    %v2621 = vpack.c.b16 %v2261, %v2258
    %v2622 = vpack.c.b16 %v2262, %v2259
    %v2623 = vpack.c.b16 %v2263, %v2260
    %v2624 = vpack.c.b16 %v2267, %v2264
    %v2625 = vpack.c.b16 %v2268, %v2265
    %v2626 = vpack.c.b16 %v2269, %v2266
    %v2627 = vpack.c.b16 %v2273, %v2270
    %v2628 = vpack.c.b16 %v2274, %v2271
    %v2629 = vpack.c.b16 %v2275, %v2272
    %v2630 = vpack.c.b16 %v2279, %v2276
    %v2631 = vpack.c.b16 %v2280, %v2277
    %v2632 = vpack.c.b16 %v2281, %v2278
    %v2633 = vpack.c.b16 %v2285, %v2282
    %v2634 = vpack.c.b16 %v2286, %v2283
    %v2635 = vpack.c.b16 %v2287, %v2284
    %v2636 = vpack.c.b16 %v2291, %v2288
    %v2637 = vpack.c.b16 %v2292, %v2289
    %v2638 = vpack.c.b16 %v2293, %v2290
    %v2639 = vpack.c.b16 %v2297, %v2294
    %v2640 = vpack.c.b16 %v2298, %v2295
    %v2641 = vpack.c.b16 %v2299, %v2296
    %v2642 = vpack.c.b16 %v2303, %v2300
    %v2643 = vpack.c.b16 %v2304, %v2301
    %v2644 = vpack.c.b16 %v2305, %v2302
    %v2645 = vpack.c.b16 %v2309, %v2306
    %v2646 = vpack.c.b16 %v2310, %v2307
    %v2647 = vpack.c.b16 %v2311, %v2308
    %2984 = vmatprep.subr.bf16.mxu0 %v2313
    %2985 = vmatpush1.bf16.msra.mxu0 %v2312
    %2986 = vmatprep.subr.bf16.mxu0 %v2316
    %2987 = vmatpush1.bf16.msra.mxu0 %v2315
    %2988 = vmatprep.subr.bf16.mxu0 %v2319
    %2989 = vmatpush1.bf16.msra.mxu0 %v2318
    %2990 = vmatprep.subr.bf16.mxu0 %v2322
    %2991 = vmatpush1.bf16.msra.mxu0 %v2321
    %2992 = vmatprep.subr.bf16.mxu0 %v2325
    %2993 = vmatpush1.bf16.msra.mxu0 %v2324
    %2994 = vmatprep.subr.bf16.mxu0 %v2328
    %2995 = vmatpush1.bf16.msra.mxu0 %v2327
    %2996 = vmatprep.subr.bf16.mxu0 %v2331
    %2997 = vmatpush1.bf16.msra.mxu0 %v2330
    %2998 = vmatprep.subr.bf16.mxu0 %v2334
    %2999 = vmatpush1.bf16.msra.mxu0 %v2333
    %3000 = vmatprep.subr.bf16.mxu0 %v2337
    %3001 = vmatpush1.bf16.msra.mxu0 %v2336
    %3002 = vmatprep.subr.bf16.mxu0 %v2340
    %3003 = vmatpush1.bf16.msra.mxu0 %v2339
    %3004 = vmatprep.subr.bf16.mxu0 %v2343
    %3005 = vmatpush1.bf16.msra.mxu0 %v2342
    %3006 = vmatprep.subr.bf16.mxu0 %v2346
    %3007 = vmatpush1.bf16.msra.mxu0 %v2345
    %3008 = vmatprep.subr.bf16.mxu0 %v2349
    %3009 = vmatpush1.bf16.msra.mxu0 %v2348
    %3010 = vmatprep.subr.bf16.mxu0 %v2352
    %3011 = vmatpush1.bf16.msra.mxu0 %v2351
    %3012 = vmatprep.subr.bf16.mxu0 %v2355
    %3013 = vmatpush1.bf16.msra.mxu0 %v2354
    %3014 = vmatprep.subr.bf16.mxu0 %v2358
    %3015 = vmatpush1.bf16.msra.mxu0 %v2357
    %3016 = vmatprep.mubr.bf16.mxu0 %v969
    %3017 = vmatmul.mubr.bf16.gmra.mrb[0].mxu0 %v968
    %v3018 = vpop.f32.mrb[0].mxu0
    %v3019 = vadd.f32 %v620, %v3018
    %v3020 = vpop.f32.mrb[0].mxu0
    %v3021 = vadd.f32 %v624, %v3020
    %v3022 = vpop.f32.mrb[0].mxu0
    %v3023 = vadd.f32 %v620, %v3022
    %v3024 = vpop.f32.mrb[0].mxu0
    %v3025 = vadd.f32 %v624, %v3024
    %3026 = vmatprep.mubr.bf16.mxu0 %v983
    %3027 = vmatmul.mubr.bf16.gmra.mrb[0].mxu0 %v982
    %v3028 = vpop.f32.mrb[0].mxu0
    %v3029 = vadd.f32 %v620, %v3028
    %v3030 = vpop.f32.mrb[0].mxu0
    %v3031 = vadd.f32 %v624, %v3030
    %v3032 = vpop.f32.mrb[0].mxu0
    %v3033 = vadd.f32 %v620, %v3032
    %v3034 = vpop.f32.mrb[0].mxu0
    %v3035 = vadd.f32 %v624, %v3034
    %3036 = vmatprep.mubr.bf16.mxu0 %v997
    %3037 = vmatmul.mubr.bf16.gmra.mrb[0].mxu0 %v996
    %v3038 = vpop.f32.mrb[0].mxu0
    %v3039 = vadd.f32 %v620, %v3038
    %v3040 = vpop.f32.mrb[0].mxu0
    %v3041 = vadd.f32 %v624, %v3040
    %v3042 = vpop.f32.mrb[0].mxu0
    %v3043 = vadd.f32 %v620, %v3042
    %v3044 = vpop.f32.mrb[0].mxu0
    %v3045 = vadd.f32 %v624, %v3044
    %3046 = vmatprep.mubr.bf16.mxu0 %v1011
    %3047 = vmatmul.mubr.bf16.gmra.mrb[0].mxu0 %v1010
    %v3048 = vpop.f32.mrb[0].mxu0
    %v3049 = vadd.f32 %v620, %v3048
    %v3050 = vpop.f32.mrb[0].mxu0
    %v3051 = vadd.f32 %v624, %v3050
    %v3052 = vpop.f32.mrb[0].mxu0
    %v3053 = vadd.f32 %v620, %v3052
    %v3054 = vpop.f32.mrb[0].mxu0
    %v3055 = vadd.f32 %v624, %v3054
    %3056 = vmatprep.mubr.bf16.mxu0 %v1025
    %3057 = vmatmul.mubr.bf16.gmra.mrb[0].mxu0 %v1024
    %v3058 = vpop.f32.mrb[0].mxu0
    %v3059 = vadd.f32 %v620, %v3058
    %v3060 = vpop.f32.mrb[0].mxu0
    %v3061 = vadd.f32 %v624, %v3060
    %v3062 = vpop.f32.mrb[0].mxu0
    %v3063 = vadd.f32 %v620, %v3062
    %v3064 = vpop.f32.mrb[0].mxu0
    %v3065 = vadd.f32 %v624, %v3064
    %3066 = vmatprep.mubr.bf16.mxu0 %v1039
    %3067 = vmatmul.mubr.bf16.gmra.mrb[0].mxu0 %v1038
    %v3068 = vpop.f32.mrb[0].mxu0
    %v3069 = vadd.f32 %v620, %v3068
    %v3070 = vpop.f32.mrb[0].mxu0
    %v3071 = vadd.f32 %v624, %v3070
    %v3072 = vpop.f32.mrb[0].mxu0
    %v3073 = vadd.f32 %v620, %v3072
    %v3074 = vpop.f32.mrb[0].mxu0
    %v3075 = vadd.f32 %v624, %v3074
    %3076 = vmatprep.mubr.bf16.mxu0 %v1053
    %3077 = vmatmul.mubr.bf16.gmra.mrb[0].mxu0 %v1052
    %v3078 = vpop.f32.mrb[0].mxu0
    %v3079 = vadd.f32 %v620, %v3078
    %v3080 = vpop.f32.mrb[0].mxu0
    %v3081 = vadd.f32 %v624, %v3080
    %v3082 = vpop.f32.mrb[0].mxu0
    %v3083 = vadd.f32 %v620, %v3082
    %v3084 = vpop.f32.mrb[0].mxu0
    %v3085 = vadd.f32 %v624, %v3084
    %3086 = vmatprep.mubr.bf16.mxu0 %v1067
    %3087 = vmatmul.mubr.bf16.gmra.mrb[0].mxu0 %v1066
    %v3088 = vpop.f32.mrb[0].mxu0
    %v3089 = vadd.f32 %v620, %v3088
    %v3090 = vpop.f32.mrb[0].mxu0
    %v3091 = vadd.f32 %v624, %v3090
    %v3092 = vpop.f32.mrb[0].mxu0
    %v3093 = vadd.f32 %v620, %v3092
    %v3094 = vpop.f32.mrb[0].mxu0
    %v3095 = vadd.f32 %v624, %v3094
    %3096 = vdwg.mxu0
    %3097 = vmatprep.subr.bf16.mxu0 %v2361
    %3098 = vmatpush1.bf16.msra.mxu0 %v2360
    %3099 = vmatprep.subr.bf16.mxu0 %v2364
    %3100 = vmatpush1.bf16.msra.mxu0 %v2363
    %3101 = vmatprep.subr.bf16.mxu0 %v2367
    %3102 = vmatpush1.bf16.msra.mxu0 %v2366
    %3103 = vmatprep.subr.bf16.mxu0 %v2370
    %3104 = vmatpush1.bf16.msra.mxu0 %v2369
    %3105 = vmatprep.subr.bf16.mxu0 %v2373
    %3106 = vmatpush1.bf16.msra.mxu0 %v2372
    %3107 = vmatprep.subr.bf16.mxu0 %v2376
    %3108 = vmatpush1.bf16.msra.mxu0 %v2375
    %3109 = vmatprep.subr.bf16.mxu0 %v2379
    %3110 = vmatpush1.bf16.msra.mxu0 %v2378
    %3111 = vmatprep.subr.bf16.mxu0 %v2382
    %3112 = vmatpush1.bf16.msra.mxu0 %v2381
    %3113 = vmatprep.subr.bf16.mxu0 %v2385
    %3114 = vmatpush1.bf16.msra.mxu0 %v2384
    %3115 = vmatprep.subr.bf16.mxu0 %v2388
    %3116 = vmatpush1.bf16.msra.mxu0 %v2387
    %3117 = vmatprep.subr.bf16.mxu0 %v2391
    %3118 = vmatpush1.bf16.msra.mxu0 %v2390
    %3119 = vmatprep.subr.bf16.mxu0 %v2394
    %3120 = vmatpush1.bf16.msra.mxu0 %v2393
    %3121 = vmatprep.subr.bf16.mxu0 %v2397
    %3122 = vmatpush1.bf16.msra.mxu0 %v2396
    %3123 = vmatprep.subr.bf16.mxu0 %v2400
    %3124 = vmatpush1.bf16.msra.mxu0 %v2399
    %3125 = vmatprep.subr.bf16.mxu0 %v2403
    %3126 = vmatpush1.bf16.msra.mxu0 %v2402
    %3127 = vmatprep.subr.bf16.mxu0 %v2406
    %3128 = vmatpush1.bf16.msra.mxu0 %v2405
    %3129 = vmatprep.mubr.bf16.mxu0 %v971
    %3130 = vmatmul.mubr.bf16.gmra.mrb[0].mxu0 %v970
    %v3131 = vpop.f32.mrb[0].mxu0
    %v3132 = vadd.f32 %v3019, %v3131
    %v3133 = vpop.f32.mrb[0].mxu0
    %v3134 = vadd.f32 %v3021, %v3133
    %v3135 = vpop.f32.mrb[0].mxu0
    %v3136 = vadd.f32 %v3023, %v3135
    %v3137 = vpop.f32.mrb[0].mxu0
    %v3138 = vadd.f32 %v3025, %v3137
    %3139 = vmatprep.mubr.bf16.mxu0 %v985
    %3140 = vmatmul.mubr.bf16.gmra.mrb[0].mxu0 %v984
    %v3141 = vpop.f32.mrb[0].mxu0
    %v3142 = vadd.f32 %v3029, %v3141
    %v3143 = vpop.f32.mrb[0].mxu0
    %v3144 = vadd.f32 %v3031, %v3143
    %v3145 = vpop.f32.mrb[0].mxu0
    %v3146 = vadd.f32 %v3033, %v3145
    %v3147 = vpop.f32.mrb[0].mxu0
    %v3148 = vadd.f32 %v3035, %v3147
    %3149 = vmatprep.mubr.bf16.mxu0 %v999
    %3150 = vmatmul.mubr.bf16.gmra.mrb[0].mxu0 %v998
    %v3151 = vpop.f32.mrb[0].mxu0
    %v3152 = vadd.f32 %v3039, %v3151
    %v3153 = vpop.f32.mrb[0].mxu0
    %v3154 = vadd.f32 %v3041, %v3153
    %v3155 = vpop.f32.mrb[0].mxu0
    %v3156 = vadd.f32 %v3043, %v3155
    %v3157 = vpop.f32.mrb[0].mxu0
    %v3158 = vadd.f32 %v3045, %v3157
    %3159 = vmatprep.mubr.bf16.mxu0 %v1013
    %3160 = vmatmul.mubr.bf16.gmra.mrb[0].mxu0 %v1012
    %v3161 = vpop.f32.mrb[0].mxu0
    %v3162 = vadd.f32 %v3049, %v3161
    %v3163 = vpop.f32.mrb[0].mxu0
    %v3164 = vadd.f32 %v3051, %v3163
    %v3165 = vpop.f32.mrb[0].mxu0
    %v3166 = vadd.f32 %v3053, %v3165
    %v3167 = vpop.f32.mrb[0].mxu0
    %v3168 = vadd.f32 %v3055, %v3167
    %3169 = vmatprep.mubr.bf16.mxu0 %v1027
    %3170 = vmatmul.mubr.bf16.gmra.mrb[0].mxu0 %v1026
    %v3171 = vpop.f32.mrb[0].mxu0
    %v3172 = vadd.f32 %v3059, %v3171
    %v3173 = vpop.f32.mrb[0].mxu0
    %v3174 = vadd.f32 %v3061, %v3173
    %v3175 = vpop.f32.mrb[0].mxu0
    %v3176 = vadd.f32 %v3063, %v3175
    %v3177 = vpop.f32.mrb[0].mxu0
    %v3178 = vadd.f32 %v3065, %v3177
    %3179 = vmatprep.mubr.bf16.mxu0 %v1041
    %3180 = vmatmul.mubr.bf16.gmra.mrb[0].mxu0 %v1040
    %v3181 = vpop.f32.mrb[0].mxu0
    %v3182 = vadd.f32 %v3069, %v3181
    %v3183 = vpop.f32.mrb[0].mxu0
    %v3184 = vadd.f32 %v3071, %v3183
    %v3185 = vpop.f32.mrb[0].mxu0
    %v3186 = vadd.f32 %v3073, %v3185
    %v3187 = vpop.f32.mrb[0].mxu0
    %v3188 = vadd.f32 %v3075, %v3187
    %3189 = vmatprep.mubr.bf16.mxu0 %v1055
    %3190 = vmatmul.mubr.bf16.gmra.mrb[0].mxu0 %v1054
    %v3191 = vpop.f32.mrb[0].mxu0
    %v3192 = vadd.f32 %v3079, %v3191
    %v3193 = vpop.f32.mrb[0].mxu0
    %v3194 = vadd.f32 %v3081, %v3193
    %v3195 = vpop.f32.mrb[0].mxu0
    %v3196 = vadd.f32 %v3083, %v3195
    %v3197 = vpop.f32.mrb[0].mxu0
    %v3198 = vadd.f32 %v3085, %v3197
    %3199 = vmatprep.mubr.bf16.mxu0 %v1069
    %3200 = vmatmul.mubr.bf16.gmra.mrb[0].mxu0 %v1068
    %v3201 = vpop.f32.mrb[0].mxu0
    %v3202 = vadd.f32 %v3089, %v3201
    %v3203 = vpop.f32.mrb[0].mxu0
    %v3204 = vadd.f32 %v3091, %v3203
    %v3205 = vpop.f32.mrb[0].mxu0
    %v3206 = vadd.f32 %v3093, %v3205
    %v3207 = vpop.f32.mrb[0].mxu0
    %v3208 = vadd.f32 %v3095, %v3207
    %3209 = vdwg.mxu0
    %3210 = vmatprep.subr.bf16.mxu0 %v2409
    %3211 = vmatpush1.bf16.msra.mxu0 %v2408
    %3212 = vmatprep.subr.bf16.mxu0 %v2412
    %3213 = vmatpush1.bf16.msra.mxu0 %v2411
    %3214 = vmatprep.subr.bf16.mxu0 %v2415
    %3215 = vmatpush1.bf16.msra.mxu0 %v2414
    %3216 = vmatprep.subr.bf16.mxu0 %v2418
    %3217 = vmatpush1.bf16.msra.mxu0 %v2417
    %3218 = vmatprep.subr.bf16.mxu0 %v2421
    %3219 = vmatpush1.bf16.msra.mxu0 %v2420
    %3220 = vmatprep.subr.bf16.mxu0 %v2424
    %3221 = vmatpush1.bf16.msra.mxu0 %v2423
    %3222 = vmatprep.subr.bf16.mxu0 %v2427
    %3223 = vmatpush1.bf16.msra.mxu0 %v2426
    %3224 = vmatprep.subr.bf16.mxu0 %v2430
    %3225 = vmatpush1.bf16.msra.mxu0 %v2429
    %3226 = vmatprep.subr.bf16.mxu0 %v2433
    %3227 = vmatpush1.bf16.msra.mxu0 %v2432
    %3228 = vmatprep.subr.bf16.mxu0 %v2436
    %3229 = vmatpush1.bf16.msra.mxu0 %v2435
    %3230 = vmatprep.subr.bf16.mxu0 %v2439
    %3231 = vmatpush1.bf16.msra.mxu0 %v2438
    %3232 = vmatprep.subr.bf16.mxu0 %v2442
    %3233 = vmatpush1.bf16.msra.mxu0 %v2441
    %3234 = vmatprep.subr.bf16.mxu0 %v2445
    %3235 = vmatpush1.bf16.msra.mxu0 %v2444
    %3236 = vmatprep.subr.bf16.mxu0 %v2448
    %3237 = vmatpush1.bf16.msra.mxu0 %v2447
    %3238 = vmatprep.subr.bf16.mxu0 %v2451
    %3239 = vmatpush1.bf16.msra.mxu0 %v2450
    %3240 = vmatprep.subr.bf16.mxu0 %v2454
    %3241 = vmatpush1.bf16.msra.mxu0 %v2453
    %3242 = vmatprep.mubr.bf16.mxu0 %v973
    %3243 = vmatmul.mubr.bf16.gmra.mrb[0].mxu0 %v972
    %v3244 = vpop.f32.mrb[0].mxu0
    %v3245 = vadd.f32 %v3132, %v3244
    %v3246 = vpop.f32.mrb[0].mxu0
    %v3247 = vadd.f32 %v3134, %v3246
    %v3248 = vpop.f32.mrb[0].mxu0
    %v3249 = vadd.f32 %v3136, %v3248
    %v3250 = vpop.f32.mrb[0].mxu0
    %v3251 = vadd.f32 %v3138, %v3250
    %3252 = vmatprep.mubr.bf16.mxu0 %v987
    %3253 = vmatmul.mubr.bf16.gmra.mrb[0].mxu0 %v986
    %v3254 = vpop.f32.mrb[0].mxu0
    %v3255 = vadd.f32 %v3142, %v3254
    %v3256 = vpop.f32.mrb[0].mxu0
    %v3257 = vadd.f32 %v3144, %v3256
    %v3258 = vpop.f32.mrb[0].mxu0
    %v3259 = vadd.f32 %v3146, %v3258
    %v3260 = vpop.f32.mrb[0].mxu0
    %v3261 = vadd.f32 %v3148, %v3260
    %3262 = vmatprep.mubr.bf16.mxu0 %v1001
    %3263 = vmatmul.mubr.bf16.gmra.mrb[0].mxu0 %v1000
    %v3264 = vpop.f32.mrb[0].mxu0
    %v3265 = vadd.f32 %v3152, %v3264
    %v3266 = vpop.f32.mrb[0].mxu0
    %v3267 = vadd.f32 %v3154, %v3266
    %v3268 = vpop.f32.mrb[0].mxu0
    %v3269 = vadd.f32 %v3156, %v3268
    %v3270 = vpop.f32.mrb[0].mxu0
    %v3271 = vadd.f32 %v3158, %v3270
    %3272 = vmatprep.mubr.bf16.mxu0 %v1015
    %3273 = vmatmul.mubr.bf16.gmra.mrb[0].mxu0 %v1014
    %v3274 = vpop.f32.mrb[0].mxu0
    %v3275 = vadd.f32 %v3162, %v3274
    %v3276 = vpop.f32.mrb[0].mxu0
    %v3277 = vadd.f32 %v3164, %v3276
    %v3278 = vpop.f32.mrb[0].mxu0
    %v3279 = vadd.f32 %v3166, %v3278
    %v3280 = vpop.f32.mrb[0].mxu0
    %v3281 = vadd.f32 %v3168, %v3280
    %3282 = vmatprep.mubr.bf16.mxu0 %v1029
    %3283 = vmatmul.mubr.bf16.gmra.mrb[0].mxu0 %v1028
    %v3284 = vpop.f32.mrb[0].mxu0
    %v3285 = vadd.f32 %v3172, %v3284
    %v3286 = vpop.f32.mrb[0].mxu0
    %v3287 = vadd.f32 %v3174, %v3286
    %v3288 = vpop.f32.mrb[0].mxu0
    %v3289 = vadd.f32 %v3176, %v3288
    %v3290 = vpop.f32.mrb[0].mxu0
    %v3291 = vadd.f32 %v3178, %v3290
    %3292 = vmatprep.mubr.bf16.mxu0 %v1043
    %3293 = vmatmul.mubr.bf16.gmra.mrb[0].mxu0 %v1042
    %v3294 = vpop.f32.mrb[0].mxu0
    %v3295 = vadd.f32 %v3182, %v3294
    %v3296 = vpop.f32.mrb[0].mxu0
    %v3297 = vadd.f32 %v3184, %v3296
    %v3298 = vpop.f32.mrb[0].mxu0
    %v3299 = vadd.f32 %v3186, %v3298
    %v3300 = vpop.f32.mrb[0].mxu0
    %v3301 = vadd.f32 %v3188, %v3300
    %3302 = vmatprep.mubr.bf16.mxu0 %v1057
    %3303 = vmatmul.mubr.bf16.gmra.mrb[0].mxu0 %v1056
    %v3304 = vpop.f32.mrb[0].mxu0
    %v3305 = vadd.f32 %v3192, %v3304
    %v3306 = vpop.f32.mrb[0].mxu0
    %v3307 = vadd.f32 %v3194, %v3306
    %v3308 = vpop.f32.mrb[0].mxu0
    %v3309 = vadd.f32 %v3196, %v3308
    %v3310 = vpop.f32.mrb[0].mxu0
    %v3311 = vadd.f32 %v3198, %v3310
    %3312 = vmatprep.mubr.bf16.mxu0 %v1071
    %3313 = vmatmul.mubr.bf16.gmra.mrb[0].mxu0 %v1070
    %v3314 = vpop.f32.mrb[0].mxu0
    %v3315 = vadd.f32 %v3202, %v3314
    %v3316 = vpop.f32.mrb[0].mxu0
    %v3317 = vadd.f32 %v3204, %v3316
    %v3318 = vpop.f32.mrb[0].mxu0
    %v3319 = vadd.f32 %v3206, %v3318
    %v3320 = vpop.f32.mrb[0].mxu0
    %v3321 = vadd.f32 %v3208, %v3320
    %3322 = vdwg.mxu0
    %3323 = vmatprep.subr.bf16.mxu0 %v2457
    %3324 = vmatpush1.bf16.msra.mxu0 %v2456
    %3325 = vmatprep.subr.bf16.mxu0 %v2460
    %3326 = vmatpush1.bf16.msra.mxu0 %v2459
    %3327 = vmatprep.subr.bf16.mxu0 %v2463
    %3328 = vmatpush1.bf16.msra.mxu0 %v2462
    %3329 = vmatprep.subr.bf16.mxu0 %v2466
    %3330 = vmatpush1.bf16.msra.mxu0 %v2465
    %3331 = vmatprep.subr.bf16.mxu0 %v2469
    %3332 = vmatpush1.bf16.msra.mxu0 %v2468
    %3333 = vmatprep.subr.bf16.mxu0 %v2472
    %3334 = vmatpush1.bf16.msra.mxu0 %v2471
    %3335 = vmatprep.subr.bf16.mxu0 %v2475
    %3336 = vmatpush1.bf16.msra.mxu0 %v2474
    %3337 = vmatprep.subr.bf16.mxu0 %v2478
    %3338 = vmatpush1.bf16.msra.mxu0 %v2477
    %3339 = vmatprep.subr.bf16.mxu0 %v2481
    %3340 = vmatpush1.bf16.msra.mxu0 %v2480
    %3341 = vmatprep.subr.bf16.mxu0 %v2484
    %3342 = vmatpush1.bf16.msra.mxu0 %v2483
    %3343 = vmatprep.subr.bf16.mxu0 %v2487
    %3344 = vmatpush1.bf16.msra.mxu0 %v2486
    %3345 = vmatprep.subr.bf16.mxu0 %v2490
    %3346 = vmatpush1.bf16.msra.mxu0 %v2489
    %3347 = vmatprep.subr.bf16.mxu0 %v2493
    %3348 = vmatpush1.bf16.msra.mxu0 %v2492
    %3349 = vmatprep.subr.bf16.mxu0 %v2496
    %3350 = vmatpush1.bf16.msra.mxu0 %v2495
    %3351 = vmatprep.subr.bf16.mxu0 %v2499
    %3352 = vmatpush1.bf16.msra.mxu0 %v2498
    %3353 = vmatprep.subr.bf16.mxu0 %v2502
    %3354 = vmatpush1.bf16.msra.mxu0 %v2501
    %3355 = vmatprep.mubr.bf16.mxu0 %v975
    %3356 = vmatmul.mubr.bf16.gmra.mrb[0].mxu0 %v974
    %v3357 = vpop.f32.mrb[0].mxu0
    %v3358 = vadd.f32 %v3245, %v3357
    %v3359 = vpop.f32.mrb[0].mxu0
    %v3360 = vadd.f32 %v3247, %v3359
    %v3361 = vpop.f32.mrb[0].mxu0
    %v3362 = vadd.f32 %v3249, %v3361
    %v3363 = vpop.f32.mrb[0].mxu0
    %v3364 = vadd.f32 %v3251, %v3363
    %3365 = vmatprep.mubr.bf16.mxu0 %v989
    %3366 = vmatmul.mubr.bf16.gmra.mrb[0].mxu0 %v988
    %v3367 = vpop.f32.mrb[0].mxu0
    %v3368 = vadd.f32 %v3255, %v3367
    %v3369 = vpop.f32.mrb[0].mxu0
    %v3370 = vadd.f32 %v3257, %v3369
    %v3371 = vpop.f32.mrb[0].mxu0
    %v3372 = vadd.f32 %v3259, %v3371
    %v3373 = vpop.f32.mrb[0].mxu0
    %v3374 = vadd.f32 %v3261, %v3373
    %3375 = vmatprep.mubr.bf16.mxu0 %v1003
    %3376 = vmatmul.mubr.bf16.gmra.mrb[0].mxu0 %v1002
    %v3377 = vpop.f32.mrb[0].mxu0
    %v3378 = vadd.f32 %v3265, %v3377
    %v3379 = vpop.f32.mrb[0].mxu0
    %v3380 = vadd.f32 %v3267, %v3379
    %v3381 = vpop.f32.mrb[0].mxu0
    %v3382 = vadd.f32 %v3269, %v3381
    %v3383 = vpop.f32.mrb[0].mxu0
    %v3384 = vadd.f32 %v3271, %v3383
    %3385 = vmatprep.mubr.bf16.mxu0 %v1017
    %3386 = vmatmul.mubr.bf16.gmra.mrb[0].mxu0 %v1016
    %v3387 = vpop.f32.mrb[0].mxu0
    %v3388 = vadd.f32 %v3275, %v3387
    %v3389 = vpop.f32.mrb[0].mxu0
    %v3390 = vadd.f32 %v3277, %v3389
    %v3391 = vpop.f32.mrb[0].mxu0
    %v3392 = vadd.f32 %v3279, %v3391
    %v3393 = vpop.f32.mrb[0].mxu0
    %v3394 = vadd.f32 %v3281, %v3393
    %3395 = vmatprep.mubr.bf16.mxu0 %v1031
    %3396 = vmatmul.mubr.bf16.gmra.mrb[0].mxu0 %v1030
    %v3397 = vpop.f32.mrb[0].mxu0
    %v3398 = vadd.f32 %v3285, %v3397
    %v3399 = vpop.f32.mrb[0].mxu0
    %v3400 = vadd.f32 %v3287, %v3399
    %v3401 = vpop.f32.mrb[0].mxu0
    %v3402 = vadd.f32 %v3289, %v3401
    %v3403 = vpop.f32.mrb[0].mxu0
    %v3404 = vadd.f32 %v3291, %v3403
    %3405 = vmatprep.mubr.bf16.mxu0 %v1045
    %3406 = vmatmul.mubr.bf16.gmra.mrb[0].mxu0 %v1044
    %v3407 = vpop.f32.mrb[0].mxu0
    %v3408 = vadd.f32 %v3295, %v3407
    %v3409 = vpop.f32.mrb[0].mxu0
    %v3410 = vadd.f32 %v3297, %v3409
    %v3411 = vpop.f32.mrb[0].mxu0
    %v3412 = vadd.f32 %v3299, %v3411
    %v3413 = vpop.f32.mrb[0].mxu0
    %v3414 = vadd.f32 %v3301, %v3413
    %3415 = vmatprep.mubr.bf16.mxu0 %v1059
    %3416 = vmatmul.mubr.bf16.gmra.mrb[0].mxu0 %v1058
    %v3417 = vpop.f32.mrb[0].mxu0
    %v3418 = vadd.f32 %v3305, %v3417
    %v3419 = vpop.f32.mrb[0].mxu0
    %v3420 = vadd.f32 %v3307, %v3419
    %v3421 = vpop.f32.mrb[0].mxu0
    %v3422 = vadd.f32 %v3309, %v3421
    %v3423 = vpop.f32.mrb[0].mxu0
    %v3424 = vadd.f32 %v3311, %v3423
    %3425 = vmatprep.mubr.bf16.mxu0 %v1073
    %3426 = vmatmul.mubr.bf16.gmra.mrb[0].mxu0 %v1072
    %v3427 = vpop.f32.mrb[0].mxu0
    %v3428 = vadd.f32 %v3315, %v3427
    %v3429 = vpop.f32.mrb[0].mxu0
    %v3430 = vadd.f32 %v3317, %v3429
    %v3431 = vpop.f32.mrb[0].mxu0
    %v3432 = vadd.f32 %v3319, %v3431
    %v3433 = vpop.f32.mrb[0].mxu0
    %v3434 = vadd.f32 %v3321, %v3433
    %3435 = vdwg.mxu0
    %3436 = vmatprep.subr.bf16.mxu0 %v2505
    %3437 = vmatpush1.bf16.msra.mxu0 %v2504
    %3438 = vmatprep.subr.bf16.mxu0 %v2508
    %3439 = vmatpush1.bf16.msra.mxu0 %v2507
    %3440 = vmatprep.subr.bf16.mxu0 %v2511
    %3441 = vmatpush1.bf16.msra.mxu0 %v2510
    %3442 = vmatprep.subr.bf16.mxu0 %v2514
    %3443 = vmatpush1.bf16.msra.mxu0 %v2513
    %3444 = vmatprep.subr.bf16.mxu0 %v2517
    %3445 = vmatpush1.bf16.msra.mxu0 %v2516
    %3446 = vmatprep.subr.bf16.mxu0 %v2520
    %3447 = vmatpush1.bf16.msra.mxu0 %v2519
    %3448 = vmatprep.subr.bf16.mxu0 %v2523
    %3449 = vmatpush1.bf16.msra.mxu0 %v2522
    %3450 = vmatprep.subr.bf16.mxu0 %v2526
    %3451 = vmatpush1.bf16.msra.mxu0 %v2525
    %3452 = vmatprep.subr.bf16.mxu0 %v2529
    %3453 = vmatpush1.bf16.msra.mxu0 %v2528
    %3454 = vmatprep.subr.bf16.mxu0 %v2532
    %3455 = vmatpush1.bf16.msra.mxu0 %v2531
    %3456 = vmatprep.subr.bf16.mxu0 %v2535
    %3457 = vmatpush1.bf16.msra.mxu0 %v2534
    %3458 = vmatprep.subr.bf16.mxu0 %v2538
    %3459 = vmatpush1.bf16.msra.mxu0 %v2537
    %3460 = vmatprep.subr.bf16.mxu0 %v2541
    %3461 = vmatpush1.bf16.msra.mxu0 %v2540
    %3462 = vmatprep.subr.bf16.mxu0 %v2544
    %3463 = vmatpush1.bf16.msra.mxu0 %v2543
    %3464 = vmatprep.subr.bf16.mxu0 %v2547
    %3465 = vmatpush1.bf16.msra.mxu0 %v2546
    %3466 = vmatprep.subr.bf16.mxu0 %v2550
    %3467 = vmatpush1.bf16.msra.mxu0 %v2549
    %3468 = vmatprep.mubr.bf16.mxu0 %v977
    %3469 = vmatmul.mubr.bf16.gmra.mrb[0].mxu0 %v976
    %v3470 = vpop.f32.mrb[0].mxu0
    %v3471 = vadd.f32 %v3358, %v3470
    %v3472 = vpop.f32.mrb[0].mxu0
    %v3473 = vadd.f32 %v3360, %v3472
    %v3474 = vpop.f32.mrb[0].mxu0
    %v3475 = vadd.f32 %v3362, %v3474
    %v3476 = vpop.f32.mrb[0].mxu0
    %v3477 = vadd.f32 %v3364, %v3476
    %3478 = vmatprep.mubr.bf16.mxu0 %v991
    %3479 = vmatmul.mubr.bf16.gmra.mrb[0].mxu0 %v990
    %v3480 = vpop.f32.mrb[0].mxu0
    %v3481 = vadd.f32 %v3368, %v3480
    %v3482 = vpop.f32.mrb[0].mxu0
    %v3483 = vadd.f32 %v3370, %v3482
    %v3484 = vpop.f32.mrb[0].mxu0
    %v3485 = vadd.f32 %v3372, %v3484
    %v3486 = vpop.f32.mrb[0].mxu0
    %v3487 = vadd.f32 %v3374, %v3486
    %3488 = vmatprep.mubr.bf16.mxu0 %v1005
    %3489 = vmatmul.mubr.bf16.gmra.mrb[0].mxu0 %v1004
    %v3490 = vpop.f32.mrb[0].mxu0
    %v3491 = vadd.f32 %v3378, %v3490
    %v3492 = vpop.f32.mrb[0].mxu0
    %v3493 = vadd.f32 %v3380, %v3492
    %v3494 = vpop.f32.mrb[0].mxu0
    %v3495 = vadd.f32 %v3382, %v3494
    %v3496 = vpop.f32.mrb[0].mxu0
    %v3497 = vadd.f32 %v3384, %v3496
    %3498 = vmatprep.mubr.bf16.mxu0 %v1019
    %3499 = vmatmul.mubr.bf16.gmra.mrb[0].mxu0 %v1018
    %v3500 = vpop.f32.mrb[0].mxu0
    %v3501 = vadd.f32 %v3388, %v3500
    %v3502 = vpop.f32.mrb[0].mxu0
    %v3503 = vadd.f32 %v3390, %v3502
    %v3504 = vpop.f32.mrb[0].mxu0
    %v3505 = vadd.f32 %v3392, %v3504
    %v3506 = vpop.f32.mrb[0].mxu0
    %v3507 = vadd.f32 %v3394, %v3506
    %3508 = vmatprep.mubr.bf16.mxu0 %v1033
    %3509 = vmatmul.mubr.bf16.gmra.mrb[0].mxu0 %v1032
    %v3510 = vpop.f32.mrb[0].mxu0
    %v3511 = vadd.f32 %v3398, %v3510
    %v3512 = vpop.f32.mrb[0].mxu0
    %v3513 = vadd.f32 %v3400, %v3512
    %v3514 = vpop.f32.mrb[0].mxu0
    %v3515 = vadd.f32 %v3402, %v3514
    %v3516 = vpop.f32.mrb[0].mxu0
    %v3517 = vadd.f32 %v3404, %v3516
    %3518 = vmatprep.mubr.bf16.mxu0 %v1047
    %3519 = vmatmul.mubr.bf16.gmra.mrb[0].mxu0 %v1046
    %v3520 = vpop.f32.mrb[0].mxu0
    %v3521 = vadd.f32 %v3408, %v3520
    %v3522 = vpop.f32.mrb[0].mxu0
    %v3523 = vadd.f32 %v3410, %v3522
    %v3524 = vpop.f32.mrb[0].mxu0
    %v3525 = vadd.f32 %v3412, %v3524
    %v3526 = vpop.f32.mrb[0].mxu0
    %v3527 = vadd.f32 %v3414, %v3526
    %3528 = vmatprep.mubr.bf16.mxu0 %v1061
    %3529 = vmatmul.mubr.bf16.gmra.mrb[0].mxu0 %v1060
    %v3530 = vpop.f32.mrb[0].mxu0
    %v3531 = vadd.f32 %v3418, %v3530
    %v3532 = vpop.f32.mrb[0].mxu0
    %v3533 = vadd.f32 %v3420, %v3532
    %v3534 = vpop.f32.mrb[0].mxu0
    %v3535 = vadd.f32 %v3422, %v3534
    %v3536 = vpop.f32.mrb[0].mxu0
    %v3537 = vadd.f32 %v3424, %v3536
    %3538 = vmatprep.mubr.bf16.mxu0 %v1075
    %3539 = vmatmul.mubr.bf16.gmra.mrb[0].mxu0 %v1074
    %v3540 = vpop.f32.mrb[0].mxu0
    %v3541 = vadd.f32 %v3428, %v3540
    %v3542 = vpop.f32.mrb[0].mxu0
    %v3543 = vadd.f32 %v3430, %v3542
    %v3544 = vpop.f32.mrb[0].mxu0
    %v3545 = vadd.f32 %v3432, %v3544
    %v3546 = vpop.f32.mrb[0].mxu0
    %v3547 = vadd.f32 %v3434, %v3546
    %3548 = vdwg.mxu0
    %3549 = vmatprep.subr.bf16.mxu0 %v2553
    %3550 = vmatpush1.bf16.msra.mxu0 %v2552
    %3551 = vmatprep.subr.bf16.mxu0 %v2556
    %3552 = vmatpush1.bf16.msra.mxu0 %v2555
    %3553 = vmatprep.subr.bf16.mxu0 %v2559
    %3554 = vmatpush1.bf16.msra.mxu0 %v2558
    %3555 = vmatprep.subr.bf16.mxu0 %v2562
    %3556 = vmatpush1.bf16.msra.mxu0 %v2561
    %3557 = vmatprep.subr.bf16.mxu0 %v2565
    %3558 = vmatpush1.bf16.msra.mxu0 %v2564
    %3559 = vmatprep.subr.bf16.mxu0 %v2568
    %3560 = vmatpush1.bf16.msra.mxu0 %v2567
    %3561 = vmatprep.subr.bf16.mxu0 %v2571
    %3562 = vmatpush1.bf16.msra.mxu0 %v2570
    %3563 = vmatprep.subr.bf16.mxu0 %v2574
    %3564 = vmatpush1.bf16.msra.mxu0 %v2573
    %3565 = vmatprep.subr.bf16.mxu0 %v2577
    %3566 = vmatpush1.bf16.msra.mxu0 %v2576
    %3567 = vmatprep.subr.bf16.mxu0 %v2580
    %3568 = vmatpush1.bf16.msra.mxu0 %v2579
    %3569 = vmatprep.subr.bf16.mxu0 %v2583
    %3570 = vmatpush1.bf16.msra.mxu0 %v2582
    %3571 = vmatprep.subr.bf16.mxu0 %v2586
    %3572 = vmatpush1.bf16.msra.mxu0 %v2585
    %3573 = vmatprep.subr.bf16.mxu0 %v2589
    %3574 = vmatpush1.bf16.msra.mxu0 %v2588
    %3575 = vmatprep.subr.bf16.mxu0 %v2592
    %3576 = vmatpush1.bf16.msra.mxu0 %v2591
    %3577 = vmatprep.subr.bf16.mxu0 %v2595
    %3578 = vmatpush1.bf16.msra.mxu0 %v2594
    %3579 = vmatprep.subr.bf16.mxu0 %v2598
    %3580 = vmatpush1.bf16.msra.mxu0 %v2597
    %3581 = vmatprep.mubr.bf16.mxu0 %v979
    %3582 = vmatmul.mubr.bf16.gmra.mrb[0].mxu0 %v978
    %v3583 = vpop.f32.mrb[0].mxu0
    %v3584 = vadd.f32 %v3471, %v3583
    %v3585 = vpop.f32.mrb[0].mxu0
    %v3586 = vadd.f32 %v3473, %v3585
    %v3587 = vpop.f32.mrb[0].mxu0
    %v3588 = vadd.f32 %v3475, %v3587
    %v3589 = vpop.f32.mrb[0].mxu0
    %v3590 = vadd.f32 %v3477, %v3589
    %3591 = vmatprep.mubr.bf16.mxu0 %v993
    %3592 = vmatmul.mubr.bf16.gmra.mrb[0].mxu0 %v992
    %v3593 = vpop.f32.mrb[0].mxu0
    %v3594 = vadd.f32 %v3481, %v3593
    %v3595 = vpop.f32.mrb[0].mxu0
    %v3596 = vadd.f32 %v3483, %v3595
    %v3597 = vpop.f32.mrb[0].mxu0
    %v3598 = vadd.f32 %v3485, %v3597
    %v3599 = vpop.f32.mrb[0].mxu0
    %v3600 = vadd.f32 %v3487, %v3599
    %3601 = vmatprep.mubr.bf16.mxu0 %v1007
    %3602 = vmatmul.mubr.bf16.gmra.mrb[0].mxu0 %v1006
    %v3603 = vpop.f32.mrb[0].mxu0
    %v3604 = vadd.f32 %v3491, %v3603
    %v3605 = vpop.f32.mrb[0].mxu0
    %v3606 = vadd.f32 %v3493, %v3605
    %v3607 = vpop.f32.mrb[0].mxu0
    %v3608 = vadd.f32 %v3495, %v3607
    %v3609 = vpop.f32.mrb[0].mxu0
    %v3610 = vadd.f32 %v3497, %v3609
    %3611 = vmatprep.mubr.bf16.mxu0 %v1021
    %3612 = vmatmul.mubr.bf16.gmra.mrb[0].mxu0 %v1020
    %v3613 = vpop.f32.mrb[0].mxu0
    %v3614 = vadd.f32 %v3501, %v3613
    %v3615 = vpop.f32.mrb[0].mxu0
    %v3616 = vadd.f32 %v3503, %v3615
    %v3617 = vpop.f32.mrb[0].mxu0
    %v3618 = vadd.f32 %v3505, %v3617
    %v3619 = vpop.f32.mrb[0].mxu0
    %v3620 = vadd.f32 %v3507, %v3619
    %3621 = vmatprep.mubr.bf16.mxu0 %v1035
    %3622 = vmatmul.mubr.bf16.gmra.mrb[0].mxu0 %v1034
    %v3623 = vpop.f32.mrb[0].mxu0
    %v3624 = vadd.f32 %v3511, %v3623
    %v3625 = vpop.f32.mrb[0].mxu0
    %v3626 = vadd.f32 %v3513, %v3625
    %v3627 = vpop.f32.mrb[0].mxu0
    %v3628 = vadd.f32 %v3515, %v3627
    %v3629 = vpop.f32.mrb[0].mxu0
    %v3630 = vadd.f32 %v3517, %v3629
    %3631 = vmatprep.mubr.bf16.mxu0 %v1049
    %3632 = vmatmul.mubr.bf16.gmra.mrb[0].mxu0 %v1048
    %v3633 = vpop.f32.mrb[0].mxu0
    %v3634 = vadd.f32 %v3521, %v3633
    %v3635 = vpop.f32.mrb[0].mxu0
    %v3636 = vadd.f32 %v3523, %v3635
    %v3637 = vpop.f32.mrb[0].mxu0
    %v3638 = vadd.f32 %v3525, %v3637
    %v3639 = vpop.f32.mrb[0].mxu0
    %v3640 = vadd.f32 %v3527, %v3639
    %3641 = vmatprep.mubr.bf16.mxu0 %v1063
    %3642 = vmatmul.mubr.bf16.gmra.mrb[0].mxu0 %v1062
    %v3643 = vpop.f32.mrb[0].mxu0
    %v3644 = vadd.f32 %v3531, %v3643
    %v3645 = vpop.f32.mrb[0].mxu0
    %v3646 = vadd.f32 %v3533, %v3645
    %v3647 = vpop.f32.mrb[0].mxu0
    %v3648 = vadd.f32 %v3535, %v3647
    %v3649 = vpop.f32.mrb[0].mxu0
    %v3650 = vadd.f32 %v3537, %v3649
    %3651 = vmatprep.mubr.bf16.mxu0 %v1077
    %3652 = vmatmul.mubr.bf16.gmra.mrb[0].mxu0 %v1076
    %v3653 = vpop.f32.mrb[0].mxu0
    %v3654 = vadd.f32 %v3541, %v3653
    %v3655 = vpop.f32.mrb[0].mxu0
    %v3656 = vadd.f32 %v3543, %v3655
    %v3657 = vpop.f32.mrb[0].mxu0
    %v3658 = vadd.f32 %v3545, %v3657
    %v3659 = vpop.f32.mrb[0].mxu0
    %v3660 = vadd.f32 %v3547, %v3659
    %3661 = vdwg.mxu0
    %3662 = vmatprep.subr.bf16.mxu0 %v2601
    %3663 = vmatpush1.bf16.msra.mxu0 %v2600
    %3664 = vmatprep.subr.bf16.mxu0 %v2604
    %3665 = vmatpush1.bf16.msra.mxu0 %v2603
    %3666 = vmatprep.subr.bf16.mxu0 %v2607
    %3667 = vmatpush1.bf16.msra.mxu0 %v2606
    %3668 = vmatprep.subr.bf16.mxu0 %v2610
    %3669 = vmatpush1.bf16.msra.mxu0 %v2609
    %3670 = vmatprep.subr.bf16.mxu0 %v2613
    %3671 = vmatpush1.bf16.msra.mxu0 %v2612
    %3672 = vmatprep.subr.bf16.mxu0 %v2616
    %3673 = vmatpush1.bf16.msra.mxu0 %v2615
    %3674 = vmatprep.subr.bf16.mxu0 %v2619
    %3675 = vmatpush1.bf16.msra.mxu0 %v2618
    %3676 = vmatprep.subr.bf16.mxu0 %v2622
    %3677 = vmatpush1.bf16.msra.mxu0 %v2621
    %3678 = vmatprep.subr.bf16.mxu0 %v2625
    %3679 = vmatpush1.bf16.msra.mxu0 %v2624
    %3680 = vmatprep.subr.bf16.mxu0 %v2628
    %3681 = vmatpush1.bf16.msra.mxu0 %v2627
    %3682 = vmatprep.subr.bf16.mxu0 %v2631
    %3683 = vmatpush1.bf16.msra.mxu0 %v2630
    %3684 = vmatprep.subr.bf16.mxu0 %v2634
    %3685 = vmatpush1.bf16.msra.mxu0 %v2633
    %3686 = vmatprep.subr.bf16.mxu0 %v2637
    %3687 = vmatpush1.bf16.msra.mxu0 %v2636
    %3688 = vmatprep.subr.bf16.mxu0 %v2640
    %3689 = vmatpush1.bf16.msra.mxu0 %v2639
    %3690 = vmatprep.subr.bf16.mxu0 %v2643
    %3691 = vmatpush1.bf16.msra.mxu0 %v2642
    %3692 = vmatprep.subr.bf16.mxu0 %v2646
    %3693 = vmatpush1.bf16.msra.mxu0 %v2645
    %3694 = vmatprep.mubr.bf16.mxu0 %v981
    %3695 = vmatmul.mubr.bf16.gmra.mrb[0].mxu0 %v980
    %v3696 = vpop.f32.mrb[0].mxu0
    %v3697 = vadd.f32 %v3584, %v3696
    %v3698 = vpop.f32.mrb[0].mxu0
    %v3699 = vadd.f32 %v3586, %v3698
    %v3700 = vpop.f32.mrb[0].mxu0
    %v3701 = vadd.f32 %v3588, %v3700
    %v3702 = vpop.f32.mrb[0].mxu0
    %v3703 = vadd.f32 %v3590, %v3702
    %3704 = vmatprep.mubr.bf16.mxu0 %v995
    %3705 = vmatmul.mubr.bf16.gmra.mrb[0].mxu0 %v994
    %v3706 = vpop.f32.mrb[0].mxu0
    %v3707 = vadd.f32 %v3594, %v3706
    %v3708 = vpop.f32.mrb[0].mxu0
    %v3709 = vadd.f32 %v3596, %v3708
    %v3710 = vpop.f32.mrb[0].mxu0
    %v3711 = vadd.f32 %v3598, %v3710
    %v3712 = vpop.f32.mrb[0].mxu0
    %v3713 = vadd.f32 %v3600, %v3712
    %3714 = vmatprep.mubr.bf16.mxu0 %v1009
    %3715 = vmatmul.mubr.bf16.gmra.mrb[0].mxu0 %v1008
    %v3716 = vpop.f32.mrb[0].mxu0
    %v3717 = vadd.f32 %v3604, %v3716
    %v3718 = vpop.f32.mrb[0].mxu0
    %v3719 = vadd.f32 %v3606, %v3718
    %v3720 = vpop.f32.mrb[0].mxu0
    %v3721 = vadd.f32 %v3608, %v3720
    %v3722 = vpop.f32.mrb[0].mxu0
    %v3723 = vadd.f32 %v3610, %v3722
    %3724 = vmatprep.mubr.bf16.mxu0 %v1023
    %3725 = vmatmul.mubr.bf16.gmra.mrb[0].mxu0 %v1022
    %v3726 = vpop.f32.mrb[0].mxu0
    %v3727 = vadd.f32 %v3614, %v3726
    %v3728 = vpop.f32.mrb[0].mxu0
    %v3729 = vadd.f32 %v3616, %v3728
    %v3730 = vpop.f32.mrb[0].mxu0
    %v3731 = vadd.f32 %v3618, %v3730
    %v3732 = vpop.f32.mrb[0].mxu0
    %v3733 = vadd.f32 %v3620, %v3732
    %3734 = vmatprep.mubr.bf16.mxu0 %v1037
    %3735 = vmatmul.mubr.bf16.gmra.mrb[0].mxu0 %v1036
    %v3736 = vpop.f32.mrb[0].mxu0
    %v3737 = vadd.f32 %v3624, %v3736
    %v3738 = vpop.f32.mrb[0].mxu0
    %v3739 = vadd.f32 %v3626, %v3738
    %v3740 = vpop.f32.mrb[0].mxu0
    %v3741 = vadd.f32 %v3628, %v3740
    %v3742 = vpop.f32.mrb[0].mxu0
    %v3743 = vadd.f32 %v3630, %v3742
    %3744 = vmatprep.mubr.bf16.mxu0 %v1051
    %3745 = vmatmul.mubr.bf16.gmra.mrb[0].mxu0 %v1050
    %v3746 = vpop.f32.mrb[0].mxu0
    %v3747 = vadd.f32 %v3634, %v3746
    %v3748 = vpop.f32.mrb[0].mxu0
    %v3749 = vadd.f32 %v3636, %v3748
    %v3750 = vpop.f32.mrb[0].mxu0
    %v3751 = vadd.f32 %v3638, %v3750
    %v3752 = vpop.f32.mrb[0].mxu0
    %v3753 = vadd.f32 %v3640, %v3752
    %3754 = vmatprep.mubr.bf16.mxu0 %v1065
    %3755 = vmatmul.mubr.bf16.gmra.mrb[0].mxu0 %v1064
    %v3756 = vpop.f32.mrb[0].mxu0
    %v3757 = vadd.f32 %v3644, %v3756
    %v3758 = vpop.f32.mrb[0].mxu0
    %v3759 = vadd.f32 %v3646, %v3758
    %v3760 = vpop.f32.mrb[0].mxu0
    %v3761 = vadd.f32 %v3648, %v3760
    %v3762 = vpop.f32.mrb[0].mxu0
    %v3763 = vadd.f32 %v3650, %v3762
    %3764 = vmatprep.mubr.bf16.mxu0 %v1079
    %3765 = vmatmul.mubr.bf16.gmra.mrb[0].mxu0 %v1078
    %v3766 = vpop.f32.mrb[0].mxu0
    %v3767 = vadd.f32 %v3654, %v3766
    %v3768 = vpop.f32.mrb[0].mxu0
    %v3769 = vadd.f32 %v3656, %v3768
    %v3770 = vpop.f32.mrb[0].mxu0
    %v3771 = vadd.f32 %v3658, %v3770
    %v3772 = vpop.f32.mrb[0].mxu0
    %v3773 = vadd.f32 %v3660, %v3772
    %3774 = vdwg.mxu0
    %3775 = vmatprep.subr.bf16.mxu0 0
    %3776 = vmatpush1.bf16.msra.mxu0 %v2314
    %3777 = vmatprep.subr.bf16.mxu0 0
    %3778 = vmatpush1.bf16.msra.mxu0 %v2317
    %3779 = vmatprep.subr.bf16.mxu0 0
    %3780 = vmatpush1.bf16.msra.mxu0 %v2320
    %3781 = vmatprep.subr.bf16.mxu0 0
    %3782 = vmatpush1.bf16.msra.mxu0 %v2323
    %3783 = vmatprep.subr.bf16.mxu0 0
    %3784 = vmatpush1.bf16.msra.mxu0 %v2326
    %3785 = vmatprep.subr.bf16.mxu0 0
    %3786 = vmatpush1.bf16.msra.mxu0 %v2329
    %3787 = vmatprep.subr.bf16.mxu0 0
    %3788 = vmatpush1.bf16.msra.mxu0 %v2332
    %3789 = vmatprep.subr.bf16.mxu0 0
    %3790 = vmatpush1.bf16.msra.mxu0 %v2335
    %3791 = vmatprep.subr.bf16.mxu0 0
    %3792 = vmatpush1.bf16.msra.mxu0 %v2338
    %3793 = vmatprep.subr.bf16.mxu0 0
    %3794 = vmatpush1.bf16.msra.mxu0 %v2341
    %3795 = vmatprep.subr.bf16.mxu0 0
    %3796 = vmatpush1.bf16.msra.mxu0 %v2344
    %3797 = vmatprep.subr.bf16.mxu0 0
    %3798 = vmatpush1.bf16.msra.mxu0 %v2347
    %3799 = vmatprep.subr.bf16.mxu0 0
    %3800 = vmatpush1.bf16.msra.mxu0 %v2350
    %3801 = vmatprep.subr.bf16.mxu0 0
    %3802 = vmatpush1.bf16.msra.mxu0 %v2353
    %3803 = vmatprep.subr.bf16.mxu0 0
    %3804 = vmatpush1.bf16.msra.mxu0 %v2356
    %3805 = vmatprep.subr.bf16.mxu0 0
    %3806 = vmatpush1.bf16.msra.mxu0 %v2359
    %3807 = vmatprep.mubr.bf16.mxu0 %v969
    %3808 = vmatmul.mubr.bf16.gmra.mrb[0].mxu0 %v968
    %v3809 = vpop.f32.mrb[0].mxu0
    %v3810 = vadd.f32 %v628, %v3809
    %v3811 = vpop.f32.mrb[0].mxu0
    %v3812 = vpop.f32.mrb[0].mxu0
    %v3813 = vadd.f32 %v628, %v3812
    %v3814 = vpop.f32.mrb[0].mxu0
    %3815 = vmatprep.mubr.bf16.mxu0 %v983
    %3816 = vmatmul.mubr.bf16.gmra.mrb[0].mxu0 %v982
    %v3817 = vpop.f32.mrb[0].mxu0
    %v3818 = vadd.f32 %v628, %v3817
    %v3819 = vpop.f32.mrb[0].mxu0
    %v3820 = vpop.f32.mrb[0].mxu0
    %v3821 = vadd.f32 %v628, %v3820
    %v3822 = vpop.f32.mrb[0].mxu0
    %3823 = vmatprep.mubr.bf16.mxu0 %v997
    %3824 = vmatmul.mubr.bf16.gmra.mrb[0].mxu0 %v996
    %v3825 = vpop.f32.mrb[0].mxu0
    %v3826 = vadd.f32 %v628, %v3825
    %v3827 = vpop.f32.mrb[0].mxu0
    %v3828 = vpop.f32.mrb[0].mxu0
    %v3829 = vadd.f32 %v628, %v3828
    %v3830 = vpop.f32.mrb[0].mxu0
    %3831 = vmatprep.mubr.bf16.mxu0 %v1011
    %3832 = vmatmul.mubr.bf16.gmra.mrb[0].mxu0 %v1010
    %v3833 = vpop.f32.mrb[0].mxu0
    %v3834 = vadd.f32 %v628, %v3833
    %v3835 = vpop.f32.mrb[0].mxu0
    %v3836 = vpop.f32.mrb[0].mxu0
    %v3837 = vadd.f32 %v628, %v3836
    %v3838 = vpop.f32.mrb[0].mxu0
    %3839 = vmatprep.mubr.bf16.mxu0 %v1025
    %3840 = vmatmul.mubr.bf16.gmra.mrb[0].mxu0 %v1024
    %v3841 = vpop.f32.mrb[0].mxu0
    %v3842 = vadd.f32 %v628, %v3841
    %v3843 = vpop.f32.mrb[0].mxu0
    %v3844 = vpop.f32.mrb[0].mxu0
    %v3845 = vadd.f32 %v628, %v3844
    %v3846 = vpop.f32.mrb[0].mxu0
    %3847 = vmatprep.mubr.bf16.mxu0 %v1039
    %3848 = vmatmul.mubr.bf16.gmra.mrb[0].mxu0 %v1038
    %v3849 = vpop.f32.mrb[0].mxu0
    %v3850 = vadd.f32 %v628, %v3849
    %v3851 = vpop.f32.mrb[0].mxu0
    %v3852 = vpop.f32.mrb[0].mxu0
    %v3853 = vadd.f32 %v628, %v3852
    %v3854 = vpop.f32.mrb[0].mxu0
    %3855 = vmatprep.mubr.bf16.mxu0 %v1053
    %3856 = vmatmul.mubr.bf16.gmra.mrb[0].mxu0 %v1052
    %v3857 = vpop.f32.mrb[0].mxu0
    %v3858 = vadd.f32 %v628, %v3857
    %v3859 = vpop.f32.mrb[0].mxu0
    %v3860 = vpop.f32.mrb[0].mxu0
    %v3861 = vadd.f32 %v628, %v3860
    %v3862 = vpop.f32.mrb[0].mxu0
    %3863 = vmatprep.mubr.bf16.mxu0 %v1067
    %3864 = vmatmul.mubr.bf16.gmra.mrb[0].mxu0 %v1066
    %v3865 = vpop.f32.mrb[0].mxu0
    %v3866 = vadd.f32 %v628, %v3865
    %v3867 = vpop.f32.mrb[0].mxu0
    %v3868 = vpop.f32.mrb[0].mxu0
    %v3869 = vadd.f32 %v628, %v3868
    %v3870 = vpop.f32.mrb[0].mxu0
    %3871 = vdwg.mxu0
    %3872 = vmatprep.subr.bf16.mxu0 0
    %3873 = vmatpush1.bf16.msra.mxu0 %v2362
    %3874 = vmatprep.subr.bf16.mxu0 0
    %3875 = vmatpush1.bf16.msra.mxu0 %v2365
    %3876 = vmatprep.subr.bf16.mxu0 0
    %3877 = vmatpush1.bf16.msra.mxu0 %v2368
    %3878 = vmatprep.subr.bf16.mxu0 0
    %3879 = vmatpush1.bf16.msra.mxu0 %v2371
    %3880 = vmatprep.subr.bf16.mxu0 0
    %3881 = vmatpush1.bf16.msra.mxu0 %v2374
    %3882 = vmatprep.subr.bf16.mxu0 0
    %3883 = vmatpush1.bf16.msra.mxu0 %v2377
    %3884 = vmatprep.subr.bf16.mxu0 0
    %3885 = vmatpush1.bf16.msra.mxu0 %v2380
    %3886 = vmatprep.subr.bf16.mxu0 0
    %3887 = vmatpush1.bf16.msra.mxu0 %v2383
    %3888 = vmatprep.subr.bf16.mxu0 0
    %3889 = vmatpush1.bf16.msra.mxu0 %v2386
    %3890 = vmatprep.subr.bf16.mxu0 0
    %3891 = vmatpush1.bf16.msra.mxu0 %v2389
    %3892 = vmatprep.subr.bf16.mxu0 0
    %3893 = vmatpush1.bf16.msra.mxu0 %v2392
    %3894 = vmatprep.subr.bf16.mxu0 0
    %3895 = vmatpush1.bf16.msra.mxu0 %v2395
    %3896 = vmatprep.subr.bf16.mxu0 0
    %3897 = vmatpush1.bf16.msra.mxu0 %v2398
    %3898 = vmatprep.subr.bf16.mxu0 0
    %3899 = vmatpush1.bf16.msra.mxu0 %v2401
    %3900 = vmatprep.subr.bf16.mxu0 0
    %3901 = vmatpush1.bf16.msra.mxu0 %v2404
    %3902 = vmatprep.subr.bf16.mxu0 0
    %3903 = vmatpush1.bf16.msra.mxu0 %v2407
    %3904 = vmatprep.mubr.bf16.mxu0 %v971
    %3905 = vmatmul.mubr.bf16.gmra.mrb[0].mxu0 %v970
    %v3906 = vpop.f32.mrb[0].mxu0
    %v3907 = vadd.f32 %v3810, %v3906
    %v3908 = vpop.f32.mrb[0].mxu0
    %v3909 = vpop.f32.mrb[0].mxu0
    %v3910 = vadd.f32 %v3813, %v3909
    %v3911 = vpop.f32.mrb[0].mxu0
    %3912 = vmatprep.mubr.bf16.mxu0 %v985
    %3913 = vmatmul.mubr.bf16.gmra.mrb[0].mxu0 %v984
    %v3914 = vpop.f32.mrb[0].mxu0
    %v3915 = vadd.f32 %v3818, %v3914
    %v3916 = vpop.f32.mrb[0].mxu0
    %v3917 = vpop.f32.mrb[0].mxu0
    %v3918 = vadd.f32 %v3821, %v3917
    %v3919 = vpop.f32.mrb[0].mxu0
    %3920 = vmatprep.mubr.bf16.mxu0 %v999
    %3921 = vmatmul.mubr.bf16.gmra.mrb[0].mxu0 %v998
    %v3922 = vpop.f32.mrb[0].mxu0
    %v3923 = vadd.f32 %v3826, %v3922
    %v3924 = vpop.f32.mrb[0].mxu0
    %v3925 = vpop.f32.mrb[0].mxu0
    %v3926 = vadd.f32 %v3829, %v3925
    %v3927 = vpop.f32.mrb[0].mxu0
    %3928 = vmatprep.mubr.bf16.mxu0 %v1013
    %3929 = vmatmul.mubr.bf16.gmra.mrb[0].mxu0 %v1012
    %v3930 = vpop.f32.mrb[0].mxu0
    %v3931 = vadd.f32 %v3834, %v3930
    %v3932 = vpop.f32.mrb[0].mxu0
    %v3933 = vpop.f32.mrb[0].mxu0
    %v3934 = vadd.f32 %v3837, %v3933
    %v3935 = vpop.f32.mrb[0].mxu0
    %3936 = vmatprep.mubr.bf16.mxu0 %v1027
    %3937 = vmatmul.mubr.bf16.gmra.mrb[0].mxu0 %v1026
    %v3938 = vpop.f32.mrb[0].mxu0
    %v3939 = vadd.f32 %v3842, %v3938
    %v3940 = vpop.f32.mrb[0].mxu0
    %v3941 = vpop.f32.mrb[0].mxu0
    %v3942 = vadd.f32 %v3845, %v3941
    %v3943 = vpop.f32.mrb[0].mxu0
    %3944 = vmatprep.mubr.bf16.mxu0 %v1041
    %3945 = vmatmul.mubr.bf16.gmra.mrb[0].mxu0 %v1040
    %v3946 = vpop.f32.mrb[0].mxu0
    %v3947 = vadd.f32 %v3850, %v3946
    %v3948 = vpop.f32.mrb[0].mxu0
    %v3949 = vpop.f32.mrb[0].mxu0
    %v3950 = vadd.f32 %v3853, %v3949
    %v3951 = vpop.f32.mrb[0].mxu0
    %3952 = vmatprep.mubr.bf16.mxu0 %v1055
    %3953 = vmatmul.mubr.bf16.gmra.mrb[0].mxu0 %v1054
    %v3954 = vpop.f32.mrb[0].mxu0
    %v3955 = vadd.f32 %v3858, %v3954
    %v3956 = vpop.f32.mrb[0].mxu0
    %v3957 = vpop.f32.mrb[0].mxu0
    %v3958 = vadd.f32 %v3861, %v3957
    %v3959 = vpop.f32.mrb[0].mxu0
    %3960 = vmatprep.mubr.bf16.mxu0 %v1069
    %3961 = vmatmul.mubr.bf16.gmra.mrb[0].mxu0 %v1068
    %v3962 = vpop.f32.mrb[0].mxu0
    %v3963 = vadd.f32 %v3866, %v3962
    %v3964 = vpop.f32.mrb[0].mxu0
    %v3965 = vpop.f32.mrb[0].mxu0
    %v3966 = vadd.f32 %v3869, %v3965
    %v3967 = vpop.f32.mrb[0].mxu0
    %3968 = vdwg.mxu0
    %3969 = vmatprep.subr.bf16.mxu0 0
    %3970 = vmatpush1.bf16.msra.mxu0 %v2410
    %3971 = vmatprep.subr.bf16.mxu0 0
    %3972 = vmatpush1.bf16.msra.mxu0 %v2413
    %3973 = vmatprep.subr.bf16.mxu0 0
    %3974 = vmatpush1.bf16.msra.mxu0 %v2416
    %3975 = vmatprep.subr.bf16.mxu0 0
    %3976 = vmatpush1.bf16.msra.mxu0 %v2419
    %3977 = vmatprep.subr.bf16.mxu0 0
    %3978 = vmatpush1.bf16.msra.mxu0 %v2422
    %3979 = vmatprep.subr.bf16.mxu0 0
    %3980 = vmatpush1.bf16.msra.mxu0 %v2425
    %3981 = vmatprep.subr.bf16.mxu0 0
    %3982 = vmatpush1.bf16.msra.mxu0 %v2428
    %3983 = vmatprep.subr.bf16.mxu0 0
    %3984 = vmatpush1.bf16.msra.mxu0 %v2431
    %3985 = vmatprep.subr.bf16.mxu0 0
    %3986 = vmatpush1.bf16.msra.mxu0 %v2434
    %3987 = vmatprep.subr.bf16.mxu0 0
    %3988 = vmatpush1.bf16.msra.mxu0 %v2437
    %3989 = vmatprep.subr.bf16.mxu0 0
    %3990 = vmatpush1.bf16.msra.mxu0 %v2440
    %3991 = vmatprep.subr.bf16.mxu0 0
    %3992 = vmatpush1.bf16.msra.mxu0 %v2443
    %3993 = vmatprep.subr.bf16.mxu0 0
    %3994 = vmatpush1.bf16.msra.mxu0 %v2446
    %3995 = vmatprep.subr.bf16.mxu0 0
    %3996 = vmatpush1.bf16.msra.mxu0 %v2449
    %3997 = vmatprep.subr.bf16.mxu0 0
    %3998 = vmatpush1.bf16.msra.mxu0 %v2452
    %3999 = vmatprep.subr.bf16.mxu0 0
    %4000 = vmatpush1.bf16.msra.mxu0 %v2455
    %4001 = vmatprep.mubr.bf16.mxu0 %v973
    %4002 = vmatmul.mubr.bf16.gmra.mrb[0].mxu0 %v972
    %v4003 = vpop.f32.mrb[0].mxu0
    %v4004 = vadd.f32 %v3907, %v4003
    %v4005 = vpop.f32.mrb[0].mxu0
    %v4006 = vpop.f32.mrb[0].mxu0
    %v4007 = vadd.f32 %v3910, %v4006
    %v4008 = vpop.f32.mrb[0].mxu0
    %4009 = vmatprep.mubr.bf16.mxu0 %v987
    %4010 = vmatmul.mubr.bf16.gmra.mrb[0].mxu0 %v986
    %v4011 = vpop.f32.mrb[0].mxu0
    %v4012 = vadd.f32 %v3915, %v4011
    %v4013 = vpop.f32.mrb[0].mxu0
    %v4014 = vpop.f32.mrb[0].mxu0
    %v4015 = vadd.f32 %v3918, %v4014
    %v4016 = vpop.f32.mrb[0].mxu0
    %4017 = vmatprep.mubr.bf16.mxu0 %v1001
    %4018 = vmatmul.mubr.bf16.gmra.mrb[0].mxu0 %v1000
    %v4019 = vpop.f32.mrb[0].mxu0
    %v4020 = vadd.f32 %v3923, %v4019
    %v4021 = vpop.f32.mrb[0].mxu0
    %v4022 = vpop.f32.mrb[0].mxu0
    %v4023 = vadd.f32 %v3926, %v4022
    %v4024 = vpop.f32.mrb[0].mxu0
    %4025 = vmatprep.mubr.bf16.mxu0 %v1015
    %4026 = vmatmul.mubr.bf16.gmra.mrb[0].mxu0 %v1014
    %v4027 = vpop.f32.mrb[0].mxu0
    %v4028 = vadd.f32 %v3931, %v4027
    %v4029 = vpop.f32.mrb[0].mxu0
    %v4030 = vpop.f32.mrb[0].mxu0
    %v4031 = vadd.f32 %v3934, %v4030
    %v4032 = vpop.f32.mrb[0].mxu0
    %4033 = vmatprep.mubr.bf16.mxu0 %v1029
    %4034 = vmatmul.mubr.bf16.gmra.mrb[0].mxu0 %v1028
    %v4035 = vpop.f32.mrb[0].mxu0
    %v4036 = vadd.f32 %v3939, %v4035
    %v4037 = vpop.f32.mrb[0].mxu0
    %v4038 = vpop.f32.mrb[0].mxu0
    %v4039 = vadd.f32 %v3942, %v4038
    %v4040 = vpop.f32.mrb[0].mxu0
    %4041 = vmatprep.mubr.bf16.mxu0 %v1043
    %4042 = vmatmul.mubr.bf16.gmra.mrb[0].mxu0 %v1042
    %v4043 = vpop.f32.mrb[0].mxu0
    %v4044 = vadd.f32 %v3947, %v4043
    %v4045 = vpop.f32.mrb[0].mxu0
    %v4046 = vpop.f32.mrb[0].mxu0
    %v4047 = vadd.f32 %v3950, %v4046
    %v4048 = vpop.f32.mrb[0].mxu0
    %4049 = vmatprep.mubr.bf16.mxu0 %v1057
    %4050 = vmatmul.mubr.bf16.gmra.mrb[0].mxu0 %v1056
    %v4051 = vpop.f32.mrb[0].mxu0
    %v4052 = vadd.f32 %v3955, %v4051
    %v4053 = vpop.f32.mrb[0].mxu0
    %v4054 = vpop.f32.mrb[0].mxu0
    %v4055 = vadd.f32 %v3958, %v4054
    %v4056 = vpop.f32.mrb[0].mxu0
    %4057 = vmatprep.mubr.bf16.mxu0 %v1071
    %4058 = vmatmul.mubr.bf16.gmra.mrb[0].mxu0 %v1070
    %v4059 = vpop.f32.mrb[0].mxu0
    %v4060 = vadd.f32 %v3963, %v4059
    %v4061 = vpop.f32.mrb[0].mxu0
    %v4062 = vpop.f32.mrb[0].mxu0
    %v4063 = vadd.f32 %v3966, %v4062
    %v4064 = vpop.f32.mrb[0].mxu0
    %4065 = vdwg.mxu0
    %4066 = vmatprep.subr.bf16.mxu0 0
    %4067 = vmatpush1.bf16.msra.mxu0 %v2458
    %4068 = vmatprep.subr.bf16.mxu0 0
    %4069 = vmatpush1.bf16.msra.mxu0 %v2461
    %4070 = vmatprep.subr.bf16.mxu0 0
    %4071 = vmatpush1.bf16.msra.mxu0 %v2464
    %4072 = vmatprep.subr.bf16.mxu0 0
    %4073 = vmatpush1.bf16.msra.mxu0 %v2467
    %4074 = vmatprep.subr.bf16.mxu0 0
    %4075 = vmatpush1.bf16.msra.mxu0 %v2470
    %4076 = vmatprep.subr.bf16.mxu0 0
    %4077 = vmatpush1.bf16.msra.mxu0 %v2473
    %4078 = vmatprep.subr.bf16.mxu0 0
    %4079 = vmatpush1.bf16.msra.mxu0 %v2476
    %4080 = vmatprep.subr.bf16.mxu0 0
    %4081 = vmatpush1.bf16.msra.mxu0 %v2479
    %4082 = vmatprep.subr.bf16.mxu0 0
    %4083 = vmatpush1.bf16.msra.mxu0 %v2482
    %4084 = vmatprep.subr.bf16.mxu0 0
    %4085 = vmatpush1.bf16.msra.mxu0 %v2485
    %4086 = vmatprep.subr.bf16.mxu0 0
    %4087 = vmatpush1.bf16.msra.mxu0 %v2488
    %4088 = vmatprep.subr.bf16.mxu0 0
    %4089 = vmatpush1.bf16.msra.mxu0 %v2491
    %4090 = vmatprep.subr.bf16.mxu0 0
    %4091 = vmatpush1.bf16.msra.mxu0 %v2494
    %4092 = vmatprep.subr.bf16.mxu0 0
    %4093 = vmatpush1.bf16.msra.mxu0 %v2497
    %4094 = vmatprep.subr.bf16.mxu0 0
    %4095 = vmatpush1.bf16.msra.mxu0 %v2500
    %4096 = vmatprep.subr.bf16.mxu0 0
    %4097 = vmatpush1.bf16.msra.mxu0 %v2503
    %4098 = vmatprep.mubr.bf16.mxu0 %v975
    %4099 = vmatmul.mubr.bf16.gmra.mrb[0].mxu0 %v974
    %v4100 = vpop.f32.mrb[0].mxu0
    %v4101 = vadd.f32 %v4004, %v4100
    %v4102 = vpop.f32.mrb[0].mxu0
    %v4103 = vpop.f32.mrb[0].mxu0
    %v4104 = vadd.f32 %v4007, %v4103
    %v4105 = vpop.f32.mrb[0].mxu0
    %4106 = vmatprep.mubr.bf16.mxu0 %v989
    %4107 = vmatmul.mubr.bf16.gmra.mrb[0].mxu0 %v988
    %v4108 = vpop.f32.mrb[0].mxu0
    %v4109 = vadd.f32 %v4012, %v4108
    %v4110 = vpop.f32.mrb[0].mxu0
    %v4111 = vpop.f32.mrb[0].mxu0
    %v4112 = vadd.f32 %v4015, %v4111
    %v4113 = vpop.f32.mrb[0].mxu0
    %4114 = vmatprep.mubr.bf16.mxu0 %v1003
    %4115 = vmatmul.mubr.bf16.gmra.mrb[0].mxu0 %v1002
    %v4116 = vpop.f32.mrb[0].mxu0
    %v4117 = vadd.f32 %v4020, %v4116
    %v4118 = vpop.f32.mrb[0].mxu0
    %v4119 = vpop.f32.mrb[0].mxu0
    %v4120 = vadd.f32 %v4023, %v4119
    %v4121 = vpop.f32.mrb[0].mxu0
    %4122 = vmatprep.mubr.bf16.mxu0 %v1017
    %4123 = vmatmul.mubr.bf16.gmra.mrb[0].mxu0 %v1016
    %v4124 = vpop.f32.mrb[0].mxu0
    %v4125 = vadd.f32 %v4028, %v4124
    %v4126 = vpop.f32.mrb[0].mxu0
    %v4127 = vpop.f32.mrb[0].mxu0
    %v4128 = vadd.f32 %v4031, %v4127
    %v4129 = vpop.f32.mrb[0].mxu0
    %4130 = vmatprep.mubr.bf16.mxu0 %v1031
    %4131 = vmatmul.mubr.bf16.gmra.mrb[0].mxu0 %v1030
    %v4132 = vpop.f32.mrb[0].mxu0
    %v4133 = vadd.f32 %v4036, %v4132
    %v4134 = vpop.f32.mrb[0].mxu0
    %v4135 = vpop.f32.mrb[0].mxu0
    %v4136 = vadd.f32 %v4039, %v4135
    %v4137 = vpop.f32.mrb[0].mxu0
    %4138 = vmatprep.mubr.bf16.mxu0 %v1045
    %4139 = vmatmul.mubr.bf16.gmra.mrb[0].mxu0 %v1044
    %v4140 = vpop.f32.mrb[0].mxu0
    %v4141 = vadd.f32 %v4044, %v4140
    %v4142 = vpop.f32.mrb[0].mxu0
    %v4143 = vpop.f32.mrb[0].mxu0
    %v4144 = vadd.f32 %v4047, %v4143
    %v4145 = vpop.f32.mrb[0].mxu0
    %4146 = vmatprep.mubr.bf16.mxu0 %v1059
    %4147 = vmatmul.mubr.bf16.gmra.mrb[0].mxu0 %v1058
    %v4148 = vpop.f32.mrb[0].mxu0
    %v4149 = vadd.f32 %v4052, %v4148
    %v4150 = vpop.f32.mrb[0].mxu0
    %v4151 = vpop.f32.mrb[0].mxu0
    %v4152 = vadd.f32 %v4055, %v4151
    %v4153 = vpop.f32.mrb[0].mxu0
    %4154 = vmatprep.mubr.bf16.mxu0 %v1073
    %4155 = vmatmul.mubr.bf16.gmra.mrb[0].mxu0 %v1072
    %v4156 = vpop.f32.mrb[0].mxu0
    %v4157 = vadd.f32 %v4060, %v4156
    %v4158 = vpop.f32.mrb[0].mxu0
    %v4159 = vpop.f32.mrb[0].mxu0
    %v4160 = vadd.f32 %v4063, %v4159
    %v4161 = vpop.f32.mrb[0].mxu0
    %4162 = vdwg.mxu0
    %4163 = vmatprep.subr.bf16.mxu0 0
    %4164 = vmatpush1.bf16.msra.mxu0 %v2506
    %4165 = vmatprep.subr.bf16.mxu0 0
    %4166 = vmatpush1.bf16.msra.mxu0 %v2509
    %4167 = vmatprep.subr.bf16.mxu0 0
    %4168 = vmatpush1.bf16.msra.mxu0 %v2512
    %4169 = vmatprep.subr.bf16.mxu0 0
    %4170 = vmatpush1.bf16.msra.mxu0 %v2515
    %4171 = vmatprep.subr.bf16.mxu0 0
    %4172 = vmatpush1.bf16.msra.mxu0 %v2518
    %4173 = vmatprep.subr.bf16.mxu0 0
    %4174 = vmatpush1.bf16.msra.mxu0 %v2521
    %4175 = vmatprep.subr.bf16.mxu0 0
    %4176 = vmatpush1.bf16.msra.mxu0 %v2524
    %4177 = vmatprep.subr.bf16.mxu0 0
    %4178 = vmatpush1.bf16.msra.mxu0 %v2527
    %4179 = vmatprep.subr.bf16.mxu0 0
    %4180 = vmatpush1.bf16.msra.mxu0 %v2530
    %4181 = vmatprep.subr.bf16.mxu0 0
    %4182 = vmatpush1.bf16.msra.mxu0 %v2533
    %4183 = vmatprep.subr.bf16.mxu0 0
    %4184 = vmatpush1.bf16.msra.mxu0 %v2536
    %4185 = vmatprep.subr.bf16.mxu0 0
    %4186 = vmatpush1.bf16.msra.mxu0 %v2539
    %4187 = vmatprep.subr.bf16.mxu0 0
    %4188 = vmatpush1.bf16.msra.mxu0 %v2542
    %4189 = vmatprep.subr.bf16.mxu0 0
    %4190 = vmatpush1.bf16.msra.mxu0 %v2545
    %4191 = vmatprep.subr.bf16.mxu0 0
    %4192 = vmatpush1.bf16.msra.mxu0 %v2548
    %4193 = vmatprep.subr.bf16.mxu0 0
    %4194 = vmatpush1.bf16.msra.mxu0 %v2551
    %4195 = vmatprep.mubr.bf16.mxu0 %v977
    %4196 = vmatmul.mubr.bf16.gmra.mrb[0].mxu0 %v976
    %v4197 = vpop.f32.mrb[0].mxu0
    %v4198 = vadd.f32 %v4101, %v4197
    %v4199 = vpop.f32.mrb[0].mxu0
    %v4200 = vpop.f32.mrb[0].mxu0
    %v4201 = vadd.f32 %v4104, %v4200
    %v4202 = vpop.f32.mrb[0].mxu0
    %4203 = vmatprep.mubr.bf16.mxu0 %v991
    %4204 = vmatmul.mubr.bf16.gmra.mrb[0].mxu0 %v990
    %v4205 = vpop.f32.mrb[0].mxu0
    %v4206 = vadd.f32 %v4109, %v4205
    %v4207 = vpop.f32.mrb[0].mxu0
    %v4208 = vpop.f32.mrb[0].mxu0
    %v4209 = vadd.f32 %v4112, %v4208
    %v4210 = vpop.f32.mrb[0].mxu0
    %4211 = vmatprep.mubr.bf16.mxu0 %v1005
    %4212 = vmatmul.mubr.bf16.gmra.mrb[0].mxu0 %v1004
    %v4213 = vpop.f32.mrb[0].mxu0
    %v4214 = vadd.f32 %v4117, %v4213
    %v4215 = vpop.f32.mrb[0].mxu0
    %v4216 = vpop.f32.mrb[0].mxu0
    %v4217 = vadd.f32 %v4120, %v4216
    %v4218 = vpop.f32.mrb[0].mxu0
    %4219 = vmatprep.mubr.bf16.mxu0 %v1019
    %4220 = vmatmul.mubr.bf16.gmra.mrb[0].mxu0 %v1018
    %v4221 = vpop.f32.mrb[0].mxu0
    %v4222 = vadd.f32 %v4125, %v4221
    %v4223 = vpop.f32.mrb[0].mxu0
    %v4224 = vpop.f32.mrb[0].mxu0
    %v4225 = vadd.f32 %v4128, %v4224
    %v4226 = vpop.f32.mrb[0].mxu0
    %4227 = vmatprep.mubr.bf16.mxu0 %v1033
    %4228 = vmatmul.mubr.bf16.gmra.mrb[0].mxu0 %v1032
    %v4229 = vpop.f32.mrb[0].mxu0
    %v4230 = vadd.f32 %v4133, %v4229
    %v4231 = vpop.f32.mrb[0].mxu0
    %v4232 = vpop.f32.mrb[0].mxu0
    %v4233 = vadd.f32 %v4136, %v4232
    %v4234 = vpop.f32.mrb[0].mxu0
    %4235 = vmatprep.mubr.bf16.mxu0 %v1047
    %4236 = vmatmul.mubr.bf16.gmra.mrb[0].mxu0 %v1046
    %v4237 = vpop.f32.mrb[0].mxu0
    %v4238 = vadd.f32 %v4141, %v4237
    %v4239 = vpop.f32.mrb[0].mxu0
    %v4240 = vpop.f32.mrb[0].mxu0
    %v4241 = vadd.f32 %v4144, %v4240
    %v4242 = vpop.f32.mrb[0].mxu0
    %4243 = vmatprep.mubr.bf16.mxu0 %v1061
    %4244 = vmatmul.mubr.bf16.gmra.mrb[0].mxu0 %v1060
    %v4245 = vpop.f32.mrb[0].mxu0
    %v4246 = vadd.f32 %v4149, %v4245
    %v4247 = vpop.f32.mrb[0].mxu0
    %v4248 = vpop.f32.mrb[0].mxu0
    %v4249 = vadd.f32 %v4152, %v4248
    %v4250 = vpop.f32.mrb[0].mxu0
    %4251 = vmatprep.mubr.bf16.mxu0 %v1075
    %4252 = vmatmul.mubr.bf16.gmra.mrb[0].mxu0 %v1074
    %v4253 = vpop.f32.mrb[0].mxu0
    %v4254 = vadd.f32 %v4157, %v4253
    %v4255 = vpop.f32.mrb[0].mxu0
    %v4256 = vpop.f32.mrb[0].mxu0
    %v4257 = vadd.f32 %v4160, %v4256
    %v4258 = vpop.f32.mrb[0].mxu0
    %4259 = vdwg.mxu0
    %4260 = vmatprep.subr.bf16.mxu0 0
    %4261 = vmatpush1.bf16.msra.mxu0 %v2554
    %4262 = vmatprep.subr.bf16.mxu0 0
    %4263 = vmatpush1.bf16.msra.mxu0 %v2557
    %4264 = vmatprep.subr.bf16.mxu0 0
    %4265 = vmatpush1.bf16.msra.mxu0 %v2560
    %4266 = vmatprep.subr.bf16.mxu0 0
    %4267 = vmatpush1.bf16.msra.mxu0 %v2563
    %4268 = vmatprep.subr.bf16.mxu0 0
    %4269 = vmatpush1.bf16.msra.mxu0 %v2566
    %4270 = vmatprep.subr.bf16.mxu0 0
    %4271 = vmatpush1.bf16.msra.mxu0 %v2569
    %4272 = vmatprep.subr.bf16.mxu0 0
    %4273 = vmatpush1.bf16.msra.mxu0 %v2572
    %4274 = vmatprep.subr.bf16.mxu0 0
    %4275 = vmatpush1.bf16.msra.mxu0 %v2575
    %4276 = vmatprep.subr.bf16.mxu0 0
    %4277 = vmatpush1.bf16.msra.mxu0 %v2578
    %4278 = vmatprep.subr.bf16.mxu0 0
    %4279 = vmatpush1.bf16.msra.mxu0 %v2581
    %4280 = vmatprep.subr.bf16.mxu0 0
    %4281 = vmatpush1.bf16.msra.mxu0 %v2584
    %4282 = vmatprep.subr.bf16.mxu0 0
    %4283 = vmatpush1.bf16.msra.mxu0 %v2587
    %4284 = vmatprep.subr.bf16.mxu0 0
    %4285 = vmatpush1.bf16.msra.mxu0 %v2590
    %4286 = vmatprep.subr.bf16.mxu0 0
    %4287 = vmatpush1.bf16.msra.mxu0 %v2593
    %4288 = vmatprep.subr.bf16.mxu0 0
    %4289 = vmatpush1.bf16.msra.mxu0 %v2596
    %4290 = vmatprep.subr.bf16.mxu0 0
    %4291 = vmatpush1.bf16.msra.mxu0 %v2599
    %4292 = vmatprep.mubr.bf16.mxu0 %v979
    %4293 = vmatmul.mubr.bf16.gmra.mrb[0].mxu0 %v978
    %v4294 = vpop.f32.mrb[0].mxu0
    %v4295 = vadd.f32 %v4198, %v4294
    %v4296 = vpop.f32.mrb[0].mxu0
    %v4297 = vpop.f32.mrb[0].mxu0
    %v4298 = vadd.f32 %v4201, %v4297
    %v4299 = vpop.f32.mrb[0].mxu0
    %4300 = vmatprep.mubr.bf16.mxu0 %v993
    %4301 = vmatmul.mubr.bf16.gmra.mrb[0].mxu0 %v992
    %v4302 = vpop.f32.mrb[0].mxu0
    %v4303 = vadd.f32 %v4206, %v4302
    %v4304 = vpop.f32.mrb[0].mxu0
    %v4305 = vpop.f32.mrb[0].mxu0
    %v4306 = vadd.f32 %v4209, %v4305
    %v4307 = vpop.f32.mrb[0].mxu0
    %4308 = vmatprep.mubr.bf16.mxu0 %v1007
    %4309 = vmatmul.mubr.bf16.gmra.mrb[0].mxu0 %v1006
    %v4310 = vpop.f32.mrb[0].mxu0
    %v4311 = vadd.f32 %v4214, %v4310
    %v4312 = vpop.f32.mrb[0].mxu0
    %v4313 = vpop.f32.mrb[0].mxu0
    %v4314 = vadd.f32 %v4217, %v4313
    %v4315 = vpop.f32.mrb[0].mxu0
    %4316 = vmatprep.mubr.bf16.mxu0 %v1021
    %4317 = vmatmul.mubr.bf16.gmra.mrb[0].mxu0 %v1020
    %v4318 = vpop.f32.mrb[0].mxu0
    %v4319 = vadd.f32 %v4222, %v4318
    %v4320 = vpop.f32.mrb[0].mxu0
    %v4321 = vpop.f32.mrb[0].mxu0
    %v4322 = vadd.f32 %v4225, %v4321
    %v4323 = vpop.f32.mrb[0].mxu0
    %4324 = vmatprep.mubr.bf16.mxu0 %v1035
    %4325 = vmatmul.mubr.bf16.gmra.mrb[0].mxu0 %v1034
    %v4326 = vpop.f32.mrb[0].mxu0
    %v4327 = vadd.f32 %v4230, %v4326
    %v4328 = vpop.f32.mrb[0].mxu0
    %v4329 = vpop.f32.mrb[0].mxu0
    %v4330 = vadd.f32 %v4233, %v4329
    %v4331 = vpop.f32.mrb[0].mxu0
    %4332 = vmatprep.mubr.bf16.mxu0 %v1049
    %4333 = vmatmul.mubr.bf16.gmra.mrb[0].mxu0 %v1048
    %v4334 = vpop.f32.mrb[0].mxu0
    %v4335 = vadd.f32 %v4238, %v4334
    %v4336 = vpop.f32.mrb[0].mxu0
    %v4337 = vpop.f32.mrb[0].mxu0
    %v4338 = vadd.f32 %v4241, %v4337
    %v4339 = vpop.f32.mrb[0].mxu0
    %4340 = vmatprep.mubr.bf16.mxu0 %v1063
    %4341 = vmatmul.mubr.bf16.gmra.mrb[0].mxu0 %v1062
    %v4342 = vpop.f32.mrb[0].mxu0
    %v4343 = vadd.f32 %v4246, %v4342
    %v4344 = vpop.f32.mrb[0].mxu0
    %v4345 = vpop.f32.mrb[0].mxu0
    %v4346 = vadd.f32 %v4249, %v4345
    %v4347 = vpop.f32.mrb[0].mxu0
    %4348 = vmatprep.mubr.bf16.mxu0 %v1077
    %4349 = vmatmul.mubr.bf16.gmra.mrb[0].mxu0 %v1076
    %v4350 = vpop.f32.mrb[0].mxu0
    %v4351 = vadd.f32 %v4254, %v4350
    %v4352 = vpop.f32.mrb[0].mxu0
    %v4353 = vpop.f32.mrb[0].mxu0
    %v4354 = vadd.f32 %v4257, %v4353
    %v4355 = vpop.f32.mrb[0].mxu0
    %4356 = vdwg.mxu0
    %4357 = vmatprep.subr.bf16.mxu0 0
    %4358 = vmatpush1.bf16.msra.mxu0 %v2602
    %4359 = vmatprep.subr.bf16.mxu0 0
    %4360 = vmatpush1.bf16.msra.mxu0 %v2605
    %4361 = vmatprep.subr.bf16.mxu0 0
    %4362 = vmatpush1.bf16.msra.mxu0 %v2608
    %4363 = vmatprep.subr.bf16.mxu0 0
    %4364 = vmatpush1.bf16.msra.mxu0 %v2611
    %4365 = vmatprep.subr.bf16.mxu0 0
    %4366 = vmatpush1.bf16.msra.mxu0 %v2614
    %4367 = vmatprep.subr.bf16.mxu0 0
    %4368 = vmatpush1.bf16.msra.mxu0 %v2617
    %4369 = vmatprep.subr.bf16.mxu0 0
    %4370 = vmatpush1.bf16.msra.mxu0 %v2620
    %4371 = vmatprep.subr.bf16.mxu0 0
    %4372 = vmatpush1.bf16.msra.mxu0 %v2623
    %4373 = vmatprep.subr.bf16.mxu0 0
    %4374 = vmatpush1.bf16.msra.mxu0 %v2626
    %4375 = vmatprep.subr.bf16.mxu0 0
    %4376 = vmatpush1.bf16.msra.mxu0 %v2629
    %4377 = vmatprep.subr.bf16.mxu0 0
    %4378 = vmatpush1.bf16.msra.mxu0 %v2632
    %4379 = vmatprep.subr.bf16.mxu0 0
    %4380 = vmatpush1.bf16.msra.mxu0 %v2635
    %4381 = vmatprep.subr.bf16.mxu0 0
    %4382 = vmatpush1.bf16.msra.mxu0 %v2638
    %4383 = vmatprep.subr.bf16.mxu0 0
    %4384 = vmatpush1.bf16.msra.mxu0 %v2641
    %4385 = vmatprep.subr.bf16.mxu0 0
    %4386 = vmatpush1.bf16.msra.mxu0 %v2644
    %4387 = vmatprep.subr.bf16.mxu0 0
    %4388 = vmatpush1.bf16.msra.mxu0 %v2647
    %4389 = vmatprep.mubr.bf16.mxu0 %v981
    %4390 = vmatmul.mubr.bf16.gmra.mrb[0].mxu0 %v980
    %v4391 = vpop.f32.mrb[0].mxu0
    %v4392 = vadd.f32 %v4295, %v4391
    %v4393 = vpop.f32.mrb[0].mxu0
    %v4394 = vpop.f32.mrb[0].mxu0
    %v4395 = vadd.f32 %v4298, %v4394
    %v4396 = vpop.f32.mrb[0].mxu0
    %4397 = vmatprep.mubr.bf16.mxu0 %v995
    %4398 = vmatmul.mubr.bf16.gmra.mrb[0].mxu0 %v994
    %v4399 = vpop.f32.mrb[0].mxu0
    %v4400 = vadd.f32 %v4303, %v4399
    %v4401 = vpop.f32.mrb[0].mxu0
    %v4402 = vpop.f32.mrb[0].mxu0
    %v4403 = vadd.f32 %v4306, %v4402
    %v4404 = vpop.f32.mrb[0].mxu0
    %4405 = vmatprep.mubr.bf16.mxu0 %v1009
    %4406 = vmatmul.mubr.bf16.gmra.mrb[0].mxu0 %v1008
    %v4407 = vpop.f32.mrb[0].mxu0
    %v4408 = vadd.f32 %v4311, %v4407
    %v4409 = vpop.f32.mrb[0].mxu0
    %v4410 = vpop.f32.mrb[0].mxu0
    %v4411 = vadd.f32 %v4314, %v4410
    %v4412 = vpop.f32.mrb[0].mxu0
    %4413 = vmatprep.mubr.bf16.mxu0 %v1023
    %4414 = vmatmul.mubr.bf16.gmra.mrb[0].mxu0 %v1022
    %v4415 = vpop.f32.mrb[0].mxu0
    %v4416 = vadd.f32 %v4319, %v4415
    %v4417 = vpop.f32.mrb[0].mxu0
    %v4418 = vpop.f32.mrb[0].mxu0
    %v4419 = vadd.f32 %v4322, %v4418
    %v4420 = vpop.f32.mrb[0].mxu0
    %4421 = vmatprep.mubr.bf16.mxu0 %v1037
    %4422 = vmatmul.mubr.bf16.gmra.mrb[0].mxu0 %v1036
    %v4423 = vpop.f32.mrb[0].mxu0
    %v4424 = vadd.f32 %v4327, %v4423
    %v4425 = vpop.f32.mrb[0].mxu0
    %v4426 = vpop.f32.mrb[0].mxu0
    %v4427 = vadd.f32 %v4330, %v4426
    %v4428 = vpop.f32.mrb[0].mxu0
    %4429 = vmatprep.mubr.bf16.mxu0 %v1051
    %4430 = vmatmul.mubr.bf16.gmra.mrb[0].mxu0 %v1050
    %v4431 = vpop.f32.mrb[0].mxu0
    %v4432 = vadd.f32 %v4335, %v4431
    %v4433 = vpop.f32.mrb[0].mxu0
    %v4434 = vpop.f32.mrb[0].mxu0
    %v4435 = vadd.f32 %v4338, %v4434
    %v4436 = vpop.f32.mrb[0].mxu0
    %4437 = vmatprep.mubr.bf16.mxu0 %v1065
    %4438 = vmatmul.mubr.bf16.gmra.mrb[0].mxu0 %v1064
    %v4439 = vpop.f32.mrb[0].mxu0
    %v4440 = vadd.f32 %v4343, %v4439
    %v4441 = vpop.f32.mrb[0].mxu0
    %v4442 = vpop.f32.mrb[0].mxu0
    %v4443 = vadd.f32 %v4346, %v4442
    %v4444 = vpop.f32.mrb[0].mxu0
    %4445 = vmatprep.mubr.bf16.mxu0 %v1079
    %4446 = vmatmul.mubr.bf16.gmra.mrb[0].mxu0 %v1078
    %v4447 = vpop.f32.mrb[0].mxu0
    %v4448 = vadd.f32 %v4351, %v4447
    %v4449 = vpop.f32.mrb[0].mxu0
    %v4450 = vpop.f32.mrb[0].mxu0
    %v4451 = vadd.f32 %v4354, %v4450
    %v4452 = vpop.f32.mrb[0].mxu0
    %4453 = vdwg.mxu0
    %v4454 = vmax.f32 %v3697, 0.0
    %v4455 = vmax.f32 %v3699, 0.0
    %v4456 = vmax.f32 %v4392, 0.0
    %v4457 = vmax.f32 %v3701, 0.0
    %v4458 = vmax.f32 %v3703, 0.0
    %v4459 = vmax.f32 %v4395, 0.0
    %v4460 = vmax.f32 %v3707, 0.0
    %v4461 = vmax.f32 %v3709, 0.0
    %v4462 = vmax.f32 %v4400, 0.0
    %v4463 = vmax.f32 %v3711, 0.0
    %v4464 = vmax.f32 %v3713, 0.0
    %v4465 = vmax.f32 %v4403, 0.0
    %v4466 = vmax.f32 %v3717, 0.0
    %v4467 = vmax.f32 %v3719, 0.0
    %v4468 = vmax.f32 %v4408, 0.0
    %v4469 = vmax.f32 %v3721, 0.0
    %v4470 = vmax.f32 %v3723, 0.0
    %v4471 = vmax.f32 %v4411, 0.0
    %v4472 = vmax.f32 %v3727, 0.0
    %v4473 = vmax.f32 %v3729, 0.0
    %v4474 = vmax.f32 %v4416, 0.0
    %v4475 = vmax.f32 %v3731, 0.0
    %v4476 = vmax.f32 %v3733, 0.0
    %v4477 = vmax.f32 %v4419, 0.0
    %v4478 = vmax.f32 %v3737, 0.0
    %v4479 = vmax.f32 %v3739, 0.0
    %v4480 = vmax.f32 %v4424, 0.0
    %v4481 = vmax.f32 %v3741, 0.0
    %v4482 = vmax.f32 %v3743, 0.0
    %v4483 = vmax.f32 %v4427, 0.0
    %v4484 = vmax.f32 %v3747, 0.0
    %v4485 = vmax.f32 %v3749, 0.0
    %v4486 = vmax.f32 %v4432, 0.0
    %v4487 = vmax.f32 %v3751, 0.0
    %v4488 = vmax.f32 %v3753, 0.0
    %v4489 = vmax.f32 %v4435, 0.0
    %v4490 = vmax.f32 %v3757, 0.0
    %v4491 = vmax.f32 %v3759, 0.0
    %v4492 = vmax.f32 %v4440, 0.0
    %v4493 = vmax.f32 %v3761, 0.0
    %v4494 = vmax.f32 %v3763, 0.0
    %v4495 = vmax.f32 %v4443, 0.0
    %v4496 = vmax.f32 %v3767, 0.0
    %v4497 = vmax.f32 %v3769, 0.0
    %v4498 = vmax.f32 %v4448, 0.0
    %v4499 = vmax.f32 %v3771, 0.0
    %v4500 = vmax.f32 %v3773, 0.0
    %v4501 = vmax.f32 %v4451, 0.0
    %v4502 = vpack.c.bf16 %v4457, %v4454
    %v4503 = vpack.c.bf16 %v4458, %v4455
    %v4504 = vpack.c.bf16 %v4459, %v4456
    %v4505 = vpack.c.bf16 %v4463, %v4460
    %v4506 = vpack.c.bf16 %v4464, %v4461
    %v4507 = vpack.c.bf16 %v4465, %v4462
    %v4508 = vpack.c.bf16 %v4469, %v4466
    %v4509 = vpack.c.bf16 %v4470, %v4467
    %v4510 = vpack.c.bf16 %v4471, %v4468
    %v4511 = vpack.c.bf16 %v4475, %v4472
    %v4512 = vpack.c.bf16 %v4476, %v4473
    %v4513 = vpack.c.bf16 %v4477, %v4474
    %v4514 = vpack.c.bf16 %v4481, %v4478
    %v4515 = vpack.c.bf16 %v4482, %v4479
    %v4516 = vpack.c.bf16 %v4483, %v4480
    %v4517 = vpack.c.bf16 %v4487, %v4484
    %v4518 = vpack.c.bf16 %v4488, %v4485
    %v4519 = vpack.c.bf16 %v4489, %v4486
    %v4520 = vpack.c.bf16 %v4493, %v4490
    %v4521 = vpack.c.bf16 %v4494, %v4491
    %v4522 = vpack.c.bf16 %v4495, %v4492
    %v4523 = vpack.c.bf16 %v4499, %v4496
    %v4524 = vpack.c.bf16 %v4500, %v4497
    %v4525 = vpack.c.bf16 %v4501, %v4498
    %v4550 = vunpack.c.l.b16 %v4502
    %v4551 = vunpack.c.l.b16 %v4503
    %v4552 = vunpack.c.l.b16 %v4504
    %v4553 = vunpack.c.h.b16 %v4502
    %v4554 = vunpack.c.h.b16 %v4503
    %v4555 = vunpack.c.h.b16 %v4504
    %v4556 = vunpack.c.l.b16 %v4505
    %v4557 = vunpack.c.l.b16 %v4506
    %v4558 = vunpack.c.l.b16 %v4507
    %v4559 = vunpack.c.h.b16 %v4505
    %v4560 = vunpack.c.h.b16 %v4506
    %v4561 = vunpack.c.h.b16 %v4507
    %v4562 = vunpack.c.l.b16 %v4508
    %v4563 = vunpack.c.l.b16 %v4509
    %v4564 = vunpack.c.l.b16 %v4510
    %v4565 = vunpack.c.h.b16 %v4508
    %v4566 = vunpack.c.h.b16 %v4509
    %v4567 = vunpack.c.h.b16 %v4510
    %v4568 = vunpack.c.l.b16 %v4511
    %v4569 = vunpack.c.l.b16 %v4512
    %v4570 = vunpack.c.l.b16 %v4513
    %v4571 = vunpack.c.h.b16 %v4511
    %v4572 = vunpack.c.h.b16 %v4512
    %v4573 = vunpack.c.h.b16 %v4513
    %v4574 = vunpack.c.l.b16 %v4514
    %v4575 = vunpack.c.l.b16 %v4515
    %v4576 = vunpack.c.l.b16 %v4516
    %v4577 = vunpack.c.h.b16 %v4514
    %v4578 = vunpack.c.h.b16 %v4515
    %v4579 = vunpack.c.h.b16 %v4516
    %v4580 = vunpack.c.l.b16 %v4517
    %v4581 = vunpack.c.l.b16 %v4518
    %v4582 = vunpack.c.l.b16 %v4519
    %v4583 = vunpack.c.h.b16 %v4517
    %v4584 = vunpack.c.h.b16 %v4518
    %v4585 = vunpack.c.h.b16 %v4519
    %v4586 = vunpack.c.l.b16 %v4520
    %v4587 = vunpack.c.l.b16 %v4521
    %v4588 = vunpack.c.l.b16 %v4522
    %v4589 = vunpack.c.h.b16 %v4520
    %v4590 = vunpack.c.h.b16 %v4521
    %v4591 = vunpack.c.h.b16 %v4522
    %v4592 = vunpack.c.l.b16 %v4523
    %v4593 = vunpack.c.l.b16 %v4524
    %v4594 = vunpack.c.l.b16 %v4525
    %v4595 = vunpack.c.h.b16 %v4523
    %v4596 = vunpack.c.h.b16 %v4524
    %v4597 = vunpack.c.h.b16 %v4525
    %v4598 = vpack.c.b16 %v4551, %v4550
    %v4599 = vpack.c.b16 %v4552, %v4552
    %v4600 = vpack.c.b16 %v4554, %v4553
    %v4601 = vpack.c.b16 %v4555, %v4555
    %v4602 = vpack.c.b16 %v4557, %v4556
    %v4603 = vpack.c.b16 %v4558, %v4558
    %v4604 = vpack.c.b16 %v4560, %v4559
    %v4605 = vpack.c.b16 %v4561, %v4561
    %v4606 = vpack.c.b16 %v4563, %v4562
    %v4607 = vpack.c.b16 %v4564, %v4564
    %v4608 = vpack.c.b16 %v4566, %v4565
    %v4609 = vpack.c.b16 %v4567, %v4567
    %v4610 = vpack.c.b16 %v4569, %v4568
    %v4611 = vpack.c.b16 %v4570, %v4570
    %v4612 = vpack.c.b16 %v4572, %v4571
    %v4613 = vpack.c.b16 %v4573, %v4573
    %v4614 = vpack.c.b16 %v4575, %v4574
    %v4615 = vpack.c.b16 %v4576, %v4576
    %v4616 = vpack.c.b16 %v4578, %v4577
    %v4617 = vpack.c.b16 %v4579, %v4579
    %v4618 = vpack.c.b16 %v4581, %v4580
    %v4619 = vpack.c.b16 %v4582, %v4582
    %v4620 = vpack.c.b16 %v4584, %v4583
    %v4621 = vpack.c.b16 %v4585, %v4585
    %v4622 = vpack.c.b16 %v4587, %v4586
    %v4623 = vpack.c.b16 %v4588, %v4588
    %v4624 = vpack.c.b16 %v4590, %v4589
    %v4625 = vpack.c.b16 %v4591, %v4591
    %v4626 = vpack.c.b16 %v4593, %v4592
    %v4627 = vpack.c.b16 %v4594, %v4594
    %v4628 = vpack.c.b16 %v4596, %v4595
    %v4629 = vpack.c.b16 %v4597, %v4597
    %4662 = vst [vmem:[#allocation8] sm:$0xff] %v4598
    %4663 = vst [vmem:[#allocation8 + $0x8] sm:$0xf] %v4599
    %4664 = vst [vmem:[#allocation8 + $0xc] sm:$0xff] %v4600
    %4665 = vst [vmem:[#allocation8 + $0x14] sm:$0xf] %v4601
    %4666 = vst [vmem:[#allocation8 + $0x18] sm:$0xff] %v4602
    %4667 = vst [vmem:[#allocation8 + $0x20] sm:$0xf] %v4603
    %4668 = vst [vmem:[#allocation8 + $0x24] sm:$0xff] %v4604
    %4669 = vst [vmem:[#allocation8 + $0x2c] sm:$0xf] %v4605
    %4670 = vst [vmem:[#allocation8 + $0x30] sm:$0xff] %v4606
    %4671 = vst [vmem:[#allocation8 + $0x38] sm:$0xf] %v4607
    %4672 = vst [vmem:[#allocation8 + $0x3c] sm:$0xff] %v4608
    %4673 = vst [vmem:[#allocation8 + $0x44] sm:$0xf] %v4609
    %4674 = vst [vmem:[#allocation8 + $0x48] sm:$0xff] %v4610
    %4675 = vst [vmem:[#allocation8 + $0x50] sm:$0xf] %v4611
    %4676 = vst [vmem:[#allocation8 + $0x54] sm:$0xff] %v4612
    %4677 = vst [vmem:[#allocation8 + $0x5c] sm:$0xf] %v4613
    %4678 = vst [vmem:[#allocation8 + $0x60] sm:$0xff] %v4614
    %4679 = vst [vmem:[#allocation8 + $0x68] sm:$0xf] %v4615
    %4680 = vst [vmem:[#allocation8 + $0x6c] sm:$0xff] %v4616
    %4681 = vst [vmem:[#allocation8 + $0x74] sm:$0xf] %v4617
    %4682 = vst [vmem:[#allocation8 + $0x78] sm:$0xff] %v4618
    %4683 = vst [vmem:[#allocation8 + $0x80] sm:$0xf] %v4619
    %4684 = vst [vmem:[#allocation8 + $0x84] sm:$0xff] %v4620
    %4685 = vst [vmem:[#allocation8 + $0x8c] sm:$0xf] %v4621
    %4686 = vst [vmem:[#allocation8 + $0x90] sm:$0xff] %v4622
    %4687 = vst [vmem:[#allocation8 + $0x98] sm:$0xf] %v4623
    %4688 = vst [vmem:[#allocation8 + $0x9c] sm:$0xff] %v4624
    %4689 = vst [vmem:[#allocation8 + $0xa4] sm:$0xf] %v4625
    %4690 = vst [vmem:[#allocation8 + $0xa8] sm:$0xff] %v4626
    %4691 = vst [vmem:[#allocation8 + $0xb0] sm:$0xf] %v4627
    %4692 = vst [vmem:[#allocation8 + $0xb4] sm:$0xff] %v4628
    %4693 = vst [vmem:[#allocation8 + $0xbc] sm:$0xf] %v4629
    // Predicated region
    $region26: #{tpu_custom_call.1} parent=1 // pred_check
      _
    $region27: #{tpu_custom_call.1} parent=1 // pred_check_branch
      %4695 = sbr.rel (0) target = $region29
    $region28: #{tpu_custom_call.1} parent=1 // pred_region
      %s4697 = ssub.s32 3072, 3072
      %4698 = vsyncadd [#allocation4], %s4697
      %s4699 = sshll.u32 [#allocation8], 4
      %s4700 = int_to_ptr.vmem [resolvable:$true] %s4699
      %4705 = dma.vmem_to_hbm [thread:$0]  %s4700, 3072, %s3, [#allocation4], 192, 192, 12
    $region29: #{tpu_custom_call.1} parent=1 // pred_fallthru
      _
    // Predicated region
    $region30: #{tpu_custom_call.1} parent=1 // pred_check
      _
    $region31: #{tpu_custom_call.1} parent=1 // pred_check_branch
      %4707 = sbr.rel (0) target = $region33
    $region32: #{tpu_custom_call.1} parent=1 // pred_region
      %4708 = dma.done [#allocation4], 3072
    $region33: #{tpu_custom_call.1} parent=1 // pred_fallthru
      _
    %4709 = vsyncpa [#allocation3], 1
    %4710 = vsyncpa [#allocation6], 1
    %4711 = vsyncpa [#allocation4], 1

</llo_original>
